<compile_context>
chip_gen: v7x
topology: tpu7x:2x2x1
jax: 0.10.0
libtpu: 0.0.40
codegen_flags: <defaults>
</compile_context>

<pallas_src>
import jax
import jax.numpy as jnp
from jax import lax
from jax.experimental import pallas as pl
from jax.experimental.pallas import tpu as pltpu


def _im2col_conv3x3(x, w_ref, H, W, C):
    """3x3 'same' conv as ONE im2col matmul.

    x:     (H, W, C) f32 activation (value, unpadded)
    w_ref: Ref of shape (9*C, C) bf16, rows ordered (ky, kx, ci)
    returns (H*W, C) f32
    """
    xb = x.astype(jnp.bfloat16)
    zrow = jnp.zeros((1, W, C), jnp.bfloat16)
    xp = jnp.concatenate([zrow, xb, zrow], axis=0)          # (H+2, W,   C)
    zcol = jnp.zeros((H + 2, 1, C), jnp.bfloat16)
    xp = jnp.concatenate([zcol, xp, zcol], axis=1)          # (H+2, W+2, C)

    patches = [
        xp[dy:dy + H, dx:dx + W, :].reshape(H * W, C)
        for dy in range(3) for dx in range(3)
    ]
    pm = jnp.concatenate(patches, axis=-1)                  # (H*W, 9*C) bf16
    return jnp.dot(pm, w_ref[...], preferred_element_type=jnp.float32)


def resblock_kernel(x_ref, w1_ref, b1_ref, w2_ref, b2_ref, o_ref):
    H, W, C = x_ref.shape
    x = x_ref[...]                                          # (H, W, C) f32
    b1 = b1_ref[...]                                        # (1, C) f32
    b2 = b2_ref[...]                                        # (1, C) f32

    # conv1 (+ folded BN1) -> ReLU, kept in registers (no VMEM scratch round-trip)
    h = jnp.maximum(_im2col_conv3x3(x, w1_ref, H, W, C) + b1, 0.0)

    # conv2 (+ folded BN2)
    y = _im2col_conv3x3(h.reshape(H, W, C), w2_ref, H, W, C) + b2

    # residual add + ReLU (f32 VPU epilogue)
    out = jnp.maximum(y + x.reshape(H * W, C), 0.0)
    o_ref[...] = out.reshape(H, W, C)


def resblock_forward(x_nchw, w1, b1, w2, b2):
    """x_nchw: (N, C, H, W) f32; w*: (3,3,C,C) HWIO (BN-folded); b*: (C,) (BN-folded)."""
    N, C, H, W = x_nchw.shape
    Cp = ((C + 127) // 128) * 128                           # lane-dense channel pad

    x = jnp.transpose(x_nchw, (0, 2, 3, 1))                 # NHWC
    x = jnp.pad(x, ((0, 0), (0, 0), (0, 0), (0, Cp - C)))

    def prep_w(w):
        wp = jnp.pad(w, ((0, 0), (0, 0), (0, Cp - C), (0, Cp - C)))
        # rows ordered (ky, kx, ci) to match the im2col patch concatenation order
        return wp.reshape(9 * Cp, Cp).astype(jnp.bfloat16)

    def prep_b(b):
        return jnp.pad(b, (0, Cp - C)).reshape(1, Cp).astype(jnp.float32)

    w1r, w2r = prep_w(w1), prep_w(w2)
    b1r, b2r = prep_b(b1), prep_b(b2)

    out_nhwc = pl.pallas_call(
        resblock_kernel,
        out_shape=jax.ShapeDtypeStruct((N, H, W, Cp), jnp.float32),
        grid_spec=pltpu.PrefetchScalarGridSpec(
            num_scalar_prefetch=0,
            grid=(N,),
            in_specs=[
                pl.BlockSpec((pl.Squeezed(), H, W, Cp), lambda n: (n, 0, 0, 0)),
                pl.BlockSpec((9 * Cp, Cp), lambda n: (0, 0)),
                pl.BlockSpec((1, Cp), lambda n: (0, 0)),
                pl.BlockSpec((9 * Cp, Cp), lambda n: (0, 0)),
                pl.BlockSpec((1, Cp), lambda n: (0, 0)),
            ],
            out_specs=pl.BlockSpec((pl.Squeezed(), H, W, Cp),
                                   lambda n: (n, 0, 0, 0)),
        ),
        compiler_params=pltpu.CompilerParams(
            dimension_semantics=("parallel",)),
    )(x, w1r, b1r, w2r, b2r)

    out_nhwc = out_nhwc[..., :C]                            # drop channel padding
    return jnp.transpose(out_nhwc, (0, 3, 1, 2))            # back to NCHW


def fold_bn(w, b, gamma, beta, mean, var, eps=1e-5):
    """Fold BatchNorm (inference) into conv weight/bias. w is HWIO."""
    s = gamma / jnp.sqrt(var + eps)                          # (O,)
    return w * s[None, None, None, :], (b - mean) * s + beta


def resblock_ref_f32(x_nchw, w1, b1, w2, b2):
    """Pure-JAX f32 reference (module semantics, full precision)."""
    x = jnp.transpose(x_nchw, (0, 2, 3, 1))

    def conv(inp, w, b):
        out = lax.conv_general_dilated(
            inp, w, window_strides=(1, 1), padding="SAME",
            dimension_numbers=("NHWC", "HWIO", "NHWC"))
        return out + b

    h = jax.nn.relu(conv(x, w1, b1))
    y = conv(h, w2, b2)
    return jnp.transpose(jax.nn.relu(y + x), (0, 3, 1, 2))


def resblock_ref_matched(x_nchw, w1, b1, w2, b2):
    """Pure-JAX reference with the same precision strategy as the kernel
    (bf16 matmul operands, f32 accumulation, f32 epilogue)."""
    x = jnp.transpose(x_nchw, (0, 2, 3, 1))

    def conv(inp, w, b):
        Nn, Hh, Ww, Cc = inp.shape
        xp = jnp.pad(inp, ((0, 0), (1, 1), (1, 1), (0, 0)))
        patches = jnp.concatenate(
            [xp[:, dy:dy + Hh, dx:dx + Ww, :] for dy in range(3) for dx in range(3)],
            axis=-1).astype(jnp.bfloat16)                    # (N,H,W,9C)
        wf = w.reshape(9 * Cc, Cc).astype(jnp.bfloat16)
        out = jnp.einsum("nhwk,kc->nhwc", patches, wf,
                         preferred_element_type=jnp.float32)
        return out + b

    h = jax.nn.relu(conv(x, w1, b1))
    y = conv(h, w2, b2)
    return jnp.transpose(jax.nn.relu(y + x), (0, 3, 1, 2))


if __name__ == "__main__":
    num_hidden = 32     # channels
    N, H, W = 2, 16, 16

    key = jax.random.PRNGKey(0)
    keys = jax.random.split(key, 13)

    x = jax.random.normal(keys[0], (N, num_hidden, H, W), jnp.float32)

    # Conv weights (HWIO) and biases, deterministic synthetic init.
    w1_raw = jax.random.normal(keys[1], (3, 3, num_hidden, num_hidden), jnp.float32) * 0.1
    b1_raw = jax.random.normal(keys[2], (num_hidden,), jnp.float32) * 0.1
    w2_raw = jax.random.normal(keys[3], (3, 3, num_hidden, num_hidden), jnp.float32) * 0.1
    b2_raw = jax.random.normal(keys[4], (num_hidden,), jnp.float32) * 0.1

    # BatchNorm params (inference-mode running stats), nontrivial & deterministic.
    g1 = 1.0 + 0.1 * jax.random.normal(keys[5], (num_hidden,), jnp.float32)
    be1 = 0.1 * jax.random.normal(keys[6], (num_hidden,), jnp.float32)
    m1 = 0.1 * jax.random.normal(keys[7], (num_hidden,), jnp.float32)
    v1 = jnp.abs(jax.random.normal(keys[8], (num_hidden,), jnp.float32)) + 0.5
    g2 = 1.0 + 0.1 * jax.random.normal(keys[9], (num_hidden,), jnp.float32)
    be2 = 0.1 * jax.random.normal(keys[10], (num_hidden,), jnp.float32)
    m2 = 0.1 * jax.random.normal(keys[11], (num_hidden,), jnp.float32)
    v2 = jnp.abs(jax.random.normal(keys[12], (num_hidden,), jnp.float32)) + 0.5

    w1, b1 = fold_bn(w1_raw, b1_raw, g1, be1, m1, v1)
    w2, b2 = fold_bn(w2_raw, b2_raw, g2, be2, m2, v2)

    out = jax.block_until_ready(resblock_forward(x, w1, b1, w2, b2))
    ref_m = jax.block_until_ready(resblock_ref_matched(x, w1, b1, w2, b2))
    ref_f = jax.block_until_ready(resblock_ref_f32(x, w1, b1, w2, b2))

    assert out.shape == (N, num_hidden, H, W)
    # Tight check vs. precision-matched (bf16-operand) reference.
    err_m = float(jnp.max(jnp.abs(out - ref_m)))
    assert jnp.allclose(out, ref_m, atol=2e-2, rtol=2e-2), err_m
    # Sanity check vs. full-f32 reference (loose: bounds bf16 operand rounding only).
    err_f = float(jnp.max(jnp.abs(out - ref_f)))
    assert jnp.allclose(out, ref_f, atol=1e-1, rtol=1e-1), err_f
    print("KERNEL_OK")
</pallas_src>

<mosaic_0001>
module attributes {stable_mosaic.version = 11 : i64} {
  func.func @resblock_kernel(%arg0: i32, %arg1: memref<1x16x16x128xf32, #tpu.memory_space<vmem>>, %arg2: memref<1152x128xbf16, #tpu.memory_space<vmem>>, %arg3: memref<1x128xf32, #tpu.memory_space<vmem>>, %arg4: memref<1152x128xbf16, #tpu.memory_space<vmem>>, %arg5: memref<1x128xf32, #tpu.memory_space<vmem>>, %arg6: memref<1x16x16x128xf32, #tpu.memory_space<vmem>>) attributes {dimension_semantics = [#tpu.dimension_semantics<parallel>], iteration_bounds = array<i64: 2>, scalar_prefetch = 0 : i64, scratch_operands = 0 : i64, tpu.core_type = #tpu.core_type<tc>, window_params = [{transform_indices = @transform_0, window_bounds = array<i64: 1, 16, 16, 128>}, {pipeline_mode = #tpu.pipeline_mode<synchronous>, transform_indices = @transform_1, window_bounds = array<i64: 1152, 128>}, {pipeline_mode = #tpu.pipeline_mode<synchronous>, transform_indices = @transform_2, window_bounds = array<i64: 1, 128>}, {pipeline_mode = #tpu.pipeline_mode<synchronous>, transform_indices = @transform_3, window_bounds = array<i64: 1152, 128>}, {pipeline_mode = #tpu.pipeline_mode<synchronous>, transform_indices = @transform_4, window_bounds = array<i64: 1, 128>}, {transform_indices = @transform_5, window_bounds = array<i64: 1, 16, 16, 128>}]} {
    %c0 = arith.constant 0 : index
    %c0_0 = arith.constant 0 : index
    %c0_1 = arith.constant 0 : index
    %c0_2 = arith.constant 0 : index
    %0 = vector.load %arg1[%c0, %c0_0, %c0_1, %c0_2] : memref<1x16x16x128xf32, #tpu.memory_space<vmem>>, vector<1x16x16x128xf32>
    %1 = vector.shape_cast %0 : vector<1x16x16x128xf32> to vector<16x16x128xf32>
    %c0_3 = arith.constant 0 : index
    %c0_4 = arith.constant 0 : index
    %2 = vector.load %arg3[%c0_3, %c0_4] : memref<1x128xf32, #tpu.memory_space<vmem>>, vector<1x128xf32>
    %c0_5 = arith.constant 0 : index
    %c0_6 = arith.constant 0 : index
    %3 = vector.load %arg5[%c0_5, %c0_6] : memref<1x128xf32, #tpu.memory_space<vmem>>, vector<1x128xf32>
    %4 = arith.truncf %1 : vector<16x16x128xf32> to vector<16x16x128xbf16>
    %cst = arith.constant 0.000000e+00 : bf16
    %5 = vector.broadcast %cst : bf16 to vector<1x16x128xbf16>
    %6 = tpu.concatenate %5, %4, %5 in 0 : vector<1x16x128xbf16>, vector<16x16x128xbf16>, vector<1x16x128xbf16> -> vector<18x16x128xbf16>
    %cst_7 = arith.constant 0.000000e+00 : bf16
    %7 = vector.broadcast %cst_7 : bf16 to vector<18x1x128xbf16>
    %8 = tpu.concatenate %7, %6, %7 in 1 : vector<18x1x128xbf16>, vector<18x16x128xbf16>, vector<18x1x128xbf16> -> vector<18x18x128xbf16>
    %9 = vector.extract_strided_slice %8 {offsets = [0, 0, 0], sizes = [16, 16, 128], strides = [1, 1, 1]} : vector<18x18x128xbf16> to vector<16x16x128xbf16>
    %10 = vector.shape_cast %9 : vector<16x16x128xbf16> to vector<256x128xbf16>
    %11 = vector.extract_strided_slice %8 {offsets = [0, 1, 0], sizes = [16, 16, 128], strides = [1, 1, 1]} : vector<18x18x128xbf16> to vector<16x16x128xbf16>
    %12 = vector.shape_cast %11 : vector<16x16x128xbf16> to vector<256x128xbf16>
    %13 = vector.extract_strided_slice %8 {offsets = [0, 2, 0], sizes = [16, 16, 128], strides = [1, 1, 1]} : vector<18x18x128xbf16> to vector<16x16x128xbf16>
    %14 = vector.shape_cast %13 : vector<16x16x128xbf16> to vector<256x128xbf16>
    %15 = vector.extract_strided_slice %8 {offsets = [1, 0, 0], sizes = [16, 16, 128], strides = [1, 1, 1]} : vector<18x18x128xbf16> to vector<16x16x128xbf16>
    %16 = vector.shape_cast %15 : vector<16x16x128xbf16> to vector<256x128xbf16>
    %17 = vector.extract_strided_slice %8 {offsets = [1, 1, 0], sizes = [16, 16, 128], strides = [1, 1, 1]} : vector<18x18x128xbf16> to vector<16x16x128xbf16>
    %18 = vector.shape_cast %17 : vector<16x16x128xbf16> to vector<256x128xbf16>
    %19 = vector.extract_strided_slice %8 {offsets = [1, 2, 0], sizes = [16, 16, 128], strides = [1, 1, 1]} : vector<18x18x128xbf16> to vector<16x16x128xbf16>
    %20 = vector.shape_cast %19 : vector<16x16x128xbf16> to vector<256x128xbf16>
    %21 = vector.extract_strided_slice %8 {offsets = [2, 0, 0], sizes = [16, 16, 128], strides = [1, 1, 1]} : vector<18x18x128xbf16> to vector<16x16x128xbf16>
    %22 = vector.shape_cast %21 : vector<16x16x128xbf16> to vector<256x128xbf16>
    %23 = vector.extract_strided_slice %8 {offsets = [2, 1, 0], sizes = [16, 16, 128], strides = [1, 1, 1]} : vector<18x18x128xbf16> to vector<16x16x128xbf16>
    %24 = vector.shape_cast %23 : vector<16x16x128xbf16> to vector<256x128xbf16>
    %25 = vector.extract_strided_slice %8 {offsets = [2, 2, 0], sizes = [16, 16, 128], strides = [1, 1, 1]} : vector<18x18x128xbf16> to vector<16x16x128xbf16>
    %26 = vector.shape_cast %25 : vector<16x16x128xbf16> to vector<256x128xbf16>
    %27 = tpu.concatenate %10, %12, %14, %16, %18, %20, %22, %24, %26 in 1 : vector<256x128xbf16>, vector<256x128xbf16>, vector<256x128xbf16>, vector<256x128xbf16>, vector<256x128xbf16>, vector<256x128xbf16>, vector<256x128xbf16>, vector<256x128xbf16>, vector<256x128xbf16> -> vector<256x1152xbf16>
    %c0_8 = arith.constant 0 : index
    %c0_9 = arith.constant 0 : index
    %28 = vector.load %arg2[%c0_8, %c0_9] : memref<1152x128xbf16, #tpu.memory_space<vmem>>, vector<1152x128xbf16>
    %cst_10 = arith.constant dense<0.000000e+00> : vector<256x128xf32>
    %29 = tpu.matmul %27, %28, %cst_10 {dimension_numbers = #tpu.dot_dimension_numbers<[1], [0], [0], [1], [0, 0, 1, 1], [], []>} : vector<256x1152xbf16>, vector<1152x128xbf16>, vector<256x128xf32> -> vector<256x128xf32>
    %30 = vector.broadcast %2 : vector<1x128xf32> to vector<256x128xf32>
    %31 = arith.addf %29, %30 : vector<256x128xf32>
    %cst_11 = arith.constant 0.000000e+00 : f32
    %32 = vector.broadcast %cst_11 : f32 to vector<256x128xf32>
    %33 = arith.maximumf %31, %32 : vector<256x128xf32>
    %34 = vector.shape_cast %33 : vector<256x128xf32> to vector<16x16x128xf32>
    %35 = arith.truncf %34 : vector<16x16x128xf32> to vector<16x16x128xbf16>
    %cst_12 = arith.constant 0.000000e+00 : bf16
    %36 = vector.broadcast %cst_12 : bf16 to vector<1x16x128xbf16>
    %37 = tpu.concatenate %36, %35, %36 in 0 : vector<1x16x128xbf16>, vector<16x16x128xbf16>, vector<1x16x128xbf16> -> vector<18x16x128xbf16>
    %cst_13 = arith.constant 0.000000e+00 : bf16
    %38 = vector.broadcast %cst_13 : bf16 to vector<18x1x128xbf16>
    %39 = tpu.concatenate %38, %37, %38 in 1 : vector<18x1x128xbf16>, vector<18x16x128xbf16>, vector<18x1x128xbf16> -> vector<18x18x128xbf16>
    %40 = vector.extract_strided_slice %39 {offsets = [0, 0, 0], sizes = [16, 16, 128], strides = [1, 1, 1]} : vector<18x18x128xbf16> to vector<16x16x128xbf16>
    %41 = vector.shape_cast %40 : vector<16x16x128xbf16> to vector<256x128xbf16>
    %42 = vector.extract_strided_slice %39 {offsets = [0, 1, 0], sizes = [16, 16, 128], strides = [1, 1, 1]} : vector<18x18x128xbf16> to vector<16x16x128xbf16>
    %43 = vector.shape_cast %42 : vector<16x16x128xbf16> to vector<256x128xbf16>
    %44 = vector.extract_strided_slice %39 {offsets = [0, 2, 0], sizes = [16, 16, 128], strides = [1, 1, 1]} : vector<18x18x128xbf16> to vector<16x16x128xbf16>
    %45 = vector.shape_cast %44 : vector<16x16x128xbf16> to vector<256x128xbf16>
    %46 = vector.extract_strided_slice %39 {offsets = [1, 0, 0], sizes = [16, 16, 128], strides = [1, 1, 1]} : vector<18x18x128xbf16> to vector<16x16x128xbf16>
    %47 = vector.shape_cast %46 : vector<16x16x128xbf16> to vector<256x128xbf16>
    %48 = vector.extract_strided_slice %39 {offsets = [1, 1, 0], sizes = [16, 16, 128], strides = [1, 1, 1]} : vector<18x18x128xbf16> to vector<16x16x128xbf16>
    %49 = vector.shape_cast %48 : vector<16x16x128xbf16> to vector<256x128xbf16>
    %50 = vector.extract_strided_slice %39 {offsets = [1, 2, 0], sizes = [16, 16, 128], strides = [1, 1, 1]} : vector<18x18x128xbf16> to vector<16x16x128xbf16>
    %51 = vector.shape_cast %50 : vector<16x16x128xbf16> to vector<256x128xbf16>
    %52 = vector.extract_strided_slice %39 {offsets = [2, 0, 0], sizes = [16, 16, 128], strides = [1, 1, 1]} : vector<18x18x128xbf16> to vector<16x16x128xbf16>
    %53 = vector.shape_cast %52 : vector<16x16x128xbf16> to vector<256x128xbf16>
    %54 = vector.extract_strided_slice %39 {offsets = [2, 1, 0], sizes = [16, 16, 128], strides = [1, 1, 1]} : vector<18x18x128xbf16> to vector<16x16x128xbf16>
    %55 = vector.shape_cast %54 : vector<16x16x128xbf16> to vector<256x128xbf16>
    %56 = vector.extract_strided_slice %39 {offsets = [2, 2, 0], sizes = [16, 16, 128], strides = [1, 1, 1]} : vector<18x18x128xbf16> to vector<16x16x128xbf16>
    %57 = vector.shape_cast %56 : vector<16x16x128xbf16> to vector<256x128xbf16>
    %58 = tpu.concatenate %41, %43, %45, %47, %49, %51, %53, %55, %57 in 1 : vector<256x128xbf16>, vector<256x128xbf16>, vector<256x128xbf16>, vector<256x128xbf16>, vector<256x128xbf16>, vector<256x128xbf16>, vector<256x128xbf16>, vector<256x128xbf16>, vector<256x128xbf16> -> vector<256x1152xbf16>
    %c0_14 = arith.constant 0 : index
    %c0_15 = arith.constant 0 : index
    %59 = vector.load %arg4[%c0_14, %c0_15] : memref<1152x128xbf16, #tpu.memory_space<vmem>>, vector<1152x128xbf16>
    %cst_16 = arith.constant dense<0.000000e+00> : vector<256x128xf32>
    %60 = tpu.matmul %58, %59, %cst_16 {dimension_numbers = #tpu.dot_dimension_numbers<[1], [0], [0], [1], [0, 0, 1, 1], [], []>} : vector<256x1152xbf16>, vector<1152x128xbf16>, vector<256x128xf32> -> vector<256x128xf32>
    %61 = vector.broadcast %3 : vector<1x128xf32> to vector<256x128xf32>
    %62 = arith.addf %60, %61 : vector<256x128xf32>
    %63 = vector.shape_cast %1 : vector<16x16x128xf32> to vector<256x128xf32>
    %64 = arith.addf %62, %63 : vector<256x128xf32>
    %cst_17 = arith.constant 0.000000e+00 : f32
    %65 = vector.broadcast %cst_17 : f32 to vector<256x128xf32>
    %66 = arith.maximumf %64, %65 : vector<256x128xf32>
    %67 = vector.shape_cast %66 : vector<256x128xf32> to vector<16x16x128xf32>
    %c0_18 = arith.constant 0 : index
    %c0_19 = arith.constant 0 : index
    %c0_20 = arith.constant 0 : index
    %c0_21 = arith.constant 0 : index
    %68 = vector.load %arg6[%c0_18, %c0_19, %c0_20, %c0_21] : memref<1x16x16x128xf32, #tpu.memory_space<vmem>>, vector<1x16x16x128xf32>
    %69 = vector.shape_cast %68 : vector<1x16x16x128xf32> to vector<16x16x128xf32>
    %70 = vector.shape_cast %67 : vector<16x16x128xf32> to vector<1x16x16x128xf32>
    tpu.vector_store %arg6[%c0_18, %c0_19, %c0_20, %c0_21], %70 {strides = array<i32>} : memref<1x16x16x128xf32, #tpu.memory_space<vmem>>, vector<1x16x16x128xf32>,
    return
  }
  func.func @transform_0(%arg0: i32) -> (i32, i32, i32, i32) {
    %c0_i32 = arith.constant 0 : i32
    %c0_i32_0 = arith.constant 0 : i32
    %c0_i32_1 = arith.constant 0 : i32
    %c0_i32_2 = arith.constant 0 : i32
    return %arg0, %c0_i32, %c0_i32_0, %c0_i32_1 : i32, i32, i32, i32
  }
  func.func @transform_1(%arg0: i32) -> (i32, i32) {
    %c0_i32 = arith.constant 0 : i32
    %c0_i32_0 = arith.constant 0 : i32
    %c0_i32_1 = arith.constant 0 : i32
    return %c0_i32, %c0_i32_0 : i32, i32
  }
  func.func @transform_2(%arg0: i32) -> (i32, i32) {
    %c0_i32 = arith.constant 0 : i32
    %c0_i32_0 = arith.constant 0 : i32
    %c0_i32_1 = arith.constant 0 : i32
    return %c0_i32, %c0_i32_0 : i32, i32
  }
  func.func @transform_3(%arg0: i32) -> (i32, i32) {
    %c0_i32 = arith.constant 0 : i32
    %c0_i32_0 = arith.constant 0 : i32
    %c0_i32_1 = arith.constant 0 : i32
    return %c0_i32, %c0_i32_0 : i32, i32
  }
  func.func @transform_4(%arg0: i32) -> (i32, i32) {
    %c0_i32 = arith.constant 0 : i32
    %c0_i32_0 = arith.constant 0 : i32
    %c0_i32_1 = arith.constant 0 : i32
    return %c0_i32, %c0_i32_0 : i32, i32
  }
  func.func @transform_5(%arg0: i32) -> (i32, i32, i32, i32) {
    %c0_i32 = arith.constant 0 : i32
    %c0_i32_0 = arith.constant 0 : i32
    %c0_i32_1 = arith.constant 0 : i32
    %c0_i32_2 = arith.constant 0 : i32
    return %arg0, %c0_i32, %c0_i32_0, %c0_i32_1 : i32, i32, i32, i32
  }
}

</mosaic_0001>

<llo_original>
// kernel: tpu_custom_call.1
$region0: #{tpu_custom_call.1}
  #allocation0 [shape = 'u32[]', space=smem, size = 0x4, offset = 0x4, fixed_abs, tag = 'smem constant byte address 0x4 - core index']
  #allocation1 [shape = 'u32[144,128]{1,0:T(1,128)}', space=vmem, size = 0x12000, scoped, tag = 'internal scratch']
  %s0 = inlined_call_operand.hbm [shape: f32[2,16,16,128], index: 0, kind: input, shape index: {}]
  %s1 = inlined_call_operand.hbm [shape: bf16[1152,128], index: 1, kind: input, shape index: {}]
  %s2 = inlined_call_operand.vmem [shape: f32[1,128], index: 2, kind: input, shape index: {}]
  %s3 = inlined_call_operand.hbm [shape: bf16[1152,128], index: 3, kind: input, shape index: {}]
  %s4 = inlined_call_operand.vmem [shape: f32[1,128], index: 4, kind: input, shape index: {}]
  %s5 = inlined_call_operand.hbm [shape: f32[2,16,16,128], index: 5, kind: output, shape index: {}]
  %s6 = sld [smem:[#allocation0]]
  $region65: #{tpu_custom_call.1} parent=0
    _
  %s8 = ssub.s32 1, %s6
  %s9 = scalar_select 0, %s8, %s6
  $region1: #{tpu_custom_call.1} parent=0
    #allocation2 [shape = 'u8[262144]{0}', space=vmem, size = 0x40000, scoped, tag = 'input window, operand 0']
    #allocation3 [shape = 's32[2]{0}', space=sflag, size = 0x8, scoped, tag = 'scoped memory for tpu_custom_call.1']
    #allocation4 [shape = 's32[2]{0}', space=sflag, size = 0x8, scoped, tag = 'scoped memory for tpu_custom_call.1']
    #allocation5 [shape = 'u8[294912]{0}', space=vmem, size = 0x48000, scoped, tag = 'input window, operand 1, single buffered']
    #allocation6 [shape = 's32[1]{0}', space=sflag, size = 0x4, scoped, tag = 'scoped memory for tpu_custom_call.1']
    #allocation7 [shape = 'u8[294912]{0}', space=vmem, size = 0x48000, scoped, tag = 'input window, operand 3, single buffered']
    #allocation8 [shape = 'u8[262144]{0}', space=vmem, size = 0x40000, scoped, tag = 'output window, operand 0']
    %10 = vsyncpa [#allocation3], 0
    %s11 = scalar_lea.sflag [#allocation3], 1
    %12 = vsyncpa %s11, 0
    %13 = vsyncpa [#allocation6], 0
    %14 = vsyncpa [#allocation4], 0
    %s15 = scalar_lea.sflag [#allocation4], 1
    %16 = vsyncpa %s15, 0
    loop: start=0, step=1, limit=4
    $region2: #{tpu_custom_call.1} parent=1 // loop_pre_header
      _
    $region3: #{tpu_custom_call.1} parent=1 // loop_header
      %s18 = sphi 0, %s22
      %p19 = scmp.ge.s32.totalorder %s18, 4
      %s28 = sphi 0, %s30
      %s31 = sphi 0, %s28
      %s32 = sphi 0, %s31
      %s48 = sphi 0, %s32
      %s52 = sphi 0, %s52
      %s54 = sphi 0, %s52
      %s55 = sphi 0, %s54
      %s69 = sphi 0, %s55
      %s73 = sphi 0, %s73
      %s75 = sphi 0, %s73
      %s76 = sphi 0, %s75
      %s90 = sphi 0, %s76
      %s94 = sphi 0, %s94
      %s96 = sphi 0, %s94
      %s97 = sphi 0, %s96
      %s111 = sphi 0, %s97
      %s115 = sphi 0, %s115
      %s117 = sphi 0, %s115
      %s118 = sphi 0, %s117
      %s132 = sphi 0, %s118
      %s138 = sphi 0, %s140
      %s141 = sphi 0, %s138
      %s142 = sphi 0, %s141
      %s158 = sphi 0, %s142
    $region4: #{tpu_custom_call.1} parent=1 // loop_header_branch
      %21 = sbr.rel (%p19) target = $region8
    $region5: #{tpu_custom_call.1} parent=1 // loop_body
      %s23 = ssub.s32 %s18, 1
      %s24 = ssub.s32 %s18, 2
      %s25 = sadd.s32 %s18, 1
      %s26 = ssub.s32 %s18, %s25
      %p27 = scmp.eq.s32.totalorder %s26, 0
      %s29 = sadd.s32 %s28, 1
      %s30 = scalar_select %p27, %s28, %s29
      %p33 = pneg %p27
      %p34 = scmp.eq.s32.totalorder %s18, 1
      %p35 = por %p33, %p34
      %p36 = scmp.ne.s32.totalorder %s28, %s31
      %p37 = scmp.eq.s32.totalorder %s18, 0
      %p38 = por %p36, %p37
      %p39 = scmp.ne.s32.totalorder %s28, %s31
      %p40 = scmp.eq.s32.totalorder %s23, 1
      %p41 = por %p39, %p40
      %p42 = scmp.ne.s32.totalorder %s31, %s32
      %p43 = scmp.eq.s32.totalorder %s23, 0
      %p44 = por %p42, %p43
      %p45 = scmp.ne.s32.totalorder %s31, %s32
      %p46 = scmp.eq.s32.totalorder %s24, 1
      %p47 = por %p45, %p46
      %p49 = scmp.ne.s32.totalorder %s32, %s48
      %p50 = scmp.eq.s32.totalorder %s24, 0
      %p51 = por %p49, %p50
      %s53 = sadd.s32 %s52, 1
      %p56 = scmp.eq.s32.totalorder %s18, 1
      %p57 = scmp.ne.s32.totalorder %s52, %s54
      %p58 = scmp.eq.s32.totalorder %s18, 0
      %p59 = por %p57, %p58
      %p60 = scmp.ne.s32.totalorder %s52, %s54
      %p61 = scmp.eq.s32.totalorder %s23, 1
      %p62 = por %p60, %p61
      %p63 = scmp.ne.s32.totalorder %s54, %s55
      %p64 = scmp.eq.s32.totalorder %s23, 0
      %p65 = por %p63, %p64
      %p66 = scmp.ne.s32.totalorder %s54, %s55
      %p67 = scmp.eq.s32.totalorder %s24, 1
      %p68 = por %p66, %p67
      %p70 = scmp.ne.s32.totalorder %s55, %s69
      %p71 = scmp.eq.s32.totalorder %s24, 0
      %p72 = por %p70, %p71
      %s74 = sadd.s32 %s73, 1
      %p77 = scmp.eq.s32.totalorder %s18, 1
      %p78 = scmp.ne.s32.totalorder %s73, %s75
      %p79 = scmp.eq.s32.totalorder %s18, 0
      %p80 = por %p78, %p79
      %p81 = scmp.ne.s32.totalorder %s73, %s75
      %p82 = scmp.eq.s32.totalorder %s23, 1
      %p83 = por %p81, %p82
      %p84 = scmp.ne.s32.totalorder %s75, %s76
      %p85 = scmp.eq.s32.totalorder %s23, 0
      %p86 = por %p84, %p85
      %p87 = scmp.ne.s32.totalorder %s75, %s76
      %p88 = scmp.eq.s32.totalorder %s24, 1
      %p89 = por %p87, %p88
      %p91 = scmp.ne.s32.totalorder %s76, %s90
      %p92 = scmp.eq.s32.totalorder %s24, 0
      %p93 = por %p91, %p92
      %s95 = sadd.s32 %s94, 1
      %p98 = scmp.eq.s32.totalorder %s18, 1
      %p99 = scmp.ne.s32.totalorder %s94, %s96
      %p100 = scmp.eq.s32.totalorder %s18, 0
      %p101 = por %p99, %p100
      %p102 = scmp.ne.s32.totalorder %s94, %s96
      %p103 = scmp.eq.s32.totalorder %s23, 1
      %p104 = por %p102, %p103
      %p105 = scmp.ne.s32.totalorder %s96, %s97
      %p106 = scmp.eq.s32.totalorder %s23, 0
      %p107 = por %p105, %p106
      %p108 = scmp.ne.s32.totalorder %s96, %s97
      %p109 = scmp.eq.s32.totalorder %s24, 1
      %p110 = por %p108, %p109
      %p112 = scmp.ne.s32.totalorder %s97, %s111
      %p113 = scmp.eq.s32.totalorder %s24, 0
      %p114 = por %p112, %p113
      %s116 = sadd.s32 %s115, 1
      %p119 = scmp.eq.s32.totalorder %s18, 1
      %p120 = scmp.ne.s32.totalorder %s115, %s117
      %p121 = scmp.eq.s32.totalorder %s18, 0
      %p122 = por %p120, %p121
      %p123 = scmp.ne.s32.totalorder %s115, %s117
      %p124 = scmp.eq.s32.totalorder %s23, 1
      %p125 = por %p123, %p124
      %p126 = scmp.ne.s32.totalorder %s117, %s118
      %p127 = scmp.eq.s32.totalorder %s23, 0
      %p128 = por %p126, %p127
      %p129 = scmp.ne.s32.totalorder %s117, %s118
      %p130 = scmp.eq.s32.totalorder %s24, 1
      %p131 = por %p129, %p130
      %p133 = scmp.ne.s32.totalorder %s118, %s132
      %p134 = scmp.eq.s32.totalorder %s24, 0
      %p135 = por %p133, %p134
      %s136 = ssub.s32 %s18, %s25
      %p137 = scmp.eq.s32.totalorder %s136, 0
      %s139 = sadd.s32 %s138, 1
      %s140 = scalar_select %p137, %s138, %s139
      %p143 = pneg %p137
      %p144 = scmp.eq.s32.totalorder %s18, 1
      %p145 = por %p143, %p144
      %p146 = scmp.ne.s32.totalorder %s138, %s141
      %p147 = scmp.eq.s32.totalorder %s18, 0
      %p148 = por %p146, %p147
      %p149 = scmp.ne.s32.totalorder %s138, %s141
      %p150 = scmp.eq.s32.totalorder %s23, 1
      %p151 = por %p149, %p150
      %p152 = scmp.ne.s32.totalorder %s141, %s142
      %p153 = scmp.eq.s32.totalorder %s23, 0
      %p154 = por %p152, %p153
      %p155 = scmp.ne.s32.totalorder %s141, %s142
      %p156 = scmp.eq.s32.totalorder %s24, 1
      %p157 = por %p155, %p156
      %p159 = scmp.ne.s32.totalorder %s142, %s158
      %p160 = scmp.eq.s32.totalorder %s24, 0
      %p161 = por %p159, %p160
      %p162 = scmp.le.s32.totalorder 1, %s18
      %p163 = scmp.lt.s32.totalorder %s18, 3
      %p164 = pnand %p162, %p163
      %p165 = pneg %p164
      // Predicated region
      $region9: #{tpu_custom_call.1} parent=5 // pred_check
        _
      $region10: #{tpu_custom_call.1} parent=5 // pred_check_branch
        %167 = sbr.rel (%p164) target = $region12
      $region11: #{tpu_custom_call.1} parent=5 // pred_region
        %s168 = ssub.s32 %s18, 1
        // Predicated region
        $region13: #{tpu_custom_call.1} parent=11 // pred_check
          %p169 = pneg %p65
        $region14: #{tpu_custom_call.1} parent=11 // pred_check_branch
          %171 = sbr.rel (%p169) target = $region16
        $region15: #{tpu_custom_call.1} parent=11 // pred_region
          %s173 = ssub.s32 9216, 9216
          %174 = vsyncadd [#allocation6], %s173
          %s175 = sshll.u32 [#allocation5], 4
          %s176 = int_to_ptr.vmem [resolvable:$true] %s175
          %181 = dma.hbm_to_vmem [thread:$0]  %s1, 9216, %s176, [#allocation6], 64, 64, 4
        $region16: #{tpu_custom_call.1} parent=11 // pred_fallthru
          _
        // Predicated region
        $region17: #{tpu_custom_call.1} parent=11 // pred_check
          %p182 = pneg %p86
        $region18: #{tpu_custom_call.1} parent=11 // pred_check_branch
          %184 = sbr.rel (%p182) target = $region20
        $region19: #{tpu_custom_call.1} parent=11 // pred_region
          _
        $region20: #{tpu_custom_call.1} parent=11 // pred_fallthru
          _
        // Predicated region
        $region21: #{tpu_custom_call.1} parent=11 // pred_check
          %p185 = pneg %p107
        $region22: #{tpu_custom_call.1} parent=11 // pred_check_branch
          %187 = sbr.rel (%p185) target = $region24
        $region23: #{tpu_custom_call.1} parent=11 // pred_region
          %s189 = ssub.s32 9216, 9216
          %190 = vsyncadd [#allocation6], %s189
          %s191 = sshll.u32 [#allocation7], 4
          %s192 = int_to_ptr.vmem [resolvable:$true] %s191
          %197 = dma.hbm_to_vmem [thread:$0]  %s3, 9216, %s192, [#allocation6], 64, 64, 4
        $region24: #{tpu_custom_call.1} parent=11 // pred_fallthru
          _
        // Predicated region
        $region25: #{tpu_custom_call.1} parent=11 // pred_check
          %p198 = pneg %p128
        $region26: #{tpu_custom_call.1} parent=11 // pred_check_branch
          %200 = sbr.rel (%p198) target = $region28
        $region27: #{tpu_custom_call.1} parent=11 // pred_region
          _
        $region28: #{tpu_custom_call.1} parent=11 // pred_fallthru
          _
      $region12: #{tpu_custom_call.1} parent=5 // pred_fallthru
        _
      %p201 = scmp.lt.s32.totalorder %s18, 2
      // Predicated region
      $region29: #{tpu_custom_call.1} parent=5 // pred_check
        %p202 = pneg %p201
      $region30: #{tpu_custom_call.1} parent=5 // pred_check_branch
        %204 = sbr.rel (%p202) target = $region32
      $region31: #{tpu_custom_call.1} parent=5 // pred_region
        // Predicated region
        $region33: #{tpu_custom_call.1} parent=31 // pred_check
          %p205 = pneg %p38
        $region34: #{tpu_custom_call.1} parent=31 // pred_check_branch
          %207 = sbr.rel (%p205) target = $region36
        $region35: #{tpu_custom_call.1} parent=31 // pred_region
          %s208 = sand.u32 %s28, 1
          %s209 = scalar_lea.sflag [#allocation3], %s208
          %s210 = sand.u32 %s28, 1
          %s211 = smul.addr %s210, 256
          %s212 = scalar_lea.vmem [#allocation2], %s211
          %s214 = ssub.s32 4096, 4096
          %215 = vsyncadd %s209, %s214
          %s216 = smul.addr %s18, 32
          %s217 = smul.addr %s216, 128
          %s218 = scalar_lea.hbm %s0, %s217
          %s219 = sshll.u32 %s212, 4
          %s220 = int_to_ptr.vmem [resolvable:$true] %s219
          %225 = dma.hbm_to_vmem [thread:$0]  %s218, 4096, %s220, %s209, 128, 128, 8
        $region36: #{tpu_custom_call.1} parent=31 // pred_fallthru
          _
      $region32: #{tpu_custom_call.1} parent=5 // pred_fallthru
        _
      %p226 = scmp.le.s32.totalorder 1, %s18
      %p227 = scmp.lt.s32.totalorder %s18, 3
      %p228 = pnand %p226, %p227
      %p229 = pneg %p228
      // Predicated region
      $region37: #{tpu_custom_call.1} parent=5 // pred_check
        _
      $region38: #{tpu_custom_call.1} parent=5 // pred_check_branch
        %231 = sbr.rel (%p228) target = $region40
      $region39: #{tpu_custom_call.1} parent=5 // pred_region
        %s232 = ssub.s32 %s18, 1
        %s233 = sand.u32 %s31, 1
        %s234 = scalar_lea.sflag [#allocation3], %s233
        %s235 = sand.u32 %s31, 1
        %s236 = smul.addr %s235, 256
        %s237 = scalar_lea.vmem [#allocation2], %s236
        // Predicated region
        $region41: #{tpu_custom_call.1} parent=39 // pred_check
          %p238 = pneg %p44
        $region42: #{tpu_custom_call.1} parent=39 // pred_check_branch
          %240 = sbr.rel (%p238) target = $region44
        $region43: #{tpu_custom_call.1} parent=39 // pred_region
          %241 = dma.done %s234, 4096
        $region44: #{tpu_custom_call.1} parent=39 // pred_fallthru
          _
        // Predicated region
        $region45: #{tpu_custom_call.1} parent=39 // pred_check
          %p242 = pneg %p65
        $region46: #{tpu_custom_call.1} parent=39 // pred_check_branch
          %244 = sbr.rel (%p242) target = $region48
        $region47: #{tpu_custom_call.1} parent=39 // pred_region
          %245 = dma.done [#allocation6], 9216
        $region48: #{tpu_custom_call.1} parent=39 // pred_fallthru
          _
        // Predicated region
        $region49: #{tpu_custom_call.1} parent=39 // pred_check
          %p246 = pneg %p107
        $region50: #{tpu_custom_call.1} parent=39 // pred_check_branch
          %248 = sbr.rel (%p246) target = $region52
        $region51: #{tpu_custom_call.1} parent=39 // pred_region
          %249 = dma.done [#allocation6], 9216
        $region52: #{tpu_custom_call.1} parent=39 // pred_fallthru
          _
        %s250 = sand.u32 %s31, 1
        %s251 = scalar_lea.sflag [#allocation3], %s250
        %s252 = sand.u32 %s31, 1
        %s253 = smul.addr %s252, 256
        %s254 = scalar_lea.vmem [#allocation2], %s253
        %p255 = pneg %p44
        %p256 = pneg %p41
        %p257 = pneg %p65
        %p258 = pneg %p62
        %p259 = pneg %p86
        %p260 = pneg %p83
        %p261 = pneg %p107
        %p262 = pneg %p104
        %p263 = pneg %p128
        %p264 = pneg %p125
        %p265 = pneg %p154
        %p266 = pneg %p151
        %s267 = sand.u32 %s141, 1
        %s268 = scalar_lea.sflag [#allocation4], %s267
        %s269 = sand.u32 %s141, 1
        %s270 = smul.addr %s269, 256
        %s271 = scalar_lea.vmem [#allocation8], %s270
        %v273 = vld [vmem:[%s237] sm:$0xff]
        %v274 = vld [vmem:[%s237 + $0x8] sm:$0xff]
        %v275 = vld [vmem:[%s237 + $0x10] sm:$0xff]
        %v276 = vld [vmem:[%s237 + $0x18] sm:$0xff]
        %v277 = vld [vmem:[%s237 + $0x20] sm:$0xff]
        %v278 = vld [vmem:[%s237 + $0x28] sm:$0xff]
        %v279 = vld [vmem:[%s237 + $0x30] sm:$0xff]
        %v280 = vld [vmem:[%s237 + $0x38] sm:$0xff]
        %v281 = vld [vmem:[%s237 + $0x40] sm:$0xff]
        %v282 = vld [vmem:[%s237 + $0x48] sm:$0xff]
        %v283 = vld [vmem:[%s237 + $0x50] sm:$0xff]
        %v284 = vld [vmem:[%s237 + $0x58] sm:$0xff]
        %v285 = vld [vmem:[%s237 + $0x60] sm:$0xff]
        %v286 = vld [vmem:[%s237 + $0x68] sm:$0xff]
        %v287 = vld [vmem:[%s237 + $0x70] sm:$0xff]
        %v288 = vld [vmem:[%s237 + $0x78] sm:$0xff]
        %v289 = vld [vmem:[%s237 + $0x80] sm:$0xff]
        %v290 = vld [vmem:[%s237 + $0x88] sm:$0xff]
        %v291 = vld [vmem:[%s237 + $0x90] sm:$0xff]
        %v292 = vld [vmem:[%s237 + $0x98] sm:$0xff]
        %v293 = vld [vmem:[%s237 + $0xa0] sm:$0xff]
        %v294 = vld [vmem:[%s237 + $0xa8] sm:$0xff]
        %v295 = vld [vmem:[%s237 + $0xb0] sm:$0xff]
        %v296 = vld [vmem:[%s237 + $0xb8] sm:$0xff]
        %v297 = vld [vmem:[%s237 + $0xc0] sm:$0xff]
        %v298 = vld [vmem:[%s237 + $0xc8] sm:$0xff]
        %v299 = vld [vmem:[%s237 + $0xd0] sm:$0xff]
        %v300 = vld [vmem:[%s237 + $0xd8] sm:$0xff]
        %v301 = vld [vmem:[%s237 + $0xe0] sm:$0xff]
        %v302 = vld [vmem:[%s237 + $0xe8] sm:$0xff]
        %v303 = vld [vmem:[%s237 + $0xf0] sm:$0xff]
        %v304 = vld [vmem:[%s237 + $0xf8] sm:$0xff]
        %v305 = vld [vmem:[%s2] sm:$0x1]
        %v306 = vld [vmem:[%s4] sm:$0x1]
        %v307 = vpack.c.bf16 %v274, %v273
        %v308 = vpack.c.bf16 %v276, %v275
        %v309 = vpack.c.bf16 %v278, %v277
        %v310 = vpack.c.bf16 %v280, %v279
        %v311 = vpack.c.bf16 %v282, %v281
        %v312 = vpack.c.bf16 %v284, %v283
        %v313 = vpack.c.bf16 %v286, %v285
        %v314 = vpack.c.bf16 %v288, %v287
        %v315 = vpack.c.bf16 %v290, %v289
        %v316 = vpack.c.bf16 %v292, %v291
        %v317 = vpack.c.bf16 %v294, %v293
        %v318 = vpack.c.bf16 %v296, %v295
        %v319 = vpack.c.bf16 %v298, %v297
        %v320 = vpack.c.bf16 %v300, %v299
        %v321 = vpack.c.bf16 %v302, %v301
        %v322 = vpack.c.bf16 %v304, %v303
        %v324 = vshrl.u32 0, 16
        %v326 = vrot.slane %v324, 7
        %v327 = vshll.u32 0, 16
        %v329 = vor.u32 %v326, %v327
        %v331 = vshrl.u32 %v307, 16
        %v333 = vrot.slane %v331, 7
        %v334 = vshll.u32 %v307, 16
        %v336 = vor.u32 %v333, %v334
        %v338 = vshrl.u32 %v308, 16
        %v340 = vrot.slane %v338, 7
        %v341 = vshll.u32 %v308, 16
        %v343 = vor.u32 %v340, %v341
        %v345 = vshrl.u32 %v309, 16
        %v347 = vrot.slane %v345, 7
        %v348 = vshll.u32 %v309, 16
        %v350 = vor.u32 %v347, %v348
        %v352 = vshrl.u32 %v310, 16
        %v354 = vrot.slane %v352, 7
        %v355 = vshll.u32 %v310, 16
        %v357 = vor.u32 %v354, %v355
        %v359 = vshrl.u32 %v311, 16
        %v361 = vrot.slane %v359, 7
        %v362 = vshll.u32 %v311, 16
        %v364 = vor.u32 %v361, %v362
        %v366 = vshrl.u32 %v312, 16
        %v368 = vrot.slane %v366, 7
        %v369 = vshll.u32 %v312, 16
        %v371 = vor.u32 %v368, %v369
        %v373 = vshrl.u32 %v313, 16
        %v375 = vrot.slane %v373, 7
        %v376 = vshll.u32 %v313, 16
        %v378 = vor.u32 %v375, %v376
        %v380 = vshrl.u32 %v314, 16
        %v382 = vrot.slane %v380, 7
        %v383 = vshll.u32 %v314, 16
        %v385 = vor.u32 %v382, %v383
        %v387 = vshrl.u32 %v315, 16
        %v389 = vrot.slane %v387, 7
        %v390 = vshll.u32 %v315, 16
        %v392 = vor.u32 %v389, %v390
        %v394 = vshrl.u32 %v316, 16
        %v396 = vrot.slane %v394, 7
        %v397 = vshll.u32 %v316, 16
        %v399 = vor.u32 %v396, %v397
        %v401 = vshrl.u32 %v317, 16
        %v403 = vrot.slane %v401, 7
        %v404 = vshll.u32 %v317, 16
        %v406 = vor.u32 %v403, %v404
        %v408 = vshrl.u32 %v318, 16
        %v410 = vrot.slane %v408, 7
        %v411 = vshll.u32 %v318, 16
        %v413 = vor.u32 %v410, %v411
        %v415 = vshrl.u32 %v319, 16
        %v417 = vrot.slane %v415, 7
        %v418 = vshll.u32 %v319, 16
        %v420 = vor.u32 %v417, %v418
        %v422 = vshrl.u32 %v320, 16
        %v424 = vrot.slane %v422, 7
        %v425 = vshll.u32 %v320, 16
        %v427 = vor.u32 %v424, %v425
        %v429 = vshrl.u32 %v321, 16
        %v431 = vrot.slane %v429, 7
        %v432 = vshll.u32 %v321, 16
        %v434 = vor.u32 %v431, %v432
        %v436 = vshrl.u32 %v322, 16
        %v438 = vrot.slane %v436, 7
        %v439 = vshll.u32 %v322, 16
        %v441 = vor.u32 %v438, %v439
        %vm476 = vcmask 1040384
        %vm477 = vsmask.f32 256
        %vm478 = vmand %vm476, %vm477
        %v479 = vsel %vm478, 0, %v329
        %v480 = vsel %vm478, 0, %v336
        %v481 = vsel %vm478, 0, %v343
        %v482 = vsel %vm478, 0, %v350
        %v483 = vsel %vm478, 0, %v357
        %v484 = vsel %vm478, 0, %v364
        %v485 = vsel %vm478, 0, %v371
        %v486 = vsel %vm478, 0, %v378
        %v487 = vsel %vm478, 0, %v385
        %v488 = vsel %vm478, 0, %v392
        %v489 = vsel %vm478, 0, %v399
        %v490 = vsel %vm478, 0, %v406
        %v491 = vsel %vm478, 0, %v413
        %v492 = vsel %vm478, 0, %v420
        %v493 = vsel %vm478, 0, %v427
        %v494 = vsel %vm478, 0, %v434
        %v495 = vsel %vm478, 0, %v441
        %v496 = vsel %vm478, %v326, 0
        %v497 = vsel %vm478, %v333, 0
        %v498 = vsel %vm478, %v340, 0
        %v499 = vsel %vm478, %v347, 0
        %v500 = vsel %vm478, %v354, 0
        %v501 = vsel %vm478, %v361, 0
        %v502 = vsel %vm478, %v368, 0
        %v503 = vsel %vm478, %v375, 0
        %v504 = vsel %vm478, %v382, 0
        %v505 = vsel %vm478, %v389, 0
        %v506 = vsel %vm478, %v396, 0
        %v507 = vsel %vm478, %v403, 0
        %v508 = vsel %vm478, %v410, 0
        %v509 = vsel %vm478, %v417, 0
        %v510 = vsel %vm478, %v424, 0
        %v511 = vsel %vm478, %v431, 0
        %v512 = vsel %vm478, %v438, 0
        %vm513 = vsmask.f32 7424
        %v515 = vshrl.u32 %v479, 16
        %v517 = vshll.u32 %v479, 16
        %v519 = vrot.slane %v517, 1
        %v520 = vor.u32 %v515, %v519
        %v522 = vshll.u32 %v496, 16
        %v524 = vrot.slane %v522, 1
        %v525 = vsel %vm513, %v520, %v524
        %v527 = vshrl.u32 %v480, 16
        %v529 = vshll.u32 %v480, 16
        %v531 = vrot.slane %v529, 1
        %v532 = vor.u32 %v527, %v531
        %v534 = vshll.u32 %v497, 16
        %v536 = vrot.slane %v534, 1
        %v537 = vsel %vm513, %v532, %v536
        %v539 = vshrl.u32 %v481, 16
        %v541 = vshll.u32 %v481, 16
        %v543 = vrot.slane %v541, 1
        %v544 = vor.u32 %v539, %v543
        %v546 = vshll.u32 %v498, 16
        %v548 = vrot.slane %v546, 1
        %v549 = vsel %vm513, %v544, %v548
        %v551 = vshrl.u32 %v482, 16
        %v553 = vshll.u32 %v482, 16
        %v555 = vrot.slane %v553, 1
        %v556 = vor.u32 %v551, %v555
        %v558 = vshll.u32 %v499, 16
        %v560 = vrot.slane %v558, 1
        %v561 = vsel %vm513, %v556, %v560
        %v563 = vshrl.u32 %v483, 16
        %v565 = vshll.u32 %v483, 16
        %v567 = vrot.slane %v565, 1
        %v568 = vor.u32 %v563, %v567
        %v570 = vshll.u32 %v500, 16
        %v572 = vrot.slane %v570, 1
        %v573 = vsel %vm513, %v568, %v572
        %v575 = vshrl.u32 %v484, 16
        %v577 = vshll.u32 %v484, 16
        %v579 = vrot.slane %v577, 1
        %v580 = vor.u32 %v575, %v579
        %v582 = vshll.u32 %v501, 16
        %v584 = vrot.slane %v582, 1
        %v585 = vsel %vm513, %v580, %v584
        %v587 = vshrl.u32 %v485, 16
        %v589 = vshll.u32 %v485, 16
        %v591 = vrot.slane %v589, 1
        %v592 = vor.u32 %v587, %v591
        %v594 = vshll.u32 %v502, 16
        %v596 = vrot.slane %v594, 1
        %v597 = vsel %vm513, %v592, %v596
        %v599 = vshrl.u32 %v486, 16
        %v601 = vshll.u32 %v486, 16
        %v603 = vrot.slane %v601, 1
        %v604 = vor.u32 %v599, %v603
        %v606 = vshll.u32 %v503, 16
        %v608 = vrot.slane %v606, 1
        %v609 = vsel %vm513, %v604, %v608
        %v611 = vshrl.u32 %v487, 16
        %v613 = vshll.u32 %v487, 16
        %v615 = vrot.slane %v613, 1
        %v616 = vor.u32 %v611, %v615
        %v618 = vshll.u32 %v504, 16
        %v620 = vrot.slane %v618, 1
        %v621 = vsel %vm513, %v616, %v620
        %v623 = vshrl.u32 %v488, 16
        %v625 = vshll.u32 %v488, 16
        %v627 = vrot.slane %v625, 1
        %v628 = vor.u32 %v623, %v627
        %v630 = vshll.u32 %v505, 16
        %v632 = vrot.slane %v630, 1
        %v633 = vsel %vm513, %v628, %v632
        %v635 = vshrl.u32 %v489, 16
        %v637 = vshll.u32 %v489, 16
        %v639 = vrot.slane %v637, 1
        %v640 = vor.u32 %v635, %v639
        %v642 = vshll.u32 %v506, 16
        %v644 = vrot.slane %v642, 1
        %v645 = vsel %vm513, %v640, %v644
        %v647 = vshrl.u32 %v490, 16
        %v649 = vshll.u32 %v490, 16
        %v651 = vrot.slane %v649, 1
        %v652 = vor.u32 %v647, %v651
        %v654 = vshll.u32 %v507, 16
        %v656 = vrot.slane %v654, 1
        %v657 = vsel %vm513, %v652, %v656
        %v659 = vshrl.u32 %v491, 16
        %v661 = vshll.u32 %v491, 16
        %v663 = vrot.slane %v661, 1
        %v664 = vor.u32 %v659, %v663
        %v666 = vshll.u32 %v508, 16
        %v668 = vrot.slane %v666, 1
        %v669 = vsel %vm513, %v664, %v668
        %v671 = vshrl.u32 %v492, 16
        %v673 = vshll.u32 %v492, 16
        %v675 = vrot.slane %v673, 1
        %v676 = vor.u32 %v671, %v675
        %v678 = vshll.u32 %v509, 16
        %v680 = vrot.slane %v678, 1
        %v681 = vsel %vm513, %v676, %v680
        %v683 = vshrl.u32 %v493, 16
        %v685 = vshll.u32 %v493, 16
        %v687 = vrot.slane %v685, 1
        %v688 = vor.u32 %v683, %v687
        %v690 = vshll.u32 %v510, 16
        %v692 = vrot.slane %v690, 1
        %v693 = vsel %vm513, %v688, %v692
        %v695 = vshrl.u32 %v494, 16
        %v697 = vshll.u32 %v494, 16
        %v699 = vrot.slane %v697, 1
        %v700 = vor.u32 %v695, %v699
        %v702 = vshll.u32 %v511, 16
        %v704 = vrot.slane %v702, 1
        %v705 = vsel %vm513, %v700, %v704
        %vm754 = vcmask 1046528
        %v755 = vrot.slane %v479, 1
        %v756 = vrot.slane %v496, 1
        %v757 = vsel %vm754, %v755, %v756
        %v758 = vrot.slane %v480, 1
        %v759 = vrot.slane %v497, 1
        %v760 = vsel %vm754, %v758, %v759
        %v761 = vrot.slane %v481, 1
        %v762 = vrot.slane %v498, 1
        %v763 = vsel %vm754, %v761, %v762
        %v764 = vrot.slane %v482, 1
        %v765 = vrot.slane %v499, 1
        %v766 = vsel %vm754, %v764, %v765
        %v767 = vrot.slane %v483, 1
        %v768 = vrot.slane %v500, 1
        %v769 = vsel %vm754, %v767, %v768
        %v770 = vrot.slane %v484, 1
        %v771 = vrot.slane %v501, 1
        %v772 = vsel %vm754, %v770, %v771
        %v773 = vrot.slane %v485, 1
        %v774 = vrot.slane %v502, 1
        %v775 = vsel %vm754, %v773, %v774
        %v776 = vrot.slane %v486, 1
        %v777 = vrot.slane %v503, 1
        %v778 = vsel %vm754, %v776, %v777
        %v779 = vrot.slane %v487, 1
        %v780 = vrot.slane %v504, 1
        %v781 = vsel %vm754, %v779, %v780
        %v782 = vrot.slane %v488, 1
        %v783 = vrot.slane %v505, 1
        %v784 = vsel %vm754, %v782, %v783
        %v785 = vrot.slane %v489, 1
        %v786 = vrot.slane %v506, 1
        %v787 = vsel %vm754, %v785, %v786
        %v788 = vrot.slane %v490, 1
        %v789 = vrot.slane %v507, 1
        %v790 = vsel %vm754, %v788, %v789
        %v791 = vrot.slane %v491, 1
        %v792 = vrot.slane %v508, 1
        %v793 = vsel %vm754, %v791, %v792
        %v794 = vrot.slane %v492, 1
        %v795 = vrot.slane %v509, 1
        %v796 = vsel %vm754, %v794, %v795
        %v797 = vrot.slane %v493, 1
        %v798 = vrot.slane %v510, 1
        %v799 = vsel %vm754, %v797, %v798
        %v800 = vrot.slane %v494, 1
        %v801 = vrot.slane %v511, 1
        %v802 = vsel %vm754, %v800, %v801
        %v820 = vshrl.u32 %v495, 16
        %v822 = vshll.u32 %v495, 16
        %v824 = vrot.slane %v822, 1
        %v825 = vor.u32 %v820, %v824
        %v827 = vshll.u32 %v512, 16
        %v829 = vrot.slane %v827, 1
        %v830 = vsel %vm513, %v825, %v829
        %v834 = vrot.slane %v495, 1
        %v835 = vrot.slane %v512, 1
        %v836 = vsel %vm754, %v834, %v835
        %v838 = vld [vmem:[#allocation5] sm:$0xf]
        %v839 = vld [vmem:[#allocation5 + $0x4] sm:$0xf]
        %v840 = vld [vmem:[#allocation5 + $0x8] sm:$0xf]
        %v841 = vld [vmem:[#allocation5 + $0xc] sm:$0xf]
        %v842 = vld [vmem:[#allocation5 + $0x10] sm:$0xf]
        %v843 = vld [vmem:[#allocation5 + $0x14] sm:$0xf]
        %v844 = vld [vmem:[#allocation5 + $0x18] sm:$0xf]
        %v845 = vld [vmem:[#allocation5 + $0x1c] sm:$0xf]
        %v846 = vld [vmem:[#allocation5 + $0x20] sm:$0xf]
        %v847 = vld [vmem:[#allocation5 + $0x24] sm:$0xf]
        %v848 = vld [vmem:[#allocation5 + $0x28] sm:$0xf]
        %v849 = vld [vmem:[#allocation5 + $0x2c] sm:$0xf]
        %v850 = vld [vmem:[#allocation5 + $0x30] sm:$0xf]
        %v851 = vld [vmem:[#allocation5 + $0x34] sm:$0xf]
        %v852 = vld [vmem:[#allocation5 + $0x38] sm:$0xf]
        %v853 = vld [vmem:[#allocation5 + $0x3c] sm:$0xf]
        %v854 = vld [vmem:[#allocation5 + $0x40] sm:$0xf]
        %v855 = vld [vmem:[#allocation5 + $0x44] sm:$0xf]
        %v856 = vld [vmem:[#allocation5 + $0x48] sm:$0xf]
        %v857 = vld [vmem:[#allocation5 + $0x4c] sm:$0xf]
        %v858 = vld [vmem:[#allocation5 + $0x50] sm:$0xf]
        %v859 = vld [vmem:[#allocation5 + $0x54] sm:$0xf]
        %v860 = vld [vmem:[#allocation5 + $0x58] sm:$0xf]
        %v861 = vld [vmem:[#allocation5 + $0x5c] sm:$0xf]
        %v862 = vld [vmem:[#allocation5 + $0x60] sm:$0xf]
        %v863 = vld [vmem:[#allocation5 + $0x64] sm:$0xf]
        %v864 = vld [vmem:[#allocation5 + $0x68] sm:$0xf]
        %v865 = vld [vmem:[#allocation5 + $0x6c] sm:$0xf]
        %v866 = vld [vmem:[#allocation5 + $0x70] sm:$0xf]
        %v867 = vld [vmem:[#allocation5 + $0x74] sm:$0xf]
        %v868 = vld [vmem:[#allocation5 + $0x78] sm:$0xf]
        %v869 = vld [vmem:[#allocation5 + $0x7c] sm:$0xf]
        %v870 = vld [vmem:[#allocation5 + $0x80] sm:$0xf]
        %v871 = vld [vmem:[#allocation5 + $0x84] sm:$0xf]
        %v872 = vld [vmem:[#allocation5 + $0x88] sm:$0xf]
        %v873 = vld [vmem:[#allocation5 + $0x8c] sm:$0xf]
        %v874 = vld [vmem:[#allocation5 + $0x90] sm:$0xf]
        %v875 = vld [vmem:[#allocation5 + $0x94] sm:$0xf]
        %v876 = vld [vmem:[#allocation5 + $0x98] sm:$0xf]
        %v877 = vld [vmem:[#allocation5 + $0x9c] sm:$0xf]
        %v878 = vld [vmem:[#allocation5 + $0xa0] sm:$0xf]
        %v879 = vld [vmem:[#allocation5 + $0xa4] sm:$0xf]
        %v880 = vld [vmem:[#allocation5 + $0xa8] sm:$0xf]
        %v881 = vld [vmem:[#allocation5 + $0xac] sm:$0xf]
        %v882 = vld [vmem:[#allocation5 + $0xb0] sm:$0xf]
        %v883 = vld [vmem:[#allocation5 + $0xb4] sm:$0xf]
        %v884 = vld [vmem:[#allocation5 + $0xb8] sm:$0xf]
        %v885 = vld [vmem:[#allocation5 + $0xbc] sm:$0xf]
        %v886 = vld [vmem:[#allocation5 + $0xc0] sm:$0xf]
        %v887 = vld [vmem:[#allocation5 + $0xc4] sm:$0xf]
        %v888 = vld [vmem:[#allocation5 + $0xc8] sm:$0xf]
        %v889 = vld [vmem:[#allocation5 + $0xcc] sm:$0xf]
        %v890 = vld [vmem:[#allocation5 + $0xd0] sm:$0xf]
        %v891 = vld [vmem:[#allocation5 + $0xd4] sm:$0xf]
        %v892 = vld [vmem:[#allocation5 + $0xd8] sm:$0xf]
        %v893 = vld [vmem:[#allocation5 + $0xdc] sm:$0xf]
        %v894 = vld [vmem:[#allocation5 + $0xe0] sm:$0xf]
        %v895 = vld [vmem:[#allocation5 + $0xe4] sm:$0xf]
        %v896 = vld [vmem:[#allocation5 + $0xe8] sm:$0xf]
        %v897 = vld [vmem:[#allocation5 + $0xec] sm:$0xf]
        %v898 = vld [vmem:[#allocation5 + $0xf0] sm:$0xf]
        %v899 = vld [vmem:[#allocation5 + $0xf4] sm:$0xf]
        %v900 = vld [vmem:[#allocation5 + $0xf8] sm:$0xf]
        %v901 = vld [vmem:[#allocation5 + $0xfc] sm:$0xf]
        %v902 = vld [vmem:[#allocation5 + $0x100] sm:$0xf]
        %v903 = vld [vmem:[#allocation5 + $0x104] sm:$0xf]
        %v904 = vld [vmem:[#allocation5 + $0x108] sm:$0xf]
        %v905 = vld [vmem:[#allocation5 + $0x10c] sm:$0xf]
        %v906 = vld [vmem:[#allocation5 + $0x110] sm:$0xf]
        %v907 = vld [vmem:[#allocation5 + $0x114] sm:$0xf]
        %v908 = vld [vmem:[#allocation5 + $0x118] sm:$0xf]
        %v909 = vld [vmem:[#allocation5 + $0x11c] sm:$0xf]
        %v910 = vld [vmem:[#allocation5 + $0x120] sm:$0xf]
        %v911 = vld [vmem:[#allocation5 + $0x124] sm:$0xf]
        %v912 = vld [vmem:[#allocation5 + $0x128] sm:$0xf]
        %v913 = vld [vmem:[#allocation5 + $0x12c] sm:$0xf]
        %v914 = vld [vmem:[#allocation5 + $0x130] sm:$0xf]
        %v915 = vld [vmem:[#allocation5 + $0x134] sm:$0xf]
        %v916 = vld [vmem:[#allocation5 + $0x138] sm:$0xf]
        %v917 = vld [vmem:[#allocation5 + $0x13c] sm:$0xf]
        %v918 = vld [vmem:[#allocation5 + $0x140] sm:$0xf]
        %v919 = vld [vmem:[#allocation5 + $0x144] sm:$0xf]
        %v920 = vld [vmem:[#allocation5 + $0x148] sm:$0xf]
        %v921 = vld [vmem:[#allocation5 + $0x14c] sm:$0xf]
        %v922 = vld [vmem:[#allocation5 + $0x150] sm:$0xf]
        %v923 = vld [vmem:[#allocation5 + $0x154] sm:$0xf]
        %v924 = vld [vmem:[#allocation5 + $0x158] sm:$0xf]
        %v925 = vld [vmem:[#allocation5 + $0x15c] sm:$0xf]
        %v926 = vld [vmem:[#allocation5 + $0x160] sm:$0xf]
        %v927 = vld [vmem:[#allocation5 + $0x164] sm:$0xf]
        %v928 = vld [vmem:[#allocation5 + $0x168] sm:$0xf]
        %v929 = vld [vmem:[#allocation5 + $0x16c] sm:$0xf]
        %v930 = vld [vmem:[#allocation5 + $0x170] sm:$0xf]
        %v931 = vld [vmem:[#allocation5 + $0x174] sm:$0xf]
        %v932 = vld [vmem:[#allocation5 + $0x178] sm:$0xf]
        %v933 = vld [vmem:[#allocation5 + $0x17c] sm:$0xf]
        %v934 = vld [vmem:[#allocation5 + $0x180] sm:$0xf]
        %v935 = vld [vmem:[#allocation5 + $0x184] sm:$0xf]
        %v936 = vld [vmem:[#allocation5 + $0x188] sm:$0xf]
        %v937 = vld [vmem:[#allocation5 + $0x18c] sm:$0xf]
        %v938 = vld [vmem:[#allocation5 + $0x190] sm:$0xf]
        %v939 = vld [vmem:[#allocation5 + $0x194] sm:$0xf]
        %v940 = vld [vmem:[#allocation5 + $0x198] sm:$0xf]
        %v941 = vld [vmem:[#allocation5 + $0x19c] sm:$0xf]
        %v942 = vld [vmem:[#allocation5 + $0x1a0] sm:$0xf]
        %v943 = vld [vmem:[#allocation5 + $0x1a4] sm:$0xf]
        %v944 = vld [vmem:[#allocation5 + $0x1a8] sm:$0xf]
        %v945 = vld [vmem:[#allocation5 + $0x1ac] sm:$0xf]
        %v946 = vld [vmem:[#allocation5 + $0x1b0] sm:$0xf]
        %v947 = vld [vmem:[#allocation5 + $0x1b4] sm:$0xf]
        %v948 = vld [vmem:[#allocation5 + $0x1b8] sm:$0xf]
        %v949 = vld [vmem:[#allocation5 + $0x1bc] sm:$0xf]
        %v950 = vld [vmem:[#allocation5 + $0x1c0] sm:$0xf]
        %v951 = vld [vmem:[#allocation5 + $0x1c4] sm:$0xf]
        %v952 = vld [vmem:[#allocation5 + $0x1c8] sm:$0xf]
        %v953 = vld [vmem:[#allocation5 + $0x1cc] sm:$0xf]
        %v954 = vld [vmem:[#allocation5 + $0x1d0] sm:$0xf]
        %v955 = vld [vmem:[#allocation5 + $0x1d4] sm:$0xf]
        %v956 = vld [vmem:[#allocation5 + $0x1d8] sm:$0xf]
        %v957 = vld [vmem:[#allocation5 + $0x1dc] sm:$0xf]
        %v958 = vld [vmem:[#allocation5 + $0x1e0] sm:$0xf]
        %v959 = vld [vmem:[#allocation5 + $0x1e4] sm:$0xf]
        %v960 = vld [vmem:[#allocation5 + $0x1e8] sm:$0xf]
        %v961 = vld [vmem:[#allocation5 + $0x1ec] sm:$0xf]
        %v962 = vld [vmem:[#allocation5 + $0x1f0] sm:$0xf]
        %v963 = vld [vmem:[#allocation5 + $0x1f4] sm:$0xf]
        %v964 = vld [vmem:[#allocation5 + $0x1f8] sm:$0xf]
        %v965 = vld [vmem:[#allocation5 + $0x1fc] sm:$0xf]
        %v966 = vld [vmem:[#allocation5 + $0x200] sm:$0xf]
        %v967 = vld [vmem:[#allocation5 + $0x204] sm:$0xf]
        %v968 = vld [vmem:[#allocation5 + $0x208] sm:$0xf]
        %v969 = vld [vmem:[#allocation5 + $0x20c] sm:$0xf]
        %v970 = vld [vmem:[#allocation5 + $0x210] sm:$0xf]
        %v971 = vld [vmem:[#allocation5 + $0x214] sm:$0xf]
        %v972 = vld [vmem:[#allocation5 + $0x218] sm:$0xf]
        %v973 = vld [vmem:[#allocation5 + $0x21c] sm:$0xf]
        %v974 = vld [vmem:[#allocation5 + $0x220] sm:$0xf]
        %v975 = vld [vmem:[#allocation5 + $0x224] sm:$0xf]
        %v976 = vld [vmem:[#allocation5 + $0x228] sm:$0xf]
        %v977 = vld [vmem:[#allocation5 + $0x22c] sm:$0xf]
        %v978 = vld [vmem:[#allocation5 + $0x230] sm:$0xf]
        %v979 = vld [vmem:[#allocation5 + $0x234] sm:$0xf]
        %v980 = vld [vmem:[#allocation5 + $0x238] sm:$0xf]
        %v981 = vld [vmem:[#allocation5 + $0x23c] sm:$0xf]
        %v983 = vlaneseq
        %v984 = vshrl.u32 %v983, 7
        %v985 = vsub.s32 0, %v984
        %v986 = vrot.slane %v305, %v985
        %v1132 = vunpack.c.l.b16 %v838
        %v1133 = vunpack.c.l.b16 %v839
        %v1134 = vunpack.c.l.b16 %v840
        %v1135 = vunpack.c.l.b16 %v841
        %v1136 = vunpack.c.l.b16 %v842
        %v1137 = vunpack.c.l.b16 %v843
        %v1138 = vunpack.c.l.b16 %v844
        %v1139 = vunpack.c.l.b16 %v845
        %v1140 = vunpack.c.l.b16 %v846
        %v1141 = vunpack.c.l.b16 %v847
        %v1142 = vunpack.c.l.b16 %v848
        %v1143 = vunpack.c.l.b16 %v849
        %v1144 = vunpack.c.l.b16 %v850
        %v1145 = vunpack.c.l.b16 %v851
        %v1146 = vunpack.c.l.b16 %v852
        %v1147 = vunpack.c.l.b16 %v853
        %v1148 = vunpack.c.l.b16 %v854
        %v1149 = vunpack.c.l.b16 %v855
        %v1150 = vunpack.c.l.b16 %v856
        %v1151 = vunpack.c.l.b16 %v857
        %v1152 = vunpack.c.l.b16 %v858
        %v1153 = vunpack.c.l.b16 %v859
        %v1154 = vunpack.c.l.b16 %v860
        %v1155 = vunpack.c.l.b16 %v861
        %v1156 = vunpack.c.l.b16 %v862
        %v1157 = vunpack.c.l.b16 %v863
        %v1158 = vunpack.c.l.b16 %v864
        %v1159 = vunpack.c.l.b16 %v865
        %v1160 = vunpack.c.l.b16 %v866
        %v1161 = vunpack.c.l.b16 %v867
        %v1162 = vunpack.c.l.b16 %v868
        %v1163 = vunpack.c.l.b16 %v869
        %v1164 = vunpack.c.l.b16 %v870
        %v1165 = vunpack.c.l.b16 %v871
        %v1166 = vunpack.c.l.b16 %v872
        %v1167 = vunpack.c.l.b16 %v873
        %v1168 = vunpack.c.l.b16 %v874
        %v1169 = vunpack.c.l.b16 %v875
        %v1170 = vunpack.c.l.b16 %v876
        %v1171 = vunpack.c.l.b16 %v877
        %v1172 = vunpack.c.l.b16 %v878
        %v1173 = vunpack.c.l.b16 %v879
        %v1174 = vunpack.c.l.b16 %v880
        %v1175 = vunpack.c.l.b16 %v881
        %v1176 = vunpack.c.l.b16 %v882
        %v1177 = vunpack.c.l.b16 %v883
        %v1178 = vunpack.c.l.b16 %v884
        %v1179 = vunpack.c.l.b16 %v885
        %v1180 = vunpack.c.l.b16 %v886
        %v1181 = vunpack.c.l.b16 %v887
        %v1182 = vunpack.c.l.b16 %v888
        %v1183 = vunpack.c.l.b16 %v889
        %v1184 = vunpack.c.l.b16 %v890
        %v1185 = vunpack.c.l.b16 %v891
        %v1186 = vunpack.c.l.b16 %v892
        %v1187 = vunpack.c.l.b16 %v893
        %v1188 = vunpack.c.l.b16 %v894
        %v1189 = vunpack.c.l.b16 %v895
        %v1190 = vunpack.c.l.b16 %v896
        %v1191 = vunpack.c.l.b16 %v897
        %v1192 = vunpack.c.l.b16 %v898
        %v1193 = vunpack.c.l.b16 %v899
        %v1194 = vunpack.c.l.b16 %v900
        %v1195 = vunpack.c.l.b16 %v901
        %v1196 = vunpack.c.l.b16 %v902
        %v1197 = vunpack.c.l.b16 %v903
        %v1198 = vunpack.c.l.b16 %v904
        %v1199 = vunpack.c.l.b16 %v905
        %v1200 = vunpack.c.l.b16 %v906
        %v1201 = vunpack.c.l.b16 %v907
        %v1202 = vunpack.c.l.b16 %v908
        %v1203 = vunpack.c.l.b16 %v909
        %v1204 = vunpack.c.l.b16 %v910
        %v1205 = vunpack.c.l.b16 %v911
        %v1206 = vunpack.c.l.b16 %v912
        %v1207 = vunpack.c.l.b16 %v913
        %v1208 = vunpack.c.l.b16 %v914
        %v1209 = vunpack.c.l.b16 %v915
        %v1210 = vunpack.c.l.b16 %v916
        %v1211 = vunpack.c.l.b16 %v917
        %v1212 = vunpack.c.l.b16 %v918
        %v1213 = vunpack.c.l.b16 %v919
        %v1214 = vunpack.c.l.b16 %v920
        %v1215 = vunpack.c.l.b16 %v921
        %v1216 = vunpack.c.l.b16 %v922
        %v1217 = vunpack.c.l.b16 %v923
        %v1218 = vunpack.c.l.b16 %v924
        %v1219 = vunpack.c.l.b16 %v925
        %v1220 = vunpack.c.l.b16 %v926
        %v1221 = vunpack.c.l.b16 %v927
        %v1222 = vunpack.c.l.b16 %v928
        %v1223 = vunpack.c.l.b16 %v929
        %v1224 = vunpack.c.l.b16 %v930
        %v1225 = vunpack.c.l.b16 %v931
        %v1226 = vunpack.c.l.b16 %v932
        %v1227 = vunpack.c.l.b16 %v933
        %v1228 = vunpack.c.l.b16 %v934
        %v1229 = vunpack.c.l.b16 %v935
        %v1230 = vunpack.c.l.b16 %v936
        %v1231 = vunpack.c.l.b16 %v937
        %v1232 = vunpack.c.l.b16 %v938
        %v1233 = vunpack.c.l.b16 %v939
        %v1234 = vunpack.c.l.b16 %v940
        %v1235 = vunpack.c.l.b16 %v941
        %v1236 = vunpack.c.l.b16 %v942
        %v1237 = vunpack.c.l.b16 %v943
        %v1238 = vunpack.c.l.b16 %v944
        %v1239 = vunpack.c.l.b16 %v945
        %v1240 = vunpack.c.l.b16 %v946
        %v1241 = vunpack.c.l.b16 %v947
        %v1242 = vunpack.c.l.b16 %v948
        %v1243 = vunpack.c.l.b16 %v949
        %v1244 = vunpack.c.l.b16 %v950
        %v1245 = vunpack.c.l.b16 %v951
        %v1246 = vunpack.c.l.b16 %v952
        %v1247 = vunpack.c.l.b16 %v953
        %v1248 = vunpack.c.l.b16 %v954
        %v1249 = vunpack.c.l.b16 %v955
        %v1250 = vunpack.c.l.b16 %v956
        %v1251 = vunpack.c.l.b16 %v957
        %v1252 = vunpack.c.l.b16 %v958
        %v1253 = vunpack.c.l.b16 %v959
        %v1254 = vunpack.c.l.b16 %v960
        %v1255 = vunpack.c.l.b16 %v961
        %v1256 = vunpack.c.l.b16 %v962
        %v1257 = vunpack.c.l.b16 %v963
        %v1258 = vunpack.c.l.b16 %v964
        %v1259 = vunpack.c.l.b16 %v965
        %v1260 = vunpack.c.l.b16 %v966
        %v1261 = vunpack.c.l.b16 %v967
        %v1262 = vunpack.c.l.b16 %v968
        %v1263 = vunpack.c.l.b16 %v969
        %v1264 = vunpack.c.l.b16 %v970
        %v1265 = vunpack.c.l.b16 %v971
        %v1266 = vunpack.c.l.b16 %v972
        %v1267 = vunpack.c.l.b16 %v973
        %v1268 = vunpack.c.l.b16 %v974
        %v1269 = vunpack.c.l.b16 %v975
        %v1270 = vunpack.c.l.b16 %v976
        %v1271 = vunpack.c.l.b16 %v977
        %v1272 = vunpack.c.l.b16 %v978
        %v1273 = vunpack.c.l.b16 %v979
        %v1274 = vunpack.c.l.b16 %v980
        %v1275 = vunpack.c.l.b16 %v981
        %v1276 = vpack.c.b16 %v1133, %v1132
        %v1277 = vpack.c.b16 %v1135, %v1134
        %v1278 = vpack.c.b16 %v1137, %v1136
        %v1279 = vpack.c.b16 %v1139, %v1138
        %v1280 = vpack.c.b16 %v1141, %v1140
        %v1281 = vpack.c.b16 %v1143, %v1142
        %v1282 = vpack.c.b16 %v1145, %v1144
        %v1283 = vpack.c.b16 %v1147, %v1146
        %v1284 = vpack.c.b16 %v1149, %v1148
        %v1285 = vpack.c.b16 %v1151, %v1150
        %v1286 = vpack.c.b16 %v1153, %v1152
        %v1287 = vpack.c.b16 %v1155, %v1154
        %v1288 = vpack.c.b16 %v1157, %v1156
        %v1289 = vpack.c.b16 %v1159, %v1158
        %v1290 = vpack.c.b16 %v1161, %v1160
        %v1291 = vpack.c.b16 %v1163, %v1162
        %v1292 = vpack.c.b16 %v1165, %v1164
        %v1293 = vpack.c.b16 %v1167, %v1166
        %v1294 = vpack.c.b16 %v1169, %v1168
        %v1295 = vpack.c.b16 %v1171, %v1170
        %v1296 = vpack.c.b16 %v1173, %v1172
        %v1297 = vpack.c.b16 %v1175, %v1174
        %v1298 = vpack.c.b16 %v1177, %v1176
        %v1299 = vpack.c.b16 %v1179, %v1178
        %v1300 = vpack.c.b16 %v1181, %v1180
        %v1301 = vpack.c.b16 %v1183, %v1182
        %v1302 = vpack.c.b16 %v1185, %v1184
        %v1303 = vpack.c.b16 %v1187, %v1186
        %v1304 = vpack.c.b16 %v1189, %v1188
        %v1305 = vpack.c.b16 %v1191, %v1190
        %v1306 = vpack.c.b16 %v1193, %v1192
        %v1307 = vpack.c.b16 %v1195, %v1194
        %v1308 = vpack.c.b16 %v1197, %v1196
        %v1309 = vpack.c.b16 %v1199, %v1198
        %v1310 = vpack.c.b16 %v1201, %v1200
        %v1311 = vpack.c.b16 %v1203, %v1202
        %v1312 = vpack.c.b16 %v1205, %v1204
        %v1313 = vpack.c.b16 %v1207, %v1206
        %v1314 = vpack.c.b16 %v1209, %v1208
        %v1315 = vpack.c.b16 %v1211, %v1210
        %v1316 = vpack.c.b16 %v1213, %v1212
        %v1317 = vpack.c.b16 %v1215, %v1214
        %v1318 = vpack.c.b16 %v1217, %v1216
        %v1319 = vpack.c.b16 %v1219, %v1218
        %v1320 = vpack.c.b16 %v1221, %v1220
        %v1321 = vpack.c.b16 %v1223, %v1222
        %v1322 = vpack.c.b16 %v1225, %v1224
        %v1323 = vpack.c.b16 %v1227, %v1226
        %v1324 = vpack.c.b16 %v1229, %v1228
        %v1325 = vpack.c.b16 %v1231, %v1230
        %v1326 = vpack.c.b16 %v1233, %v1232
        %v1327 = vpack.c.b16 %v1235, %v1234
        %v1328 = vpack.c.b16 %v1237, %v1236
        %v1329 = vpack.c.b16 %v1239, %v1238
        %v1330 = vpack.c.b16 %v1241, %v1240
        %v1331 = vpack.c.b16 %v1243, %v1242
        %v1332 = vpack.c.b16 %v1245, %v1244
        %v1333 = vpack.c.b16 %v1247, %v1246
        %v1334 = vpack.c.b16 %v1249, %v1248
        %v1335 = vpack.c.b16 %v1251, %v1250
        %v1336 = vpack.c.b16 %v1253, %v1252
        %v1337 = vpack.c.b16 %v1255, %v1254
        %v1338 = vpack.c.b16 %v1257, %v1256
        %v1339 = vpack.c.b16 %v1259, %v1258
        %v1340 = vpack.c.b16 %v1261, %v1260
        %v1341 = vpack.c.b16 %v1263, %v1262
        %v1342 = vpack.c.b16 %v1265, %v1264
        %v1343 = vpack.c.b16 %v1267, %v1266
        %v1344 = vpack.c.b16 %v1269, %v1268
        %v1345 = vpack.c.b16 %v1271, %v1270
        %v1346 = vpack.c.b16 %v1273, %v1272
        %v1347 = vpack.c.b16 %v1275, %v1274
        %1420 = vmatprep.subr.bf16.mxu0 0
        %1421 = vmatpush1.bf16.msra.mxu0 %v1276
        %1422 = vmatprep.subr.bf16.mxu0 0
        %1423 = vmatpush1.bf16.msra.mxu0 %v1277
        %1424 = vmatprep.subr.bf16.mxu0 0
        %1425 = vmatpush1.bf16.msra.mxu0 %v1278
        %1426 = vmatprep.subr.bf16.mxu0 0
        %1427 = vmatpush1.bf16.msra.mxu0 %v1279
        %1428 = vmatprep.subr.bf16.mxu0 0
        %1429 = vmatpush1.bf16.msra.mxu0 %v1280
        %1430 = vmatprep.subr.bf16.mxu0 0
        %1431 = vmatpush1.bf16.msra.mxu0 %v1281
        %1432 = vmatprep.subr.bf16.mxu0 0
        %1433 = vmatpush1.bf16.msra.mxu0 %v1282
        %1434 = vmatprep.subr.bf16.mxu0 0
        %1435 = vmatpush1.bf16.msra.mxu0 %v1283
        %1436 = vmatprep.subr.bf16.mxu0 0
        %1437 = vmatpush1.bf16.msra.mxu0 %v1284
        %1438 = vmatprep.subr.bf16.mxu0 0
        %1439 = vmatpush1.bf16.msra.mxu0 %v1285
        %1440 = vmatprep.subr.bf16.mxu0 0
        %1441 = vmatpush1.bf16.msra.mxu0 %v1286
        %1442 = vmatprep.subr.bf16.mxu0 0
        %1443 = vmatpush1.bf16.msra.mxu0 %v1287
        %1444 = vmatprep.subr.bf16.mxu0 0
        %1445 = vmatpush1.bf16.msra.mxu0 %v1288
        %1446 = vmatprep.subr.bf16.mxu0 0
        %1447 = vmatpush1.bf16.msra.mxu0 %v1289
        %1448 = vmatprep.subr.bf16.mxu0 0
        %1449 = vmatpush1.bf16.msra.mxu0 %v1290
        %1450 = vmatprep.subr.bf16.mxu0 0
        %1451 = vmatpush1.bf16.msra.mxu0 %v1291
        %1452 = vmatprep.mubr.bf16.mxu0 %v525
        %1453 = vmatmul.mubr.bf16.gmra.mrb[0].mxu0 %v479
        %v1454 = vpop.f32.mrb[0].mxu0
        %v1455 = vadd.f32 %v986, %v1454
        %v1456 = vpop.f32.mrb[0].mxu0
        %v1457 = vpop.f32.mrb[0].mxu0
        %v1458 = vadd.f32 %v986, %v1457
        %v1459 = vpop.f32.mrb[0].mxu0
        %1460 = vmatprep.mubr.bf16.mxu0 %v537
        %1461 = vmatmul.mubr.bf16.gmra.mrb[0].mxu0 %v480
        %v1462 = vpop.f32.mrb[0].mxu0
        %v1463 = vadd.f32 %v986, %v1462
        %v1464 = vpop.f32.mrb[0].mxu0
        %v1465 = vpop.f32.mrb[0].mxu0
        %v1466 = vadd.f32 %v986, %v1465
        %v1467 = vpop.f32.mrb[0].mxu0
        %1468 = vmatprep.mubr.bf16.mxu0 %v549
        %1469 = vmatmul.mubr.bf16.gmra.mrb[0].mxu0 %v481
        %v1470 = vpop.f32.mrb[0].mxu0
        %v1471 = vadd.f32 %v986, %v1470
        %v1472 = vpop.f32.mrb[0].mxu0
        %v1473 = vpop.f32.mrb[0].mxu0
        %v1474 = vadd.f32 %v986, %v1473
        %v1475 = vpop.f32.mrb[0].mxu0
        %1476 = vmatprep.mubr.bf16.mxu0 %v561
        %1477 = vmatmul.mubr.bf16.gmra.mrb[0].mxu0 %v482
        %v1478 = vpop.f32.mrb[0].mxu0
        %v1479 = vadd.f32 %v986, %v1478
        %v1480 = vpop.f32.mrb[0].mxu0
        %v1481 = vpop.f32.mrb[0].mxu0
        %v1482 = vadd.f32 %v986, %v1481
        %v1483 = vpop.f32.mrb[0].mxu0
        %1484 = vmatprep.mubr.bf16.mxu0 %v573
        %1485 = vmatmul.mubr.bf16.gmra.mrb[0].mxu0 %v483
        %v1486 = vpop.f32.mrb[0].mxu0
        %v1487 = vadd.f32 %v986, %v1486
        %v1488 = vpop.f32.mrb[0].mxu0
        %v1489 = vpop.f32.mrb[0].mxu0
        %v1490 = vadd.f32 %v986, %v1489
        %v1491 = vpop.f32.mrb[0].mxu0
        %1492 = vmatprep.mubr.bf16.mxu0 %v585
        %1493 = vmatmul.mubr.bf16.gmra.mrb[0].mxu0 %v484
        %v1494 = vpop.f32.mrb[0].mxu0
        %v1495 = vadd.f32 %v986, %v1494
        %v1496 = vpop.f32.mrb[0].mxu0
        %v1497 = vpop.f32.mrb[0].mxu0
        %v1498 = vadd.f32 %v986, %v1497
        %v1499 = vpop.f32.mrb[0].mxu0
        %1500 = vmatprep.mubr.bf16.mxu0 %v597
        %1501 = vmatmul.mubr.bf16.gmra.mrb[0].mxu0 %v485
        %v1502 = vpop.f32.mrb[0].mxu0
        %v1503 = vadd.f32 %v986, %v1502
        %v1504 = vpop.f32.mrb[0].mxu0
        %v1505 = vpop.f32.mrb[0].mxu0
        %v1506 = vadd.f32 %v986, %v1505
        %v1507 = vpop.f32.mrb[0].mxu0
        %1508 = vmatprep.mubr.bf16.mxu0 %v609
        %1509 = vmatmul.mubr.bf16.gmra.mrb[0].mxu0 %v486
        %v1510 = vpop.f32.mrb[0].mxu0
        %v1511 = vadd.f32 %v986, %v1510
        %v1512 = vpop.f32.mrb[0].mxu0
        %v1513 = vpop.f32.mrb[0].mxu0
        %v1514 = vadd.f32 %v986, %v1513
        %v1515 = vpop.f32.mrb[0].mxu0
        %1516 = vmatprep.mubr.bf16.mxu0 %v621
        %1517 = vmatmul.mubr.bf16.gmra.mrb[0].mxu0 %v487
        %v1518 = vpop.f32.mrb[0].mxu0
        %v1519 = vadd.f32 %v986, %v1518
        %v1520 = vpop.f32.mrb[0].mxu0
        %v1521 = vpop.f32.mrb[0].mxu0
        %v1522 = vadd.f32 %v986, %v1521
        %v1523 = vpop.f32.mrb[0].mxu0
        %1524 = vmatprep.mubr.bf16.mxu0 %v633
        %1525 = vmatmul.mubr.bf16.gmra.mrb[0].mxu0 %v488
        %v1526 = vpop.f32.mrb[0].mxu0
        %v1527 = vadd.f32 %v986, %v1526
        %v1528 = vpop.f32.mrb[0].mxu0
        %v1529 = vpop.f32.mrb[0].mxu0
        %v1530 = vadd.f32 %v986, %v1529
        %v1531 = vpop.f32.mrb[0].mxu0
        %1532 = vmatprep.mubr.bf16.mxu0 %v645
        %1533 = vmatmul.mubr.bf16.gmra.mrb[0].mxu0 %v489
        %v1534 = vpop.f32.mrb[0].mxu0
        %v1535 = vadd.f32 %v986, %v1534
        %v1536 = vpop.f32.mrb[0].mxu0
        %v1537 = vpop.f32.mrb[0].mxu0
        %v1538 = vadd.f32 %v986, %v1537
        %v1539 = vpop.f32.mrb[0].mxu0
        %1540 = vmatprep.mubr.bf16.mxu0 %v657
        %1541 = vmatmul.mubr.bf16.gmra.mrb[0].mxu0 %v490
        %v1542 = vpop.f32.mrb[0].mxu0
        %v1543 = vadd.f32 %v986, %v1542
        %v1544 = vpop.f32.mrb[0].mxu0
        %v1545 = vpop.f32.mrb[0].mxu0
        %v1546 = vadd.f32 %v986, %v1545
        %v1547 = vpop.f32.mrb[0].mxu0
        %1548 = vmatprep.mubr.bf16.mxu0 %v669
        %1549 = vmatmul.mubr.bf16.gmra.mrb[0].mxu0 %v491
        %v1550 = vpop.f32.mrb[0].mxu0
        %v1551 = vadd.f32 %v986, %v1550
        %v1552 = vpop.f32.mrb[0].mxu0
        %v1553 = vpop.f32.mrb[0].mxu0
        %v1554 = vadd.f32 %v986, %v1553
        %v1555 = vpop.f32.mrb[0].mxu0
        %1556 = vmatprep.mubr.bf16.mxu0 %v681
        %1557 = vmatmul.mubr.bf16.gmra.mrb[0].mxu0 %v492
        %v1558 = vpop.f32.mrb[0].mxu0
        %v1559 = vadd.f32 %v986, %v1558
        %v1560 = vpop.f32.mrb[0].mxu0
        %v1561 = vpop.f32.mrb[0].mxu0
        %v1562 = vadd.f32 %v986, %v1561
        %v1563 = vpop.f32.mrb[0].mxu0
        %1564 = vmatprep.mubr.bf16.mxu0 %v693
        %1565 = vmatmul.mubr.bf16.gmra.mrb[0].mxu0 %v493
        %v1566 = vpop.f32.mrb[0].mxu0
        %v1567 = vadd.f32 %v986, %v1566
        %v1568 = vpop.f32.mrb[0].mxu0
        %v1569 = vpop.f32.mrb[0].mxu0
        %v1570 = vadd.f32 %v986, %v1569
        %v1571 = vpop.f32.mrb[0].mxu0
        %1572 = vmatprep.mubr.bf16.mxu0 %v705
        %1573 = vmatmul.mubr.bf16.gmra.mrb[0].mxu0 %v494
        %v1574 = vpop.f32.mrb[0].mxu0
        %v1575 = vadd.f32 %v986, %v1574
        %v1576 = vpop.f32.mrb[0].mxu0
        %v1577 = vpop.f32.mrb[0].mxu0
        %v1578 = vadd.f32 %v986, %v1577
        %v1579 = vpop.f32.mrb[0].mxu0
        %1580 = vdwg.mxu0
        %1581 = vmatprep.subr.bf16.mxu0 0
        %1582 = vmatpush1.bf16.msra.mxu0 %v1292
        %1583 = vmatprep.subr.bf16.mxu0 0
        %1584 = vmatpush1.bf16.msra.mxu0 %v1293
        %1585 = vmatprep.subr.bf16.mxu0 0
        %1586 = vmatpush1.bf16.msra.mxu0 %v1294
        %1587 = vmatprep.subr.bf16.mxu0 0
        %1588 = vmatpush1.bf16.msra.mxu0 %v1295
        %1589 = vmatprep.subr.bf16.mxu0 0
        %1590 = vmatpush1.bf16.msra.mxu0 %v1296
        %1591 = vmatprep.subr.bf16.mxu0 0
        %1592 = vmatpush1.bf16.msra.mxu0 %v1297
        %1593 = vmatprep.subr.bf16.mxu0 0
        %1594 = vmatpush1.bf16.msra.mxu0 %v1298
        %1595 = vmatprep.subr.bf16.mxu0 0
        %1596 = vmatpush1.bf16.msra.mxu0 %v1299
        %1597 = vmatprep.subr.bf16.mxu0 0
        %1598 = vmatpush1.bf16.msra.mxu0 %v1300
        %1599 = vmatprep.subr.bf16.mxu0 0
        %1600 = vmatpush1.bf16.msra.mxu0 %v1301
        %1601 = vmatprep.subr.bf16.mxu0 0
        %1602 = vmatpush1.bf16.msra.mxu0 %v1302
        %1603 = vmatprep.subr.bf16.mxu0 0
        %1604 = vmatpush1.bf16.msra.mxu0 %v1303
        %1605 = vmatprep.subr.bf16.mxu0 0
        %1606 = vmatpush1.bf16.msra.mxu0 %v1304
        %1607 = vmatprep.subr.bf16.mxu0 0
        %1608 = vmatpush1.bf16.msra.mxu0 %v1305
        %1609 = vmatprep.subr.bf16.mxu0 0
        %1610 = vmatpush1.bf16.msra.mxu0 %v1306
        %1611 = vmatprep.subr.bf16.mxu0 0
        %1612 = vmatpush1.bf16.msra.mxu0 %v1307
        %1613 = vmatprep.mubr.bf16.mxu0 %v480
        %1614 = vmatmul.mubr.bf16.gmra.mrb[0].mxu0 %v757
        %v1615 = vpop.f32.mrb[0].mxu0
        %v1616 = vadd.f32 %v1455, %v1615
        %v1617 = vpop.f32.mrb[0].mxu0
        %v1618 = vpop.f32.mrb[0].mxu0
        %v1619 = vadd.f32 %v1458, %v1618
        %v1620 = vpop.f32.mrb[0].mxu0
        %1621 = vmatprep.mubr.bf16.mxu0 %v481
        %1622 = vmatmul.mubr.bf16.gmra.mrb[0].mxu0 %v760
        %v1623 = vpop.f32.mrb[0].mxu0
        %v1624 = vadd.f32 %v1463, %v1623
        %v1625 = vpop.f32.mrb[0].mxu0
        %v1626 = vpop.f32.mrb[0].mxu0
        %v1627 = vadd.f32 %v1466, %v1626
        %v1628 = vpop.f32.mrb[0].mxu0
        %1629 = vmatprep.mubr.bf16.mxu0 %v482
        %1630 = vmatmul.mubr.bf16.gmra.mrb[0].mxu0 %v763
        %v1631 = vpop.f32.mrb[0].mxu0
        %v1632 = vadd.f32 %v1471, %v1631
        %v1633 = vpop.f32.mrb[0].mxu0
        %v1634 = vpop.f32.mrb[0].mxu0
        %v1635 = vadd.f32 %v1474, %v1634
        %v1636 = vpop.f32.mrb[0].mxu0
        %1637 = vmatprep.mubr.bf16.mxu0 %v483
        %1638 = vmatmul.mubr.bf16.gmra.mrb[0].mxu0 %v766
        %v1639 = vpop.f32.mrb[0].mxu0
        %v1640 = vadd.f32 %v1479, %v1639
        %v1641 = vpop.f32.mrb[0].mxu0
        %v1642 = vpop.f32.mrb[0].mxu0
        %v1643 = vadd.f32 %v1482, %v1642
        %v1644 = vpop.f32.mrb[0].mxu0
        %1645 = vmatprep.mubr.bf16.mxu0 %v484
        %1646 = vmatmul.mubr.bf16.gmra.mrb[0].mxu0 %v769
        %v1647 = vpop.f32.mrb[0].mxu0
        %v1648 = vadd.f32 %v1487, %v1647
        %v1649 = vpop.f32.mrb[0].mxu0
        %v1650 = vpop.f32.mrb[0].mxu0
        %v1651 = vadd.f32 %v1490, %v1650
        %v1652 = vpop.f32.mrb[0].mxu0
        %1653 = vmatprep.mubr.bf16.mxu0 %v485
        %1654 = vmatmul.mubr.bf16.gmra.mrb[0].mxu0 %v772
        %v1655 = vpop.f32.mrb[0].mxu0
        %v1656 = vadd.f32 %v1495, %v1655
        %v1657 = vpop.f32.mrb[0].mxu0
        %v1658 = vpop.f32.mrb[0].mxu0
        %v1659 = vadd.f32 %v1498, %v1658
        %v1660 = vpop.f32.mrb[0].mxu0
        %1661 = vmatprep.mubr.bf16.mxu0 %v486
        %1662 = vmatmul.mubr.bf16.gmra.mrb[0].mxu0 %v775
        %v1663 = vpop.f32.mrb[0].mxu0
        %v1664 = vadd.f32 %v1503, %v1663
        %v1665 = vpop.f32.mrb[0].mxu0
        %v1666 = vpop.f32.mrb[0].mxu0
        %v1667 = vadd.f32 %v1506, %v1666
        %v1668 = vpop.f32.mrb[0].mxu0
        %1669 = vmatprep.mubr.bf16.mxu0 %v487
        %1670 = vmatmul.mubr.bf16.gmra.mrb[0].mxu0 %v778
        %v1671 = vpop.f32.mrb[0].mxu0
        %v1672 = vadd.f32 %v1511, %v1671
        %v1673 = vpop.f32.mrb[0].mxu0
        %v1674 = vpop.f32.mrb[0].mxu0
        %v1675 = vadd.f32 %v1514, %v1674
        %v1676 = vpop.f32.mrb[0].mxu0
        %1677 = vmatprep.mubr.bf16.mxu0 %v488
        %1678 = vmatmul.mubr.bf16.gmra.mrb[0].mxu0 %v781
        %v1679 = vpop.f32.mrb[0].mxu0
        %v1680 = vadd.f32 %v1519, %v1679
        %v1681 = vpop.f32.mrb[0].mxu0
        %v1682 = vpop.f32.mrb[0].mxu0
        %v1683 = vadd.f32 %v1522, %v1682
        %v1684 = vpop.f32.mrb[0].mxu0
        %1685 = vmatprep.mubr.bf16.mxu0 %v489
        %1686 = vmatmul.mubr.bf16.gmra.mrb[0].mxu0 %v784
        %v1687 = vpop.f32.mrb[0].mxu0
        %v1688 = vadd.f32 %v1527, %v1687
        %v1689 = vpop.f32.mrb[0].mxu0
        %v1690 = vpop.f32.mrb[0].mxu0
        %v1691 = vadd.f32 %v1530, %v1690
        %v1692 = vpop.f32.mrb[0].mxu0
        %1693 = vmatprep.mubr.bf16.mxu0 %v490
        %1694 = vmatmul.mubr.bf16.gmra.mrb[0].mxu0 %v787
        %v1695 = vpop.f32.mrb[0].mxu0
        %v1696 = vadd.f32 %v1535, %v1695
        %v1697 = vpop.f32.mrb[0].mxu0
        %v1698 = vpop.f32.mrb[0].mxu0
        %v1699 = vadd.f32 %v1538, %v1698
        %v1700 = vpop.f32.mrb[0].mxu0
        %1701 = vmatprep.mubr.bf16.mxu0 %v491
        %1702 = vmatmul.mubr.bf16.gmra.mrb[0].mxu0 %v790
        %v1703 = vpop.f32.mrb[0].mxu0
        %v1704 = vadd.f32 %v1543, %v1703
        %v1705 = vpop.f32.mrb[0].mxu0
        %v1706 = vpop.f32.mrb[0].mxu0
        %v1707 = vadd.f32 %v1546, %v1706
        %v1708 = vpop.f32.mrb[0].mxu0
        %1709 = vmatprep.mubr.bf16.mxu0 %v492
        %1710 = vmatmul.mubr.bf16.gmra.mrb[0].mxu0 %v793
        %v1711 = vpop.f32.mrb[0].mxu0
        %v1712 = vadd.f32 %v1551, %v1711
        %v1713 = vpop.f32.mrb[0].mxu0
        %v1714 = vpop.f32.mrb[0].mxu0
        %v1715 = vadd.f32 %v1554, %v1714
        %v1716 = vpop.f32.mrb[0].mxu0
        %1717 = vmatprep.mubr.bf16.mxu0 %v493
        %1718 = vmatmul.mubr.bf16.gmra.mrb[0].mxu0 %v796
        %v1719 = vpop.f32.mrb[0].mxu0
        %v1720 = vadd.f32 %v1559, %v1719
        %v1721 = vpop.f32.mrb[0].mxu0
        %v1722 = vpop.f32.mrb[0].mxu0
        %v1723 = vadd.f32 %v1562, %v1722
        %v1724 = vpop.f32.mrb[0].mxu0
        %1725 = vmatprep.mubr.bf16.mxu0 %v494
        %1726 = vmatmul.mubr.bf16.gmra.mrb[0].mxu0 %v799
        %v1727 = vpop.f32.mrb[0].mxu0
        %v1728 = vadd.f32 %v1567, %v1727
        %v1729 = vpop.f32.mrb[0].mxu0
        %v1730 = vpop.f32.mrb[0].mxu0
        %v1731 = vadd.f32 %v1570, %v1730
        %v1732 = vpop.f32.mrb[0].mxu0
        %1733 = vmatprep.mubr.bf16.mxu0 %v495
        %1734 = vmatmul.mubr.bf16.gmra.mrb[0].mxu0 %v802
        %v1735 = vpop.f32.mrb[0].mxu0
        %v1736 = vadd.f32 %v1575, %v1735
        %v1737 = vpop.f32.mrb[0].mxu0
        %v1738 = vpop.f32.mrb[0].mxu0
        %v1739 = vadd.f32 %v1578, %v1738
        %v1740 = vpop.f32.mrb[0].mxu0
        %1741 = vdwg.mxu0
        %1742 = vmatprep.subr.bf16.mxu0 0
        %1743 = vmatpush1.bf16.msra.mxu0 %v1308
        %1744 = vmatprep.subr.bf16.mxu0 0
        %1745 = vmatpush1.bf16.msra.mxu0 %v1309
        %1746 = vmatprep.subr.bf16.mxu0 0
        %1747 = vmatpush1.bf16.msra.mxu0 %v1310
        %1748 = vmatprep.subr.bf16.mxu0 0
        %1749 = vmatpush1.bf16.msra.mxu0 %v1311
        %1750 = vmatprep.subr.bf16.mxu0 0
        %1751 = vmatpush1.bf16.msra.mxu0 %v1312
        %1752 = vmatprep.subr.bf16.mxu0 0
        %1753 = vmatpush1.bf16.msra.mxu0 %v1313
        %1754 = vmatprep.subr.bf16.mxu0 0
        %1755 = vmatpush1.bf16.msra.mxu0 %v1314
        %1756 = vmatprep.subr.bf16.mxu0 0
        %1757 = vmatpush1.bf16.msra.mxu0 %v1315
        %1758 = vmatprep.subr.bf16.mxu0 0
        %1759 = vmatpush1.bf16.msra.mxu0 %v1316
        %1760 = vmatprep.subr.bf16.mxu0 0
        %1761 = vmatpush1.bf16.msra.mxu0 %v1317
        %1762 = vmatprep.subr.bf16.mxu0 0
        %1763 = vmatpush1.bf16.msra.mxu0 %v1318
        %1764 = vmatprep.subr.bf16.mxu0 0
        %1765 = vmatpush1.bf16.msra.mxu0 %v1319
        %1766 = vmatprep.subr.bf16.mxu0 0
        %1767 = vmatpush1.bf16.msra.mxu0 %v1320
        %1768 = vmatprep.subr.bf16.mxu0 0
        %1769 = vmatpush1.bf16.msra.mxu0 %v1321
        %1770 = vmatprep.subr.bf16.mxu0 0
        %1771 = vmatpush1.bf16.msra.mxu0 %v1322
        %1772 = vmatprep.subr.bf16.mxu0 0
        %1773 = vmatpush1.bf16.msra.mxu0 %v1323
        %1774 = vmatprep.mubr.bf16.mxu0 %v760
        %1775 = vmatmul.mubr.bf16.gmra.mrb[0].mxu0 %v537
        %v1776 = vpop.f32.mrb[0].mxu0
        %v1777 = vadd.f32 %v1616, %v1776
        %v1778 = vpop.f32.mrb[0].mxu0
        %v1779 = vpop.f32.mrb[0].mxu0
        %v1780 = vadd.f32 %v1619, %v1779
        %v1781 = vpop.f32.mrb[0].mxu0
        %1782 = vmatprep.mubr.bf16.mxu0 %v763
        %1783 = vmatmul.mubr.bf16.gmra.mrb[0].mxu0 %v549
        %v1784 = vpop.f32.mrb[0].mxu0
        %v1785 = vadd.f32 %v1624, %v1784
        %v1786 = vpop.f32.mrb[0].mxu0
        %v1787 = vpop.f32.mrb[0].mxu0
        %v1788 = vadd.f32 %v1627, %v1787
        %v1789 = vpop.f32.mrb[0].mxu0
        %1790 = vmatprep.mubr.bf16.mxu0 %v766
        %1791 = vmatmul.mubr.bf16.gmra.mrb[0].mxu0 %v561
        %v1792 = vpop.f32.mrb[0].mxu0
        %v1793 = vadd.f32 %v1632, %v1792
        %v1794 = vpop.f32.mrb[0].mxu0
        %v1795 = vpop.f32.mrb[0].mxu0
        %v1796 = vadd.f32 %v1635, %v1795
        %v1797 = vpop.f32.mrb[0].mxu0
        %1798 = vmatprep.mubr.bf16.mxu0 %v769
        %1799 = vmatmul.mubr.bf16.gmra.mrb[0].mxu0 %v573
        %v1800 = vpop.f32.mrb[0].mxu0
        %v1801 = vadd.f32 %v1640, %v1800
        %v1802 = vpop.f32.mrb[0].mxu0
        %v1803 = vpop.f32.mrb[0].mxu0
        %v1804 = vadd.f32 %v1643, %v1803
        %v1805 = vpop.f32.mrb[0].mxu0
        %1806 = vmatprep.mubr.bf16.mxu0 %v772
        %1807 = vmatmul.mubr.bf16.gmra.mrb[0].mxu0 %v585
        %v1808 = vpop.f32.mrb[0].mxu0
        %v1809 = vadd.f32 %v1648, %v1808
        %v1810 = vpop.f32.mrb[0].mxu0
        %v1811 = vpop.f32.mrb[0].mxu0
        %v1812 = vadd.f32 %v1651, %v1811
        %v1813 = vpop.f32.mrb[0].mxu0
        %1814 = vmatprep.mubr.bf16.mxu0 %v775
        %1815 = vmatmul.mubr.bf16.gmra.mrb[0].mxu0 %v597
        %v1816 = vpop.f32.mrb[0].mxu0
        %v1817 = vadd.f32 %v1656, %v1816
        %v1818 = vpop.f32.mrb[0].mxu0
        %v1819 = vpop.f32.mrb[0].mxu0
        %v1820 = vadd.f32 %v1659, %v1819
        %v1821 = vpop.f32.mrb[0].mxu0
        %1822 = vmatprep.mubr.bf16.mxu0 %v778
        %1823 = vmatmul.mubr.bf16.gmra.mrb[0].mxu0 %v609
        %v1824 = vpop.f32.mrb[0].mxu0
        %v1825 = vadd.f32 %v1664, %v1824
        %v1826 = vpop.f32.mrb[0].mxu0
        %v1827 = vpop.f32.mrb[0].mxu0
        %v1828 = vadd.f32 %v1667, %v1827
        %v1829 = vpop.f32.mrb[0].mxu0
        %1830 = vmatprep.mubr.bf16.mxu0 %v781
        %1831 = vmatmul.mubr.bf16.gmra.mrb[0].mxu0 %v621
        %v1832 = vpop.f32.mrb[0].mxu0
        %v1833 = vadd.f32 %v1672, %v1832
        %v1834 = vpop.f32.mrb[0].mxu0
        %v1835 = vpop.f32.mrb[0].mxu0
        %v1836 = vadd.f32 %v1675, %v1835
        %v1837 = vpop.f32.mrb[0].mxu0
        %1838 = vmatprep.mubr.bf16.mxu0 %v784
        %1839 = vmatmul.mubr.bf16.gmra.mrb[0].mxu0 %v633
        %v1840 = vpop.f32.mrb[0].mxu0
        %v1841 = vadd.f32 %v1680, %v1840
        %v1842 = vpop.f32.mrb[0].mxu0
        %v1843 = vpop.f32.mrb[0].mxu0
        %v1844 = vadd.f32 %v1683, %v1843
        %v1845 = vpop.f32.mrb[0].mxu0
        %1846 = vmatprep.mubr.bf16.mxu0 %v787
        %1847 = vmatmul.mubr.bf16.gmra.mrb[0].mxu0 %v645
        %v1848 = vpop.f32.mrb[0].mxu0
        %v1849 = vadd.f32 %v1688, %v1848
        %v1850 = vpop.f32.mrb[0].mxu0
        %v1851 = vpop.f32.mrb[0].mxu0
        %v1852 = vadd.f32 %v1691, %v1851
        %v1853 = vpop.f32.mrb[0].mxu0
        %1854 = vmatprep.mubr.bf16.mxu0 %v790
        %1855 = vmatmul.mubr.bf16.gmra.mrb[0].mxu0 %v657
        %v1856 = vpop.f32.mrb[0].mxu0
        %v1857 = vadd.f32 %v1696, %v1856
        %v1858 = vpop.f32.mrb[0].mxu0
        %v1859 = vpop.f32.mrb[0].mxu0
        %v1860 = vadd.f32 %v1699, %v1859
        %v1861 = vpop.f32.mrb[0].mxu0
        %1862 = vmatprep.mubr.bf16.mxu0 %v793
        %1863 = vmatmul.mubr.bf16.gmra.mrb[0].mxu0 %v669
        %v1864 = vpop.f32.mrb[0].mxu0
        %v1865 = vadd.f32 %v1704, %v1864
        %v1866 = vpop.f32.mrb[0].mxu0
        %v1867 = vpop.f32.mrb[0].mxu0
        %v1868 = vadd.f32 %v1707, %v1867
        %v1869 = vpop.f32.mrb[0].mxu0
        %1870 = vmatprep.mubr.bf16.mxu0 %v796
        %1871 = vmatmul.mubr.bf16.gmra.mrb[0].mxu0 %v681
        %v1872 = vpop.f32.mrb[0].mxu0
        %v1873 = vadd.f32 %v1712, %v1872
        %v1874 = vpop.f32.mrb[0].mxu0
        %v1875 = vpop.f32.mrb[0].mxu0
        %v1876 = vadd.f32 %v1715, %v1875
        %v1877 = vpop.f32.mrb[0].mxu0
        %1878 = vmatprep.mubr.bf16.mxu0 %v799
        %1879 = vmatmul.mubr.bf16.gmra.mrb[0].mxu0 %v693
        %v1880 = vpop.f32.mrb[0].mxu0
        %v1881 = vadd.f32 %v1720, %v1880
        %v1882 = vpop.f32.mrb[0].mxu0
        %v1883 = vpop.f32.mrb[0].mxu0
        %v1884 = vadd.f32 %v1723, %v1883
        %v1885 = vpop.f32.mrb[0].mxu0
        %1886 = vmatprep.mubr.bf16.mxu0 %v802
        %1887 = vmatmul.mubr.bf16.gmra.mrb[0].mxu0 %v705
        %v1888 = vpop.f32.mrb[0].mxu0
        %v1889 = vadd.f32 %v1728, %v1888
        %v1890 = vpop.f32.mrb[0].mxu0
        %v1891 = vpop.f32.mrb[0].mxu0
        %v1892 = vadd.f32 %v1731, %v1891
        %v1893 = vpop.f32.mrb[0].mxu0
        %1894 = vmatprep.mubr.bf16.mxu0 %v836
        %1895 = vmatmul.mubr.bf16.gmra.mrb[0].mxu0 %v830
        %v1896 = vpop.f32.mrb[0].mxu0
        %v1897 = vadd.f32 %v1736, %v1896
        %v1898 = vpop.f32.mrb[0].mxu0
        %v1899 = vpop.f32.mrb[0].mxu0
        %v1900 = vadd.f32 %v1739, %v1899
        %v1901 = vpop.f32.mrb[0].mxu0
        %1902 = vdwg.mxu0
        %1903 = vmatprep.subr.bf16.mxu0 0
        %1904 = vmatpush1.bf16.msra.mxu0 %v1324
        %1905 = vmatprep.subr.bf16.mxu0 0
        %1906 = vmatpush1.bf16.msra.mxu0 %v1325
        %1907 = vmatprep.subr.bf16.mxu0 0
        %1908 = vmatpush1.bf16.msra.mxu0 %v1326
        %1909 = vmatprep.subr.bf16.mxu0 0
        %1910 = vmatpush1.bf16.msra.mxu0 %v1327
        %1911 = vmatprep.subr.bf16.mxu0 0
        %1912 = vmatpush1.bf16.msra.mxu0 %v1328
        %1913 = vmatprep.subr.bf16.mxu0 0
        %1914 = vmatpush1.bf16.msra.mxu0 %v1329
        %1915 = vmatprep.subr.bf16.mxu0 0
        %1916 = vmatpush1.bf16.msra.mxu0 %v1330
        %1917 = vmatprep.subr.bf16.mxu0 0
        %1918 = vmatpush1.bf16.msra.mxu0 %v1331
        %1919 = vmatprep.subr.bf16.mxu0 0
        %1920 = vmatpush1.bf16.msra.mxu0 %v1332
        %1921 = vmatprep.subr.bf16.mxu0 0
        %1922 = vmatpush1.bf16.msra.mxu0 %v1333
        %1923 = vmatprep.subr.bf16.mxu0 0
        %1924 = vmatpush1.bf16.msra.mxu0 %v1334
        %1925 = vmatprep.subr.bf16.mxu0 0
        %1926 = vmatpush1.bf16.msra.mxu0 %v1335
        %1927 = vmatprep.subr.bf16.mxu0 0
        %1928 = vmatpush1.bf16.msra.mxu0 %v1336
        %1929 = vmatprep.subr.bf16.mxu0 0
        %1930 = vmatpush1.bf16.msra.mxu0 %v1337
        %1931 = vmatprep.subr.bf16.mxu0 0
        %1932 = vmatpush1.bf16.msra.mxu0 %v1338
        %1933 = vmatprep.subr.bf16.mxu0 0
        %1934 = vmatpush1.bf16.msra.mxu0 %v1339
        %1935 = vmatprep.mubr.bf16.mxu0 %v549
        %1936 = vmatmul.mubr.bf16.gmra.mrb[0].mxu0 %v481
        %v1937 = vpop.f32.mrb[0].mxu0
        %v1938 = vadd.f32 %v1777, %v1937
        %v1939 = vpop.f32.mrb[0].mxu0
        %v1940 = vpop.f32.mrb[0].mxu0
        %v1941 = vadd.f32 %v1780, %v1940
        %v1942 = vpop.f32.mrb[0].mxu0
        %1943 = vmatprep.mubr.bf16.mxu0 %v561
        %1944 = vmatmul.mubr.bf16.gmra.mrb[0].mxu0 %v482
        %v1945 = vpop.f32.mrb[0].mxu0
        %v1946 = vadd.f32 %v1785, %v1945
        %v1947 = vpop.f32.mrb[0].mxu0
        %v1948 = vpop.f32.mrb[0].mxu0
        %v1949 = vadd.f32 %v1788, %v1948
        %v1950 = vpop.f32.mrb[0].mxu0
        %1951 = vmatprep.mubr.bf16.mxu0 %v573
        %1952 = vmatmul.mubr.bf16.gmra.mrb[0].mxu0 %v483
        %v1953 = vpop.f32.mrb[0].mxu0
        %v1954 = vadd.f32 %v1793, %v1953
        %v1955 = vpop.f32.mrb[0].mxu0
        %v1956 = vpop.f32.mrb[0].mxu0
        %v1957 = vadd.f32 %v1796, %v1956
        %v1958 = vpop.f32.mrb[0].mxu0
        %1959 = vmatprep.mubr.bf16.mxu0 %v585
        %1960 = vmatmul.mubr.bf16.gmra.mrb[0].mxu0 %v484
        %v1961 = vpop.f32.mrb[0].mxu0
        %v1962 = vadd.f32 %v1801, %v1961
        %v1963 = vpop.f32.mrb[0].mxu0
        %v1964 = vpop.f32.mrb[0].mxu0
        %v1965 = vadd.f32 %v1804, %v1964
        %v1966 = vpop.f32.mrb[0].mxu0
        %1967 = vmatprep.mubr.bf16.mxu0 %v597
        %1968 = vmatmul.mubr.bf16.gmra.mrb[0].mxu0 %v485
        %v1969 = vpop.f32.mrb[0].mxu0
        %v1970 = vadd.f32 %v1809, %v1969
        %v1971 = vpop.f32.mrb[0].mxu0
        %v1972 = vpop.f32.mrb[0].mxu0
        %v1973 = vadd.f32 %v1812, %v1972
        %v1974 = vpop.f32.mrb[0].mxu0
        %1975 = vmatprep.mubr.bf16.mxu0 %v609
        %1976 = vmatmul.mubr.bf16.gmra.mrb[0].mxu0 %v486
        %v1977 = vpop.f32.mrb[0].mxu0
        %v1978 = vadd.f32 %v1817, %v1977
        %v1979 = vpop.f32.mrb[0].mxu0
        %v1980 = vpop.f32.mrb[0].mxu0
        %v1981 = vadd.f32 %v1820, %v1980
        %v1982 = vpop.f32.mrb[0].mxu0
        %1983 = vmatprep.mubr.bf16.mxu0 %v621
        %1984 = vmatmul.mubr.bf16.gmra.mrb[0].mxu0 %v487
        %v1985 = vpop.f32.mrb[0].mxu0
        %v1986 = vadd.f32 %v1825, %v1985
        %v1987 = vpop.f32.mrb[0].mxu0
        %v1988 = vpop.f32.mrb[0].mxu0
        %v1989 = vadd.f32 %v1828, %v1988
        %v1990 = vpop.f32.mrb[0].mxu0
        %1991 = vmatprep.mubr.bf16.mxu0 %v633
        %1992 = vmatmul.mubr.bf16.gmra.mrb[0].mxu0 %v488
        %v1993 = vpop.f32.mrb[0].mxu0
        %v1994 = vadd.f32 %v1833, %v1993
        %v1995 = vpop.f32.mrb[0].mxu0
        %v1996 = vpop.f32.mrb[0].mxu0
        %v1997 = vadd.f32 %v1836, %v1996
        %v1998 = vpop.f32.mrb[0].mxu0
        %1999 = vmatprep.mubr.bf16.mxu0 %v645
        %2000 = vmatmul.mubr.bf16.gmra.mrb[0].mxu0 %v489
        %v2001 = vpop.f32.mrb[0].mxu0
        %v2002 = vadd.f32 %v1841, %v2001
        %v2003 = vpop.f32.mrb[0].mxu0
        %v2004 = vpop.f32.mrb[0].mxu0
        %v2005 = vadd.f32 %v1844, %v2004
        %v2006 = vpop.f32.mrb[0].mxu0
        %2007 = vmatprep.mubr.bf16.mxu0 %v657
        %2008 = vmatmul.mubr.bf16.gmra.mrb[0].mxu0 %v490
        %v2009 = vpop.f32.mrb[0].mxu0
        %v2010 = vadd.f32 %v1849, %v2009
        %v2011 = vpop.f32.mrb[0].mxu0
        %v2012 = vpop.f32.mrb[0].mxu0
        %v2013 = vadd.f32 %v1852, %v2012
        %v2014 = vpop.f32.mrb[0].mxu0
        %2015 = vmatprep.mubr.bf16.mxu0 %v669
        %2016 = vmatmul.mubr.bf16.gmra.mrb[0].mxu0 %v491
        %v2017 = vpop.f32.mrb[0].mxu0
        %v2018 = vadd.f32 %v1857, %v2017
        %v2019 = vpop.f32.mrb[0].mxu0
        %v2020 = vpop.f32.mrb[0].mxu0
        %v2021 = vadd.f32 %v1860, %v2020
        %v2022 = vpop.f32.mrb[0].mxu0
        %2023 = vmatprep.mubr.bf16.mxu0 %v681
        %2024 = vmatmul.mubr.bf16.gmra.mrb[0].mxu0 %v492
        %v2025 = vpop.f32.mrb[0].mxu0
        %v2026 = vadd.f32 %v1865, %v2025
        %v2027 = vpop.f32.mrb[0].mxu0
        %v2028 = vpop.f32.mrb[0].mxu0
        %v2029 = vadd.f32 %v1868, %v2028
        %v2030 = vpop.f32.mrb[0].mxu0
        %2031 = vmatprep.mubr.bf16.mxu0 %v693
        %2032 = vmatmul.mubr.bf16.gmra.mrb[0].mxu0 %v493
        %v2033 = vpop.f32.mrb[0].mxu0
        %v2034 = vadd.f32 %v1873, %v2033
        %v2035 = vpop.f32.mrb[0].mxu0
        %v2036 = vpop.f32.mrb[0].mxu0
        %v2037 = vadd.f32 %v1876, %v2036
        %v2038 = vpop.f32.mrb[0].mxu0
        %2039 = vmatprep.mubr.bf16.mxu0 %v705
        %2040 = vmatmul.mubr.bf16.gmra.mrb[0].mxu0 %v494
        %v2041 = vpop.f32.mrb[0].mxu0
        %v2042 = vadd.f32 %v1881, %v2041
        %v2043 = vpop.f32.mrb[0].mxu0
        %v2044 = vpop.f32.mrb[0].mxu0
        %v2045 = vadd.f32 %v1884, %v2044
        %v2046 = vpop.f32.mrb[0].mxu0
        %2047 = vmatprep.mubr.bf16.mxu0 %v830
        %2048 = vmatmul.mubr.bf16.gmra.mrb[0].mxu0 %v495
        %v2049 = vpop.f32.mrb[0].mxu0
        %v2050 = vadd.f32 %v1889, %v2049
        %v2051 = vpop.f32.mrb[0].mxu0
        %v2052 = vpop.f32.mrb[0].mxu0
        %v2053 = vadd.f32 %v1892, %v2052
        %v2054 = vpop.f32.mrb[0].mxu0
        %2055 = vmatprep.mubr.bf16.mxu0 %v525
        %2056 = vmatmul.mubr.bf16.gmra.mrb[0].mxu0 %v479
        %v2057 = vpop.f32.mrb[0].mxu0
        %v2058 = vadd.f32 %v1897, %v2057
        %v2059 = vpop.f32.mrb[0].mxu0
        %v2060 = vpop.f32.mrb[0].mxu0
        %v2061 = vadd.f32 %v1900, %v2060
        %v2062 = vpop.f32.mrb[0].mxu0
        %2063 = vdwg.mxu0
        %2064 = vmatprep.subr.bf16.mxu0 0
        %2065 = vmatpush1.bf16.msra.mxu0 %v1340
        %2066 = vmatprep.subr.bf16.mxu0 0
        %2067 = vmatpush1.bf16.msra.mxu0 %v1341
        %2068 = vmatprep.subr.bf16.mxu0 0
        %2069 = vmatpush1.bf16.msra.mxu0 %v1342
        %2070 = vmatprep.subr.bf16.mxu0 0
        %2071 = vmatpush1.bf16.msra.mxu0 %v1343
        %2072 = vmatprep.subr.bf16.mxu0 0
        %2073 = vmatpush1.bf16.msra.mxu0 %v1344
        %2074 = vmatprep.subr.bf16.mxu0 0
        %2075 = vmatpush1.bf16.msra.mxu0 %v1345
        %2076 = vmatprep.subr.bf16.mxu0 0
        %2077 = vmatpush1.bf16.msra.mxu0 %v1346
        %2078 = vmatprep.subr.bf16.mxu0 0
        %2079 = vmatpush1.bf16.msra.mxu0 %v1347
        %2080 = vmatprep.subr.bf16.mxu0 0
        %2081 = vmatpush1.bf16.msra.mxu0 0
        %2082 = vmatprep.subr.bf16.mxu0 0
        %2083 = vmatpush1.bf16.msra.mxu0 0
        %2084 = vmatprep.subr.bf16.mxu0 0
        %2085 = vmatpush1.bf16.msra.mxu0 0
        %2086 = vmatprep.subr.bf16.mxu0 0
        %2087 = vmatpush1.bf16.msra.mxu0 0
        %2088 = vmatprep.subr.bf16.mxu0 0
        %2089 = vmatpush1.bf16.msra.mxu0 0
        %2090 = vmatprep.subr.bf16.mxu0 0
        %2091 = vmatpush1.bf16.msra.mxu0 0
        %2092 = vmatprep.subr.bf16.mxu0 0
        %2093 = vmatpush1.bf16.msra.mxu0 0
        %2094 = vmatprep.subr.bf16.mxu0 0
        %2095 = vmatpush1.bf16.msra.mxu0 0
        %2096 = vmatprep.mubr.bf16.mxu0 0
        %2097 = vmatmul.mubr.bf16.gmra.mrb[0].mxu0 %v763
        %v2098 = vpop.f32.mrb[0].mxu0
        %v2099 = vadd.f32 %v1938, %v2098
        %v2100 = vpop.f32.mrb[0].mxu0
        %v2101 = vpop.f32.mrb[0].mxu0
        %v2102 = vadd.f32 %v1941, %v2101
        %v2103 = vpop.f32.mrb[0].mxu0
        %2104 = vmatprep.mubr.bf16.mxu0 0
        %2105 = vmatmul.mubr.bf16.gmra.mrb[0].mxu0 %v766
        %v2106 = vpop.f32.mrb[0].mxu0
        %v2107 = vadd.f32 %v1946, %v2106
        %v2108 = vpop.f32.mrb[0].mxu0
        %v2109 = vpop.f32.mrb[0].mxu0
        %v2110 = vadd.f32 %v1949, %v2109
        %v2111 = vpop.f32.mrb[0].mxu0
        %2112 = vmatprep.mubr.bf16.mxu0 0
        %2113 = vmatmul.mubr.bf16.gmra.mrb[0].mxu0 %v769
        %v2114 = vpop.f32.mrb[0].mxu0
        %v2115 = vadd.f32 %v1954, %v2114
        %v2116 = vpop.f32.mrb[0].mxu0
        %v2117 = vpop.f32.mrb[0].mxu0
        %v2118 = vadd.f32 %v1957, %v2117
        %v2119 = vpop.f32.mrb[0].mxu0
        %2120 = vmatprep.mubr.bf16.mxu0 0
        %2121 = vmatmul.mubr.bf16.gmra.mrb[0].mxu0 %v772
        %v2122 = vpop.f32.mrb[0].mxu0
        %v2123 = vadd.f32 %v1962, %v2122
        %v2124 = vpop.f32.mrb[0].mxu0
        %v2125 = vpop.f32.mrb[0].mxu0
        %v2126 = vadd.f32 %v1965, %v2125
        %v2127 = vpop.f32.mrb[0].mxu0
        %2128 = vmatprep.mubr.bf16.mxu0 0
        %2129 = vmatmul.mubr.bf16.gmra.mrb[0].mxu0 %v775
        %v2130 = vpop.f32.mrb[0].mxu0
        %v2131 = vadd.f32 %v1970, %v2130
        %v2132 = vpop.f32.mrb[0].mxu0
        %v2133 = vpop.f32.mrb[0].mxu0
        %v2134 = vadd.f32 %v1973, %v2133
        %v2135 = vpop.f32.mrb[0].mxu0
        %2136 = vmatprep.mubr.bf16.mxu0 0
        %2137 = vmatmul.mubr.bf16.gmra.mrb[0].mxu0 %v778
        %v2138 = vpop.f32.mrb[0].mxu0
        %v2139 = vadd.f32 %v1978, %v2138
        %v2140 = vpop.f32.mrb[0].mxu0
        %v2141 = vpop.f32.mrb[0].mxu0
        %v2142 = vadd.f32 %v1981, %v2141
        %v2143 = vpop.f32.mrb[0].mxu0
        %2144 = vmatprep.mubr.bf16.mxu0 0
        %2145 = vmatmul.mubr.bf16.gmra.mrb[0].mxu0 %v781
        %v2146 = vpop.f32.mrb[0].mxu0
        %v2147 = vadd.f32 %v1986, %v2146
        %v2148 = vpop.f32.mrb[0].mxu0
        %v2149 = vpop.f32.mrb[0].mxu0
        %v2150 = vadd.f32 %v1989, %v2149
        %v2151 = vpop.f32.mrb[0].mxu0
        %2152 = vmatprep.mubr.bf16.mxu0 0
        %2153 = vmatmul.mubr.bf16.gmra.mrb[0].mxu0 %v784
        %v2154 = vpop.f32.mrb[0].mxu0
        %v2155 = vadd.f32 %v1994, %v2154
        %v2156 = vpop.f32.mrb[0].mxu0
        %v2157 = vpop.f32.mrb[0].mxu0
        %v2158 = vadd.f32 %v1997, %v2157
        %v2159 = vpop.f32.mrb[0].mxu0
        %2160 = vmatprep.mubr.bf16.mxu0 0
        %2161 = vmatmul.mubr.bf16.gmra.mrb[0].mxu0 %v787
        %v2162 = vpop.f32.mrb[0].mxu0
        %v2163 = vadd.f32 %v2002, %v2162
        %v2164 = vpop.f32.mrb[0].mxu0
        %v2165 = vpop.f32.mrb[0].mxu0
        %v2166 = vadd.f32 %v2005, %v2165
        %v2167 = vpop.f32.mrb[0].mxu0
        %2168 = vmatprep.mubr.bf16.mxu0 0
        %2169 = vmatmul.mubr.bf16.gmra.mrb[0].mxu0 %v790
        %v2170 = vpop.f32.mrb[0].mxu0
        %v2171 = vadd.f32 %v2010, %v2170
        %v2172 = vpop.f32.mrb[0].mxu0
        %v2173 = vpop.f32.mrb[0].mxu0
        %v2174 = vadd.f32 %v2013, %v2173
        %v2175 = vpop.f32.mrb[0].mxu0
        %2176 = vmatprep.mubr.bf16.mxu0 0
        %2177 = vmatmul.mubr.bf16.gmra.mrb[0].mxu0 %v793
        %v2178 = vpop.f32.mrb[0].mxu0
        %v2179 = vadd.f32 %v2018, %v2178
        %v2180 = vpop.f32.mrb[0].mxu0
        %v2181 = vpop.f32.mrb[0].mxu0
        %v2182 = vadd.f32 %v2021, %v2181
        %v2183 = vpop.f32.mrb[0].mxu0
        %2184 = vmatprep.mubr.bf16.mxu0 0
        %2185 = vmatmul.mubr.bf16.gmra.mrb[0].mxu0 %v796
        %v2186 = vpop.f32.mrb[0].mxu0
        %v2187 = vadd.f32 %v2026, %v2186
        %v2188 = vpop.f32.mrb[0].mxu0
        %v2189 = vpop.f32.mrb[0].mxu0
        %v2190 = vadd.f32 %v2029, %v2189
        %v2191 = vpop.f32.mrb[0].mxu0
        %2192 = vmatprep.mubr.bf16.mxu0 0
        %2193 = vmatmul.mubr.bf16.gmra.mrb[0].mxu0 %v799
        %v2194 = vpop.f32.mrb[0].mxu0
        %v2195 = vadd.f32 %v2034, %v2194
        %v2196 = vpop.f32.mrb[0].mxu0
        %v2197 = vpop.f32.mrb[0].mxu0
        %v2198 = vadd.f32 %v2037, %v2197
        %v2199 = vpop.f32.mrb[0].mxu0
        %2200 = vmatprep.mubr.bf16.mxu0 0
        %2201 = vmatmul.mubr.bf16.gmra.mrb[0].mxu0 %v802
        %v2202 = vpop.f32.mrb[0].mxu0
        %v2203 = vadd.f32 %v2042, %v2202
        %v2204 = vpop.f32.mrb[0].mxu0
        %v2205 = vpop.f32.mrb[0].mxu0
        %v2206 = vadd.f32 %v2045, %v2205
        %v2207 = vpop.f32.mrb[0].mxu0
        %2208 = vmatprep.mubr.bf16.mxu0 0
        %2209 = vmatmul.mubr.bf16.gmra.mrb[0].mxu0 %v836
        %v2210 = vpop.f32.mrb[0].mxu0
        %v2211 = vadd.f32 %v2050, %v2210
        %v2212 = vpop.f32.mrb[0].mxu0
        %v2213 = vpop.f32.mrb[0].mxu0
        %v2214 = vadd.f32 %v2053, %v2213
        %v2215 = vpop.f32.mrb[0].mxu0
        %2216 = vmatprep.mubr.bf16.mxu0 0
        %2217 = vmatmul.mubr.bf16.gmra.mrb[0].mxu0 %v757
        %v2218 = vpop.f32.mrb[0].mxu0
        %v2219 = vadd.f32 %v2058, %v2218
        %v2220 = vpop.f32.mrb[0].mxu0
        %v2221 = vpop.f32.mrb[0].mxu0
        %v2222 = vadd.f32 %v2061, %v2221
        %v2223 = vpop.f32.mrb[0].mxu0
        %2224 = vdwg.mxu0
        %v2225 = vmax.f32 %v2099, 0.0
        %v2226 = vmax.f32 %v2102, 0.0
        %v2227 = vmax.f32 %v2107, 0.0
        %v2228 = vmax.f32 %v2110, 0.0
        %v2229 = vmax.f32 %v2115, 0.0
        %v2230 = vmax.f32 %v2118, 0.0
        %v2231 = vmax.f32 %v2123, 0.0
        %v2232 = vmax.f32 %v2126, 0.0
        %v2233 = vmax.f32 %v2131, 0.0
        %v2234 = vmax.f32 %v2134, 0.0
        %v2235 = vmax.f32 %v2139, 0.0
        %v2236 = vmax.f32 %v2142, 0.0
        %v2237 = vmax.f32 %v2147, 0.0
        %v2238 = vmax.f32 %v2150, 0.0
        %v2239 = vmax.f32 %v2155, 0.0
        %v2240 = vmax.f32 %v2158, 0.0
        %v2241 = vmax.f32 %v2163, 0.0
        %v2242 = vmax.f32 %v2166, 0.0
        %v2243 = vmax.f32 %v2171, 0.0
        %v2244 = vmax.f32 %v2174, 0.0
        %v2245 = vmax.f32 %v2179, 0.0
        %v2246 = vmax.f32 %v2182, 0.0
        %v2247 = vmax.f32 %v2187, 0.0
        %v2248 = vmax.f32 %v2190, 0.0
        %v2249 = vmax.f32 %v2195, 0.0
        %v2250 = vmax.f32 %v2198, 0.0
        %v2251 = vmax.f32 %v2203, 0.0
        %v2252 = vmax.f32 %v2206, 0.0
        %v2253 = vmax.f32 %v2211, 0.0
        %v2254 = vmax.f32 %v2214, 0.0
        %v2255 = vmax.f32 %v2219, 0.0
        %v2256 = vmax.f32 %v2222, 0.0
        %v2257 = vpack.c.bf16 %v2226, %v2225
        %v2258 = vpack.c.bf16 %v2228, %v2227
        %v2259 = vpack.c.bf16 %v2230, %v2229
        %v2260 = vpack.c.bf16 %v2232, %v2231
        %v2261 = vpack.c.bf16 %v2234, %v2233
        %v2262 = vpack.c.bf16 %v2236, %v2235
        %v2263 = vpack.c.bf16 %v2238, %v2237
        %v2264 = vpack.c.bf16 %v2240, %v2239
        %v2265 = vpack.c.bf16 %v2242, %v2241
        %v2266 = vpack.c.bf16 %v2244, %v2243
        %v2267 = vpack.c.bf16 %v2246, %v2245
        %v2268 = vpack.c.bf16 %v2248, %v2247
        %v2269 = vpack.c.bf16 %v2250, %v2249
        %v2270 = vpack.c.bf16 %v2252, %v2251
        %v2271 = vpack.c.bf16 %v2254, %v2253
        %v2272 = vpack.c.bf16 %v2256, %v2255
        %v2274 = vshrl.u32 %v2257, 16
        %v2276 = vrot.slane %v2274, 7
        %v2277 = vshll.u32 %v2257, 16
        %v2279 = vor.u32 %v2276, %v2277
        %v2281 = vshrl.u32 %v2258, 16
        %v2283 = vrot.slane %v2281, 7
        %v2284 = vshll.u32 %v2258, 16
        %v2286 = vor.u32 %v2283, %v2284
        %v2288 = vshrl.u32 %v2259, 16
        %v2290 = vrot.slane %v2288, 7
        %v2291 = vshll.u32 %v2259, 16
        %v2293 = vor.u32 %v2290, %v2291
        %v2295 = vshrl.u32 %v2260, 16
        %v2297 = vrot.slane %v2295, 7
        %v2298 = vshll.u32 %v2260, 16
        %v2300 = vor.u32 %v2297, %v2298
        %v2302 = vshrl.u32 %v2261, 16
        %v2304 = vrot.slane %v2302, 7
        %v2305 = vshll.u32 %v2261, 16
        %v2307 = vor.u32 %v2304, %v2305
        %v2309 = vshrl.u32 %v2262, 16
        %v2311 = vrot.slane %v2309, 7
        %v2312 = vshll.u32 %v2262, 16
        %v2314 = vor.u32 %v2311, %v2312
        %v2316 = vshrl.u32 %v2263, 16
        %v2318 = vrot.slane %v2316, 7
        %v2319 = vshll.u32 %v2263, 16
        %v2321 = vor.u32 %v2318, %v2319
        %v2323 = vshrl.u32 %v2264, 16
        %v2325 = vrot.slane %v2323, 7
        %v2326 = vshll.u32 %v2264, 16
        %v2328 = vor.u32 %v2325, %v2326
        %v2330 = vshrl.u32 %v2265, 16
        %v2332 = vrot.slane %v2330, 7
        %v2333 = vshll.u32 %v2265, 16
        %v2335 = vor.u32 %v2332, %v2333
        %v2337 = vshrl.u32 %v2266, 16
        %v2339 = vrot.slane %v2337, 7
        %v2340 = vshll.u32 %v2266, 16
        %v2342 = vor.u32 %v2339, %v2340
        %v2344 = vshrl.u32 %v2267, 16
        %v2346 = vrot.slane %v2344, 7
        %v2347 = vshll.u32 %v2267, 16
        %v2349 = vor.u32 %v2346, %v2347
        %v2351 = vshrl.u32 %v2268, 16
        %v2353 = vrot.slane %v2351, 7
        %v2354 = vshll.u32 %v2268, 16
        %v2356 = vor.u32 %v2353, %v2354
        %v2358 = vshrl.u32 %v2269, 16
        %v2360 = vrot.slane %v2358, 7
        %v2361 = vshll.u32 %v2269, 16
        %v2363 = vor.u32 %v2360, %v2361
        %v2365 = vshrl.u32 %v2270, 16
        %v2367 = vrot.slane %v2365, 7
        %v2368 = vshll.u32 %v2270, 16
        %v2370 = vor.u32 %v2367, %v2368
        %v2372 = vshrl.u32 %v2271, 16
        %v2374 = vrot.slane %v2372, 7
        %v2375 = vshll.u32 %v2271, 16
        %v2377 = vor.u32 %v2374, %v2375
        %v2379 = vshrl.u32 %v2272, 16
        %v2381 = vrot.slane %v2379, 7
        %v2382 = vshll.u32 %v2272, 16
        %v2384 = vor.u32 %v2381, %v2382
        %v2417 = vsel %vm478, 0, %v2279
        %v2418 = vsel %vm478, 0, %v2286
        %v2419 = vsel %vm478, 0, %v2293
        %v2420 = vsel %vm478, 0, %v2300
        %v2421 = vsel %vm478, 0, %v2307
        %v2422 = vsel %vm478, 0, %v2314
        %v2423 = vsel %vm478, 0, %v2321
        %v2424 = vsel %vm478, 0, %v2328
        %v2425 = vsel %vm478, 0, %v2335
        %v2426 = vsel %vm478, 0, %v2342
        %v2427 = vsel %vm478, 0, %v2349
        %v2428 = vsel %vm478, 0, %v2356
        %v2429 = vsel %vm478, 0, %v2363
        %v2430 = vsel %vm478, 0, %v2370
        %v2431 = vsel %vm478, 0, %v2377
        %v2432 = vsel %vm478, 0, %v2384
        %v2433 = vsel %vm478, %v2276, 0
        %v2434 = vsel %vm478, %v2283, 0
        %v2435 = vsel %vm478, %v2290, 0
        %v2436 = vsel %vm478, %v2297, 0
        %v2437 = vsel %vm478, %v2304, 0
        %v2438 = vsel %vm478, %v2311, 0
        %v2439 = vsel %vm478, %v2318, 0
        %v2440 = vsel %vm478, %v2325, 0
        %v2441 = vsel %vm478, %v2332, 0
        %v2442 = vsel %vm478, %v2339, 0
        %v2443 = vsel %vm478, %v2346, 0
        %v2444 = vsel %vm478, %v2353, 0
        %v2445 = vsel %vm478, %v2360, 0
        %v2446 = vsel %vm478, %v2367, 0
        %v2447 = vsel %vm478, %v2374, 0
        %v2448 = vsel %vm478, %v2381, 0
        %v2450 = vshrl.u32 %v2417, 16
        %v2452 = vshll.u32 %v2417, 16
        %v2454 = vrot.slane %v2452, 1
        %v2455 = vor.u32 %v2450, %v2454
        %v2457 = vshll.u32 %v2433, 16
        %v2459 = vrot.slane %v2457, 1
        %v2460 = vsel %vm513, %v2455, %v2459
        %v2462 = vshrl.u32 %v2418, 16
        %v2464 = vshll.u32 %v2418, 16
        %v2466 = vrot.slane %v2464, 1
        %v2467 = vor.u32 %v2462, %v2466
        %v2469 = vshll.u32 %v2434, 16
        %v2471 = vrot.slane %v2469, 1
        %v2472 = vsel %vm513, %v2467, %v2471
        %v2474 = vshrl.u32 %v2419, 16
        %v2476 = vshll.u32 %v2419, 16
        %v2478 = vrot.slane %v2476, 1
        %v2479 = vor.u32 %v2474, %v2478
        %v2481 = vshll.u32 %v2435, 16
        %v2483 = vrot.slane %v2481, 1
        %v2484 = vsel %vm513, %v2479, %v2483
        %v2486 = vshrl.u32 %v2420, 16
        %v2488 = vshll.u32 %v2420, 16
        %v2490 = vrot.slane %v2488, 1
        %v2491 = vor.u32 %v2486, %v2490
        %v2493 = vshll.u32 %v2436, 16
        %v2495 = vrot.slane %v2493, 1
        %v2496 = vsel %vm513, %v2491, %v2495
        %v2498 = vshrl.u32 %v2421, 16
        %v2500 = vshll.u32 %v2421, 16
        %v2502 = vrot.slane %v2500, 1
        %v2503 = vor.u32 %v2498, %v2502
        %v2505 = vshll.u32 %v2437, 16
        %v2507 = vrot.slane %v2505, 1
        %v2508 = vsel %vm513, %v2503, %v2507
        %v2510 = vshrl.u32 %v2422, 16
        %v2512 = vshll.u32 %v2422, 16
        %v2514 = vrot.slane %v2512, 1
        %v2515 = vor.u32 %v2510, %v2514
        %v2517 = vshll.u32 %v2438, 16
        %v2519 = vrot.slane %v2517, 1
        %v2520 = vsel %vm513, %v2515, %v2519
        %v2522 = vshrl.u32 %v2423, 16
        %v2524 = vshll.u32 %v2423, 16
        %v2526 = vrot.slane %v2524, 1
        %v2527 = vor.u32 %v2522, %v2526
        %v2529 = vshll.u32 %v2439, 16
        %v2531 = vrot.slane %v2529, 1
        %v2532 = vsel %vm513, %v2527, %v2531
        %v2534 = vshrl.u32 %v2424, 16
        %v2536 = vshll.u32 %v2424, 16
        %v2538 = vrot.slane %v2536, 1
        %v2539 = vor.u32 %v2534, %v2538
        %v2541 = vshll.u32 %v2440, 16
        %v2543 = vrot.slane %v2541, 1
        %v2544 = vsel %vm513, %v2539, %v2543
        %v2546 = vshrl.u32 %v2425, 16
        %v2548 = vshll.u32 %v2425, 16
        %v2550 = vrot.slane %v2548, 1
        %v2551 = vor.u32 %v2546, %v2550
        %v2553 = vshll.u32 %v2441, 16
        %v2555 = vrot.slane %v2553, 1
        %v2556 = vsel %vm513, %v2551, %v2555
        %v2558 = vshrl.u32 %v2426, 16
        %v2560 = vshll.u32 %v2426, 16
        %v2562 = vrot.slane %v2560, 1
        %v2563 = vor.u32 %v2558, %v2562
        %v2565 = vshll.u32 %v2442, 16
        %v2567 = vrot.slane %v2565, 1
        %v2568 = vsel %vm513, %v2563, %v2567
        %v2570 = vshrl.u32 %v2427, 16
        %v2572 = vshll.u32 %v2427, 16
        %v2574 = vrot.slane %v2572, 1
        %v2575 = vor.u32 %v2570, %v2574
        %v2577 = vshll.u32 %v2443, 16
        %v2579 = vrot.slane %v2577, 1
        %v2580 = vsel %vm513, %v2575, %v2579
        %v2582 = vshrl.u32 %v2428, 16
        %v2584 = vshll.u32 %v2428, 16
        %v2586 = vrot.slane %v2584, 1
        %v2587 = vor.u32 %v2582, %v2586
        %v2589 = vshll.u32 %v2444, 16
        %v2591 = vrot.slane %v2589, 1
        %v2592 = vsel %vm513, %v2587, %v2591
        %v2594 = vshrl.u32 %v2429, 16
        %v2596 = vshll.u32 %v2429, 16
        %v2598 = vrot.slane %v2596, 1
        %v2599 = vor.u32 %v2594, %v2598
        %v2601 = vshll.u32 %v2445, 16
        %v2603 = vrot.slane %v2601, 1
        %v2604 = vsel %vm513, %v2599, %v2603
        %v2606 = vshrl.u32 %v2430, 16
        %v2608 = vshll.u32 %v2430, 16
        %v2610 = vrot.slane %v2608, 1
        %v2611 = vor.u32 %v2606, %v2610
        %v2613 = vshll.u32 %v2446, 16
        %v2615 = vrot.slane %v2613, 1
        %v2616 = vsel %vm513, %v2611, %v2615
        %v2618 = vshrl.u32 %v2431, 16
        %v2620 = vshll.u32 %v2431, 16
        %v2622 = vrot.slane %v2620, 1
        %v2623 = vor.u32 %v2618, %v2622
        %v2625 = vshll.u32 %v2447, 16
        %v2627 = vrot.slane %v2625, 1
        %v2628 = vsel %vm513, %v2623, %v2627
        %v2674 = vrot.slane %v2417, 1
        %v2675 = vrot.slane %v2433, 1
        %v2676 = vsel %vm754, %v2674, %v2675
        %v2677 = vrot.slane %v2418, 1
        %v2678 = vrot.slane %v2434, 1
        %v2679 = vsel %vm754, %v2677, %v2678
        %v2680 = vrot.slane %v2419, 1
        %v2681 = vrot.slane %v2435, 1
        %v2682 = vsel %vm754, %v2680, %v2681
        %v2683 = vrot.slane %v2420, 1
        %v2684 = vrot.slane %v2436, 1
        %v2685 = vsel %vm754, %v2683, %v2684
        %v2686 = vrot.slane %v2421, 1
        %v2687 = vrot.slane %v2437, 1
        %v2688 = vsel %vm754, %v2686, %v2687
        %v2689 = vrot.slane %v2422, 1
        %v2690 = vrot.slane %v2438, 1
        %v2691 = vsel %vm754, %v2689, %v2690
        %v2692 = vrot.slane %v2423, 1
        %v2693 = vrot.slane %v2439, 1
        %v2694 = vsel %vm754, %v2692, %v2693
        %v2695 = vrot.slane %v2424, 1
        %v2696 = vrot.slane %v2440, 1
        %v2697 = vsel %vm754, %v2695, %v2696
        %v2698 = vrot.slane %v2425, 1
        %v2699 = vrot.slane %v2441, 1
        %v2700 = vsel %vm754, %v2698, %v2699
        %v2701 = vrot.slane %v2426, 1
        %v2702 = vrot.slane %v2442, 1
        %v2703 = vsel %vm754, %v2701, %v2702
        %v2704 = vrot.slane %v2427, 1
        %v2705 = vrot.slane %v2443, 1
        %v2706 = vsel %vm754, %v2704, %v2705
        %v2707 = vrot.slane %v2428, 1
        %v2708 = vrot.slane %v2444, 1
        %v2709 = vsel %vm754, %v2707, %v2708
        %v2710 = vrot.slane %v2429, 1
        %v2711 = vrot.slane %v2445, 1
        %v2712 = vsel %vm754, %v2710, %v2711
        %v2713 = vrot.slane %v2430, 1
        %v2714 = vrot.slane %v2446, 1
        %v2715 = vsel %vm754, %v2713, %v2714
        %v2716 = vrot.slane %v2431, 1
        %v2717 = vrot.slane %v2447, 1
        %v2718 = vsel %vm754, %v2716, %v2717
        %v2735 = vshrl.u32 %v2432, 16
        %v2737 = vshll.u32 %v2432, 16
        %v2739 = vrot.slane %v2737, 1
        %v2740 = vor.u32 %v2735, %v2739
        %v2742 = vshll.u32 %v2448, 16
        %v2744 = vrot.slane %v2742, 1
        %v2745 = vsel %vm513, %v2740, %v2744
        %v2749 = vrot.slane %v2432, 1
        %v2750 = vrot.slane %v2448, 1
        %v2751 = vsel %vm754, %v2749, %v2750
        %v2753 = vld [vmem:[#allocation7] sm:$0xf]
        %v2754 = vld [vmem:[#allocation7 + $0x4] sm:$0xf]
        %v2755 = vld [vmem:[#allocation7 + $0x8] sm:$0xf]
        %v2756 = vld [vmem:[#allocation7 + $0xc] sm:$0xf]
        %v2757 = vld [vmem:[#allocation7 + $0x10] sm:$0xf]
        %v2758 = vld [vmem:[#allocation7 + $0x14] sm:$0xf]
        %v2759 = vld [vmem:[#allocation7 + $0x18] sm:$0xf]
        %v2760 = vld [vmem:[#allocation7 + $0x1c] sm:$0xf]
        %v2761 = vld [vmem:[#allocation7 + $0x20] sm:$0xf]
        %v2762 = vld [vmem:[#allocation7 + $0x24] sm:$0xf]
        %v2763 = vld [vmem:[#allocation7 + $0x28] sm:$0xf]
        %v2764 = vld [vmem:[#allocation7 + $0x2c] sm:$0xf]
        %v2765 = vld [vmem:[#allocation7 + $0x30] sm:$0xf]
        %v2766 = vld [vmem:[#allocation7 + $0x34] sm:$0xf]
        %v2767 = vld [vmem:[#allocation7 + $0x38] sm:$0xf]
        %v2768 = vld [vmem:[#allocation7 + $0x3c] sm:$0xf]
        %v2769 = vld [vmem:[#allocation7 + $0x40] sm:$0xf]
        %v2770 = vld [vmem:[#allocation7 + $0x44] sm:$0xf]
        %v2771 = vld [vmem:[#allocation7 + $0x48] sm:$0xf]
        %v2772 = vld [vmem:[#allocation7 + $0x4c] sm:$0xf]
        %v2773 = vld [vmem:[#allocation7 + $0x50] sm:$0xf]
        %v2774 = vld [vmem:[#allocation7 + $0x54] sm:$0xf]
        %v2775 = vld [vmem:[#allocation7 + $0x58] sm:$0xf]
        %v2776 = vld [vmem:[#allocation7 + $0x5c] sm:$0xf]
        %v2777 = vld [vmem:[#allocation7 + $0x60] sm:$0xf]
        %v2778 = vld [vmem:[#allocation7 + $0x64] sm:$0xf]
        %v2779 = vld [vmem:[#allocation7 + $0x68] sm:$0xf]
        %v2780 = vld [vmem:[#allocation7 + $0x6c] sm:$0xf]
        %v2781 = vld [vmem:[#allocation7 + $0x70] sm:$0xf]
        %v2782 = vld [vmem:[#allocation7 + $0x74] sm:$0xf]
        %v2783 = vld [vmem:[#allocation7 + $0x78] sm:$0xf]
        %v2784 = vld [vmem:[#allocation7 + $0x7c] sm:$0xf]
        %v2785 = vld [vmem:[#allocation7 + $0x80] sm:$0xf]
        %v2786 = vld [vmem:[#allocation7 + $0x84] sm:$0xf]
        %v2787 = vld [vmem:[#allocation7 + $0x88] sm:$0xf]
        %v2788 = vld [vmem:[#allocation7 + $0x8c] sm:$0xf]
        %v2789 = vld [vmem:[#allocation7 + $0x90] sm:$0xf]
        %v2790 = vld [vmem:[#allocation7 + $0x94] sm:$0xf]
        %v2791 = vld [vmem:[#allocation7 + $0x98] sm:$0xf]
        %v2792 = vld [vmem:[#allocation7 + $0x9c] sm:$0xf]
        %v2793 = vld [vmem:[#allocation7 + $0xa0] sm:$0xf]
        %v2794 = vld [vmem:[#allocation7 + $0xa4] sm:$0xf]
        %v2795 = vld [vmem:[#allocation7 + $0xa8] sm:$0xf]
        %v2796 = vld [vmem:[#allocation7 + $0xac] sm:$0xf]
        %v2797 = vld [vmem:[#allocation7 + $0xb0] sm:$0xf]
        %v2798 = vld [vmem:[#allocation7 + $0xb4] sm:$0xf]
        %v2799 = vld [vmem:[#allocation7 + $0xb8] sm:$0xf]
        %v2800 = vld [vmem:[#allocation7 + $0xbc] sm:$0xf]
        %v2801 = vld [vmem:[#allocation7 + $0xc0] sm:$0xf]
        %v2802 = vld [vmem:[#allocation7 + $0xc4] sm:$0xf]
        %v2803 = vld [vmem:[#allocation7 + $0xc8] sm:$0xf]
        %v2804 = vld [vmem:[#allocation7 + $0xcc] sm:$0xf]
        %v2805 = vld [vmem:[#allocation7 + $0xd0] sm:$0xf]
        %v2806 = vld [vmem:[#allocation7 + $0xd4] sm:$0xf]
        %v2807 = vld [vmem:[#allocation7 + $0xd8] sm:$0xf]
        %v2808 = vld [vmem:[#allocation7 + $0xdc] sm:$0xf]
        %v2809 = vld [vmem:[#allocation7 + $0xe0] sm:$0xf]
        %v2810 = vld [vmem:[#allocation7 + $0xe4] sm:$0xf]
        %v2811 = vld [vmem:[#allocation7 + $0xe8] sm:$0xf]
        %v2812 = vld [vmem:[#allocation7 + $0xec] sm:$0xf]
        %v2813 = vld [vmem:[#allocation7 + $0xf0] sm:$0xf]
        %v2814 = vld [vmem:[#allocation7 + $0xf4] sm:$0xf]
        %v2815 = vld [vmem:[#allocation7 + $0xf8] sm:$0xf]
        %v2816 = vld [vmem:[#allocation7 + $0xfc] sm:$0xf]
        %v2817 = vld [vmem:[#allocation7 + $0x100] sm:$0xf]
        %v2818 = vld [vmem:[#allocation7 + $0x104] sm:$0xf]
        %v2819 = vld [vmem:[#allocation7 + $0x108] sm:$0xf]
        %v2820 = vld [vmem:[#allocation7 + $0x10c] sm:$0xf]
        %v2821 = vld [vmem:[#allocation7 + $0x110] sm:$0xf]
        %v2822 = vld [vmem:[#allocation7 + $0x114] sm:$0xf]
        %v2823 = vld [vmem:[#allocation7 + $0x118] sm:$0xf]
        %v2824 = vld [vmem:[#allocation7 + $0x11c] sm:$0xf]
        %v2825 = vld [vmem:[#allocation7 + $0x120] sm:$0xf]
        %v2826 = vld [vmem:[#allocation7 + $0x124] sm:$0xf]
        %v2827 = vld [vmem:[#allocation7 + $0x128] sm:$0xf]
        %v2828 = vld [vmem:[#allocation7 + $0x12c] sm:$0xf]
        %v2829 = vld [vmem:[#allocation7 + $0x130] sm:$0xf]
        %v2830 = vld [vmem:[#allocation7 + $0x134] sm:$0xf]
        %v2831 = vld [vmem:[#allocation7 + $0x138] sm:$0xf]
        %v2832 = vld [vmem:[#allocation7 + $0x13c] sm:$0xf]
        %v2833 = vld [vmem:[#allocation7 + $0x140] sm:$0xf]
        %v2834 = vld [vmem:[#allocation7 + $0x144] sm:$0xf]
        %v2835 = vld [vmem:[#allocation7 + $0x148] sm:$0xf]
        %v2836 = vld [vmem:[#allocation7 + $0x14c] sm:$0xf]
        %v2837 = vld [vmem:[#allocation7 + $0x150] sm:$0xf]
        %v2838 = vld [vmem:[#allocation7 + $0x154] sm:$0xf]
        %v2839 = vld [vmem:[#allocation7 + $0x158] sm:$0xf]
        %v2840 = vld [vmem:[#allocation7 + $0x15c] sm:$0xf]
        %v2841 = vld [vmem:[#allocation7 + $0x160] sm:$0xf]
        %v2842 = vld [vmem:[#allocation7 + $0x164] sm:$0xf]
        %v2843 = vld [vmem:[#allocation7 + $0x168] sm:$0xf]
        %v2844 = vld [vmem:[#allocation7 + $0x16c] sm:$0xf]
        %v2845 = vld [vmem:[#allocation7 + $0x170] sm:$0xf]
        %v2846 = vld [vmem:[#allocation7 + $0x174] sm:$0xf]
        %v2847 = vld [vmem:[#allocation7 + $0x178] sm:$0xf]
        %v2848 = vld [vmem:[#allocation7 + $0x17c] sm:$0xf]
        %v2849 = vld [vmem:[#allocation7 + $0x180] sm:$0xf]
        %v2850 = vld [vmem:[#allocation7 + $0x184] sm:$0xf]
        %v2851 = vld [vmem:[#allocation7 + $0x188] sm:$0xf]
        %v2852 = vld [vmem:[#allocation7 + $0x18c] sm:$0xf]
        %v2853 = vld [vmem:[#allocation7 + $0x190] sm:$0xf]
        %v2854 = vld [vmem:[#allocation7 + $0x194] sm:$0xf]
        %v2855 = vld [vmem:[#allocation7 + $0x198] sm:$0xf]
        %v2856 = vld [vmem:[#allocation7 + $0x19c] sm:$0xf]
        %v2857 = vld [vmem:[#allocation7 + $0x1a0] sm:$0xf]
        %v2858 = vld [vmem:[#allocation7 + $0x1a4] sm:$0xf]
        %v2859 = vld [vmem:[#allocation7 + $0x1a8] sm:$0xf]
        %v2860 = vld [vmem:[#allocation7 + $0x1ac] sm:$0xf]
        %v2861 = vld [vmem:[#allocation7 + $0x1b0] sm:$0xf]
        %v2862 = vld [vmem:[#allocation7 + $0x1b4] sm:$0xf]
        %v2863 = vld [vmem:[#allocation7 + $0x1b8] sm:$0xf]
        %v2864 = vld [vmem:[#allocation7 + $0x1bc] sm:$0xf]
        %v2865 = vld [vmem:[#allocation7 + $0x1c0] sm:$0xf]
        %v2866 = vld [vmem:[#allocation7 + $0x1c4] sm:$0xf]
        %v2867 = vld [vmem:[#allocation7 + $0x1c8] sm:$0xf]
        %v2868 = vld [vmem:[#allocation7 + $0x1cc] sm:$0xf]
        %v2869 = vld [vmem:[#allocation7 + $0x1d0] sm:$0xf]
        %v2870 = vld [vmem:[#allocation7 + $0x1d4] sm:$0xf]
        %v2871 = vld [vmem:[#allocation7 + $0x1d8] sm:$0xf]
        %v2872 = vld [vmem:[#allocation7 + $0x1dc] sm:$0xf]
        %v2873 = vld [vmem:[#allocation7 + $0x1e0] sm:$0xf]
        %v2874 = vld [vmem:[#allocation7 + $0x1e4] sm:$0xf]
        %v2875 = vld [vmem:[#allocation7 + $0x1e8] sm:$0xf]
        %v2876 = vld [vmem:[#allocation7 + $0x1ec] sm:$0xf]
        %v2877 = vld [vmem:[#allocation7 + $0x1f0] sm:$0xf]
        %v2878 = vld [vmem:[#allocation7 + $0x1f4] sm:$0xf]
        %v2879 = vld [vmem:[#allocation7 + $0x1f8] sm:$0xf]
        %v2880 = vld [vmem:[#allocation7 + $0x1fc] sm:$0xf]
        %v2881 = vld [vmem:[#allocation7 + $0x200] sm:$0xf]
        %v2882 = vld [vmem:[#allocation7 + $0x204] sm:$0xf]
        %v2883 = vld [vmem:[#allocation7 + $0x208] sm:$0xf]
        %v2884 = vld [vmem:[#allocation7 + $0x20c] sm:$0xf]
        %v2885 = vld [vmem:[#allocation7 + $0x210] sm:$0xf]
        %v2886 = vld [vmem:[#allocation7 + $0x214] sm:$0xf]
        %v2887 = vld [vmem:[#allocation7 + $0x218] sm:$0xf]
        %v2888 = vld [vmem:[#allocation7 + $0x21c] sm:$0xf]
        %v2889 = vld [vmem:[#allocation7 + $0x220] sm:$0xf]
        %v2890 = vld [vmem:[#allocation7 + $0x224] sm:$0xf]
        %v2891 = vld [vmem:[#allocation7 + $0x228] sm:$0xf]
        %v2892 = vld [vmem:[#allocation7 + $0x22c] sm:$0xf]
        %v2893 = vld [vmem:[#allocation7 + $0x230] sm:$0xf]
        %v2894 = vld [vmem:[#allocation7 + $0x234] sm:$0xf]
        %v2895 = vld [vmem:[#allocation7 + $0x238] sm:$0xf]
        %v2896 = vld [vmem:[#allocation7 + $0x23c] sm:$0xf]
        %v2898 = vlaneseq
        %v2899 = vshrl.u32 %v2898, 7
        %v2900 = vsub.s32 0, %v2899
        %v2901 = vrot.slane %v306, %v2900
        %v3047 = vunpack.c.l.b16 %v2753
        %v3048 = vunpack.c.l.b16 %v2754
        %v3049 = vunpack.c.l.b16 %v2755
        %v3050 = vunpack.c.l.b16 %v2756
        %v3051 = vunpack.c.l.b16 %v2757
        %v3052 = vunpack.c.l.b16 %v2758
        %v3053 = vunpack.c.l.b16 %v2759
        %v3054 = vunpack.c.l.b16 %v2760
        %v3055 = vunpack.c.l.b16 %v2761
        %v3056 = vunpack.c.l.b16 %v2762
        %v3057 = vunpack.c.l.b16 %v2763
        %v3058 = vunpack.c.l.b16 %v2764
        %v3059 = vunpack.c.l.b16 %v2765
        %v3060 = vunpack.c.l.b16 %v2766
        %v3061 = vunpack.c.l.b16 %v2767
        %v3062 = vunpack.c.l.b16 %v2768
        %v3063 = vunpack.c.l.b16 %v2769
        %v3064 = vunpack.c.l.b16 %v2770
        %v3065 = vunpack.c.l.b16 %v2771
        %v3066 = vunpack.c.l.b16 %v2772
        %v3067 = vunpack.c.l.b16 %v2773
        %v3068 = vunpack.c.l.b16 %v2774
        %v3069 = vunpack.c.l.b16 %v2775
        %v3070 = vunpack.c.l.b16 %v2776
        %v3071 = vunpack.c.l.b16 %v2777
        %v3072 = vunpack.c.l.b16 %v2778
        %v3073 = vunpack.c.l.b16 %v2779
        %v3074 = vunpack.c.l.b16 %v2780
        %v3075 = vunpack.c.l.b16 %v2781
        %v3076 = vunpack.c.l.b16 %v2782
        %v3077 = vunpack.c.l.b16 %v2783
        %v3078 = vunpack.c.l.b16 %v2784
        %v3079 = vunpack.c.l.b16 %v2785
        %v3080 = vunpack.c.l.b16 %v2786
        %v3081 = vunpack.c.l.b16 %v2787
        %v3082 = vunpack.c.l.b16 %v2788
        %v3083 = vunpack.c.l.b16 %v2789
        %v3084 = vunpack.c.l.b16 %v2790
        %v3085 = vunpack.c.l.b16 %v2791
        %v3086 = vunpack.c.l.b16 %v2792
        %v3087 = vunpack.c.l.b16 %v2793
        %v3088 = vunpack.c.l.b16 %v2794
        %v3089 = vunpack.c.l.b16 %v2795
        %v3090 = vunpack.c.l.b16 %v2796
        %v3091 = vunpack.c.l.b16 %v2797
        %v3092 = vunpack.c.l.b16 %v2798
        %v3093 = vunpack.c.l.b16 %v2799
        %v3094 = vunpack.c.l.b16 %v2800
        %v3095 = vunpack.c.l.b16 %v2801
        %v3096 = vunpack.c.l.b16 %v2802
        %v3097 = vunpack.c.l.b16 %v2803
        %v3098 = vunpack.c.l.b16 %v2804
        %v3099 = vunpack.c.l.b16 %v2805
        %v3100 = vunpack.c.l.b16 %v2806
        %v3101 = vunpack.c.l.b16 %v2807
        %v3102 = vunpack.c.l.b16 %v2808
        %v3103 = vunpack.c.l.b16 %v2809
        %v3104 = vunpack.c.l.b16 %v2810
        %v3105 = vunpack.c.l.b16 %v2811
        %v3106 = vunpack.c.l.b16 %v2812
        %v3107 = vunpack.c.l.b16 %v2813
        %v3108 = vunpack.c.l.b16 %v2814
        %v3109 = vunpack.c.l.b16 %v2815
        %v3110 = vunpack.c.l.b16 %v2816
        %v3111 = vunpack.c.l.b16 %v2817
        %v3112 = vunpack.c.l.b16 %v2818
        %v3113 = vunpack.c.l.b16 %v2819
        %v3114 = vunpack.c.l.b16 %v2820
        %v3115 = vunpack.c.l.b16 %v2821
        %v3116 = vunpack.c.l.b16 %v2822
        %v3117 = vunpack.c.l.b16 %v2823
        %v3118 = vunpack.c.l.b16 %v2824
        %v3119 = vunpack.c.l.b16 %v2825
        %v3120 = vunpack.c.l.b16 %v2826
        %v3121 = vunpack.c.l.b16 %v2827
        %v3122 = vunpack.c.l.b16 %v2828
        %v3123 = vunpack.c.l.b16 %v2829
        %v3124 = vunpack.c.l.b16 %v2830
        %v3125 = vunpack.c.l.b16 %v2831
        %v3126 = vunpack.c.l.b16 %v2832
        %v3127 = vunpack.c.l.b16 %v2833
        %v3128 = vunpack.c.l.b16 %v2834
        %v3129 = vunpack.c.l.b16 %v2835
        %v3130 = vunpack.c.l.b16 %v2836
        %v3131 = vunpack.c.l.b16 %v2837
        %v3132 = vunpack.c.l.b16 %v2838
        %v3133 = vunpack.c.l.b16 %v2839
        %v3134 = vunpack.c.l.b16 %v2840
        %v3135 = vunpack.c.l.b16 %v2841
        %v3136 = vunpack.c.l.b16 %v2842
        %v3137 = vunpack.c.l.b16 %v2843
        %v3138 = vunpack.c.l.b16 %v2844
        %v3139 = vunpack.c.l.b16 %v2845
        %v3140 = vunpack.c.l.b16 %v2846
        %v3141 = vunpack.c.l.b16 %v2847
        %v3142 = vunpack.c.l.b16 %v2848
        %v3143 = vunpack.c.l.b16 %v2849
        %v3144 = vunpack.c.l.b16 %v2850
        %v3145 = vunpack.c.l.b16 %v2851
        %v3146 = vunpack.c.l.b16 %v2852
        %v3147 = vunpack.c.l.b16 %v2853
        %v3148 = vunpack.c.l.b16 %v2854
        %v3149 = vunpack.c.l.b16 %v2855
        %v3150 = vunpack.c.l.b16 %v2856
        %v3151 = vunpack.c.l.b16 %v2857
        %v3152 = vunpack.c.l.b16 %v2858
        %v3153 = vunpack.c.l.b16 %v2859
        %v3154 = vunpack.c.l.b16 %v2860
        %v3155 = vunpack.c.l.b16 %v2861
        %v3156 = vunpack.c.l.b16 %v2862
        %v3157 = vunpack.c.l.b16 %v2863
        %v3158 = vunpack.c.l.b16 %v2864
        %v3159 = vunpack.c.l.b16 %v2865
        %v3160 = vunpack.c.l.b16 %v2866
        %v3161 = vunpack.c.l.b16 %v2867
        %v3162 = vunpack.c.l.b16 %v2868
        %v3163 = vunpack.c.l.b16 %v2869
        %v3164 = vunpack.c.l.b16 %v2870
        %v3165 = vunpack.c.l.b16 %v2871
        %v3166 = vunpack.c.l.b16 %v2872
        %v3167 = vunpack.c.l.b16 %v2873
        %v3168 = vunpack.c.l.b16 %v2874
        %v3169 = vunpack.c.l.b16 %v2875
        %v3170 = vunpack.c.l.b16 %v2876
        %v3171 = vunpack.c.l.b16 %v2877
        %v3172 = vunpack.c.l.b16 %v2878
        %v3173 = vunpack.c.l.b16 %v2879
        %v3174 = vunpack.c.l.b16 %v2880
        %v3175 = vunpack.c.l.b16 %v2881
        %v3176 = vunpack.c.l.b16 %v2882
        %v3177 = vunpack.c.l.b16 %v2883
        %v3178 = vunpack.c.l.b16 %v2884
        %v3179 = vunpack.c.l.b16 %v2885
        %v3180 = vunpack.c.l.b16 %v2886
        %v3181 = vunpack.c.l.b16 %v2887
        %v3182 = vunpack.c.l.b16 %v2888
        %v3183 = vunpack.c.l.b16 %v2889
        %v3184 = vunpack.c.l.b16 %v2890
        %v3185 = vunpack.c.l.b16 %v2891
        %v3186 = vunpack.c.l.b16 %v2892
        %v3187 = vunpack.c.l.b16 %v2893
        %v3188 = vunpack.c.l.b16 %v2894
        %v3189 = vunpack.c.l.b16 %v2895
        %v3190 = vunpack.c.l.b16 %v2896
        %v3191 = vpack.c.b16 %v3048, %v3047
        %v3192 = vpack.c.b16 %v3050, %v3049
        %v3193 = vpack.c.b16 %v3052, %v3051
        %v3194 = vpack.c.b16 %v3054, %v3053
        %v3195 = vpack.c.b16 %v3056, %v3055
        %v3196 = vpack.c.b16 %v3058, %v3057
        %v3197 = vpack.c.b16 %v3060, %v3059
        %v3198 = vpack.c.b16 %v3062, %v3061
        %v3199 = vpack.c.b16 %v3064, %v3063
        %v3200 = vpack.c.b16 %v3066, %v3065
        %v3201 = vpack.c.b16 %v3068, %v3067
        %v3202 = vpack.c.b16 %v3070, %v3069
        %v3203 = vpack.c.b16 %v3072, %v3071
        %v3204 = vpack.c.b16 %v3074, %v3073
        %v3205 = vpack.c.b16 %v3076, %v3075
        %v3206 = vpack.c.b16 %v3078, %v3077
        %v3207 = vpack.c.b16 %v3080, %v3079
        %v3208 = vpack.c.b16 %v3082, %v3081
        %v3209 = vpack.c.b16 %v3084, %v3083
        %v3210 = vpack.c.b16 %v3086, %v3085
        %v3211 = vpack.c.b16 %v3088, %v3087
        %v3212 = vpack.c.b16 %v3090, %v3089
        %v3213 = vpack.c.b16 %v3092, %v3091
        %v3214 = vpack.c.b16 %v3094, %v3093
        %v3215 = vpack.c.b16 %v3096, %v3095
        %v3216 = vpack.c.b16 %v3098, %v3097
        %v3217 = vpack.c.b16 %v3100, %v3099
        %v3218 = vpack.c.b16 %v3102, %v3101
        %v3219 = vpack.c.b16 %v3104, %v3103
        %v3220 = vpack.c.b16 %v3106, %v3105
        %v3221 = vpack.c.b16 %v3108, %v3107
        %v3222 = vpack.c.b16 %v3110, %v3109
        %v3223 = vpack.c.b16 %v3112, %v3111
        %v3224 = vpack.c.b16 %v3114, %v3113
        %v3225 = vpack.c.b16 %v3116, %v3115
        %v3226 = vpack.c.b16 %v3118, %v3117
        %v3227 = vpack.c.b16 %v3120, %v3119
        %v3228 = vpack.c.b16 %v3122, %v3121
        %v3229 = vpack.c.b16 %v3124, %v3123
        %v3230 = vpack.c.b16 %v3126, %v3125
        %v3231 = vpack.c.b16 %v3128, %v3127
        %v3232 = vpack.c.b16 %v3130, %v3129
        %v3233 = vpack.c.b16 %v3132, %v3131
        %v3234 = vpack.c.b16 %v3134, %v3133
        %v3235 = vpack.c.b16 %v3136, %v3135
        %v3236 = vpack.c.b16 %v3138, %v3137
        %v3237 = vpack.c.b16 %v3140, %v3139
        %v3238 = vpack.c.b16 %v3142, %v3141
        %v3239 = vpack.c.b16 %v3144, %v3143
        %v3240 = vpack.c.b16 %v3146, %v3145
        %v3241 = vpack.c.b16 %v3148, %v3147
        %v3242 = vpack.c.b16 %v3150, %v3149
        %v3243 = vpack.c.b16 %v3152, %v3151
        %v3244 = vpack.c.b16 %v3154, %v3153
        %v3245 = vpack.c.b16 %v3156, %v3155
        %v3246 = vpack.c.b16 %v3158, %v3157
        %v3247 = vpack.c.b16 %v3160, %v3159
        %v3248 = vpack.c.b16 %v3162, %v3161
        %v3249 = vpack.c.b16 %v3164, %v3163
        %v3250 = vpack.c.b16 %v3166, %v3165
        %v3251 = vpack.c.b16 %v3168, %v3167
        %v3252 = vpack.c.b16 %v3170, %v3169
        %v3253 = vpack.c.b16 %v3172, %v3171
        %v3254 = vpack.c.b16 %v3174, %v3173
        %v3255 = vpack.c.b16 %v3176, %v3175
        %v3256 = vpack.c.b16 %v3178, %v3177
        %v3257 = vpack.c.b16 %v3180, %v3179
        %v3258 = vpack.c.b16 %v3182, %v3181
        %v3259 = vpack.c.b16 %v3184, %v3183
        %v3260 = vpack.c.b16 %v3186, %v3185
        %v3261 = vpack.c.b16 %v3188, %v3187
        %v3262 = vpack.c.b16 %v3190, %v3189
        %3335 = vmatprep.subr.bf16.mxu0 0
        %3336 = vmatpush1.bf16.msra.mxu0 %v3191
        %3337 = vmatprep.subr.bf16.mxu0 0
        %3338 = vmatpush1.bf16.msra.mxu0 %v3192
        %3339 = vmatprep.subr.bf16.mxu0 0
        %3340 = vmatpush1.bf16.msra.mxu0 %v3193
        %3341 = vmatprep.subr.bf16.mxu0 0
        %3342 = vmatpush1.bf16.msra.mxu0 %v3194
        %3343 = vmatprep.subr.bf16.mxu0 0
        %3344 = vmatpush1.bf16.msra.mxu0 %v3195
        %3345 = vmatprep.subr.bf16.mxu0 0
        %3346 = vmatpush1.bf16.msra.mxu0 %v3196
        %3347 = vmatprep.subr.bf16.mxu0 0
        %3348 = vmatpush1.bf16.msra.mxu0 %v3197
        %3349 = vmatprep.subr.bf16.mxu0 0
        %3350 = vmatpush1.bf16.msra.mxu0 %v3198
        %3351 = vmatprep.subr.bf16.mxu0 0
        %3352 = vmatpush1.bf16.msra.mxu0 %v3199
        %3353 = vmatprep.subr.bf16.mxu0 0
        %3354 = vmatpush1.bf16.msra.mxu0 %v3200
        %3355 = vmatprep.subr.bf16.mxu0 0
        %3356 = vmatpush1.bf16.msra.mxu0 %v3201
        %3357 = vmatprep.subr.bf16.mxu0 0
        %3358 = vmatpush1.bf16.msra.mxu0 %v3202
        %3359 = vmatprep.subr.bf16.mxu0 0
        %3360 = vmatpush1.bf16.msra.mxu0 %v3203
        %3361 = vmatprep.subr.bf16.mxu0 0
        %3362 = vmatpush1.bf16.msra.mxu0 %v3204
        %3363 = vmatprep.subr.bf16.mxu0 0
        %3364 = vmatpush1.bf16.msra.mxu0 %v3205
        %3365 = vmatprep.subr.bf16.mxu0 0
        %3366 = vmatpush1.bf16.msra.mxu0 %v3206
        %3367 = vmatprep.mubr.bf16.mxu0 %v525
        %3368 = vmatmul.mubr.bf16.gmra.mrb[0].mxu0 %v479
        %v3369 = vpop.f32.mrb[0].mxu0
        %v3370 = vadd.f32 %v2901, %v3369
        %v3371 = vpop.f32.mrb[0].mxu0
        %v3372 = vpop.f32.mrb[0].mxu0
        %v3373 = vadd.f32 %v2901, %v3372
        %v3374 = vpop.f32.mrb[0].mxu0
        %3375 = vmatprep.mubr.bf16.mxu0 %v2460
        %3376 = vmatmul.mubr.bf16.gmra.mrb[0].mxu0 %v2417
        %v3377 = vpop.f32.mrb[0].mxu0
        %v3378 = vadd.f32 %v2901, %v3377
        %v3379 = vpop.f32.mrb[0].mxu0
        %v3380 = vpop.f32.mrb[0].mxu0
        %v3381 = vadd.f32 %v2901, %v3380
        %v3382 = vpop.f32.mrb[0].mxu0
        %3383 = vmatprep.mubr.bf16.mxu0 %v2472
        %3384 = vmatmul.mubr.bf16.gmra.mrb[0].mxu0 %v2418
        %v3385 = vpop.f32.mrb[0].mxu0
        %v3386 = vadd.f32 %v2901, %v3385
        %v3387 = vpop.f32.mrb[0].mxu0
        %v3388 = vpop.f32.mrb[0].mxu0
        %v3389 = vadd.f32 %v2901, %v3388
        %v3390 = vpop.f32.mrb[0].mxu0
        %3391 = vmatprep.mubr.bf16.mxu0 %v2484
        %3392 = vmatmul.mubr.bf16.gmra.mrb[0].mxu0 %v2419
        %v3393 = vpop.f32.mrb[0].mxu0
        %v3394 = vadd.f32 %v2901, %v3393
        %v3395 = vpop.f32.mrb[0].mxu0
        %v3396 = vpop.f32.mrb[0].mxu0
        %v3397 = vadd.f32 %v2901, %v3396
        %v3398 = vpop.f32.mrb[0].mxu0
        %3399 = vmatprep.mubr.bf16.mxu0 %v2496
        %3400 = vmatmul.mubr.bf16.gmra.mrb[0].mxu0 %v2420
        %v3401 = vpop.f32.mrb[0].mxu0
        %v3402 = vadd.f32 %v2901, %v3401
        %v3403 = vpop.f32.mrb[0].mxu0
        %v3404 = vpop.f32.mrb[0].mxu0
        %v3405 = vadd.f32 %v2901, %v3404
        %v3406 = vpop.f32.mrb[0].mxu0
        %3407 = vmatprep.mubr.bf16.mxu0 %v2508
        %3408 = vmatmul.mubr.bf16.gmra.mrb[0].mxu0 %v2421
        %v3409 = vpop.f32.mrb[0].mxu0
        %v3410 = vadd.f32 %v2901, %v3409
        %v3411 = vpop.f32.mrb[0].mxu0
        %v3412 = vpop.f32.mrb[0].mxu0
        %v3413 = vadd.f32 %v2901, %v3412
        %v3414 = vpop.f32.mrb[0].mxu0
        %3415 = vmatprep.mubr.bf16.mxu0 %v2520
        %3416 = vmatmul.mubr.bf16.gmra.mrb[0].mxu0 %v2422
        %v3417 = vpop.f32.mrb[0].mxu0
        %v3418 = vadd.f32 %v2901, %v3417
        %v3419 = vpop.f32.mrb[0].mxu0
        %v3420 = vpop.f32.mrb[0].mxu0
        %v3421 = vadd.f32 %v2901, %v3420
        %v3422 = vpop.f32.mrb[0].mxu0
        %3423 = vmatprep.mubr.bf16.mxu0 %v2532
        %3424 = vmatmul.mubr.bf16.gmra.mrb[0].mxu0 %v2423
        %v3425 = vpop.f32.mrb[0].mxu0
        %v3426 = vadd.f32 %v2901, %v3425
        %v3427 = vpop.f32.mrb[0].mxu0
        %v3428 = vpop.f32.mrb[0].mxu0
        %v3429 = vadd.f32 %v2901, %v3428
        %v3430 = vpop.f32.mrb[0].mxu0
        %3431 = vmatprep.mubr.bf16.mxu0 %v2544
        %3432 = vmatmul.mubr.bf16.gmra.mrb[0].mxu0 %v2424
        %v3433 = vpop.f32.mrb[0].mxu0
        %v3434 = vadd.f32 %v2901, %v3433
        %v3435 = vpop.f32.mrb[0].mxu0
        %v3436 = vpop.f32.mrb[0].mxu0
        %v3437 = vadd.f32 %v2901, %v3436
        %v3438 = vpop.f32.mrb[0].mxu0
        %3439 = vmatprep.mubr.bf16.mxu0 %v2556
        %3440 = vmatmul.mubr.bf16.gmra.mrb[0].mxu0 %v2425
        %v3441 = vpop.f32.mrb[0].mxu0
        %v3442 = vadd.f32 %v2901, %v3441
        %v3443 = vpop.f32.mrb[0].mxu0
        %v3444 = vpop.f32.mrb[0].mxu0
        %v3445 = vadd.f32 %v2901, %v3444
        %v3446 = vpop.f32.mrb[0].mxu0
        %3447 = vmatprep.mubr.bf16.mxu0 %v2568
        %3448 = vmatmul.mubr.bf16.gmra.mrb[0].mxu0 %v2426
        %v3449 = vpop.f32.mrb[0].mxu0
        %v3450 = vadd.f32 %v2901, %v3449
        %v3451 = vpop.f32.mrb[0].mxu0
        %v3452 = vpop.f32.mrb[0].mxu0
        %v3453 = vadd.f32 %v2901, %v3452
        %v3454 = vpop.f32.mrb[0].mxu0
        %3455 = vmatprep.mubr.bf16.mxu0 %v2580
        %3456 = vmatmul.mubr.bf16.gmra.mrb[0].mxu0 %v2427
        %v3457 = vpop.f32.mrb[0].mxu0
        %v3458 = vadd.f32 %v2901, %v3457
        %v3459 = vpop.f32.mrb[0].mxu0
        %v3460 = vpop.f32.mrb[0].mxu0
        %v3461 = vadd.f32 %v2901, %v3460
        %v3462 = vpop.f32.mrb[0].mxu0
        %3463 = vmatprep.mubr.bf16.mxu0 %v2592
        %3464 = vmatmul.mubr.bf16.gmra.mrb[0].mxu0 %v2428
        %v3465 = vpop.f32.mrb[0].mxu0
        %v3466 = vadd.f32 %v2901, %v3465
        %v3467 = vpop.f32.mrb[0].mxu0
        %v3468 = vpop.f32.mrb[0].mxu0
        %v3469 = vadd.f32 %v2901, %v3468
        %v3470 = vpop.f32.mrb[0].mxu0
        %3471 = vmatprep.mubr.bf16.mxu0 %v2604
        %3472 = vmatmul.mubr.bf16.gmra.mrb[0].mxu0 %v2429
        %v3473 = vpop.f32.mrb[0].mxu0
        %v3474 = vadd.f32 %v2901, %v3473
        %v3475 = vpop.f32.mrb[0].mxu0
        %v3476 = vpop.f32.mrb[0].mxu0
        %v3477 = vadd.f32 %v2901, %v3476
        %v3478 = vpop.f32.mrb[0].mxu0
        %3479 = vmatprep.mubr.bf16.mxu0 %v2616
        %3480 = vmatmul.mubr.bf16.gmra.mrb[0].mxu0 %v2430
        %v3481 = vpop.f32.mrb[0].mxu0
        %v3482 = vadd.f32 %v2901, %v3481
        %v3483 = vpop.f32.mrb[0].mxu0
        %v3484 = vpop.f32.mrb[0].mxu0
        %v3485 = vadd.f32 %v2901, %v3484
        %v3486 = vpop.f32.mrb[0].mxu0
        %3487 = vmatprep.mubr.bf16.mxu0 %v2628
        %3488 = vmatmul.mubr.bf16.gmra.mrb[0].mxu0 %v2431
        %v3489 = vpop.f32.mrb[0].mxu0
        %v3490 = vadd.f32 %v2901, %v3489
        %v3491 = vpop.f32.mrb[0].mxu0
        %v3492 = vpop.f32.mrb[0].mxu0
        %v3493 = vadd.f32 %v2901, %v3492
        %v3494 = vpop.f32.mrb[0].mxu0
        %3495 = vdwg.mxu0
        %3496 = vmatprep.subr.bf16.mxu0 0
        %3497 = vmatpush1.bf16.msra.mxu0 %v3207
        %3498 = vmatprep.subr.bf16.mxu0 0
        %3499 = vmatpush1.bf16.msra.mxu0 %v3208
        %3500 = vmatprep.subr.bf16.mxu0 0
        %3501 = vmatpush1.bf16.msra.mxu0 %v3209
        %3502 = vmatprep.subr.bf16.mxu0 0
        %3503 = vmatpush1.bf16.msra.mxu0 %v3210
        %3504 = vmatprep.subr.bf16.mxu0 0
        %3505 = vmatpush1.bf16.msra.mxu0 %v3211
        %3506 = vmatprep.subr.bf16.mxu0 0
        %3507 = vmatpush1.bf16.msra.mxu0 %v3212
        %3508 = vmatprep.subr.bf16.mxu0 0
        %3509 = vmatpush1.bf16.msra.mxu0 %v3213
        %3510 = vmatprep.subr.bf16.mxu0 0
        %3511 = vmatpush1.bf16.msra.mxu0 %v3214
        %3512 = vmatprep.subr.bf16.mxu0 0
        %3513 = vmatpush1.bf16.msra.mxu0 %v3215
        %3514 = vmatprep.subr.bf16.mxu0 0
        %3515 = vmatpush1.bf16.msra.mxu0 %v3216
        %3516 = vmatprep.subr.bf16.mxu0 0
        %3517 = vmatpush1.bf16.msra.mxu0 %v3217
        %3518 = vmatprep.subr.bf16.mxu0 0
        %3519 = vmatpush1.bf16.msra.mxu0 %v3218
        %3520 = vmatprep.subr.bf16.mxu0 0
        %3521 = vmatpush1.bf16.msra.mxu0 %v3219
        %3522 = vmatprep.subr.bf16.mxu0 0
        %3523 = vmatpush1.bf16.msra.mxu0 %v3220
        %3524 = vmatprep.subr.bf16.mxu0 0
        %3525 = vmatpush1.bf16.msra.mxu0 %v3221
        %3526 = vmatprep.subr.bf16.mxu0 0
        %3527 = vmatpush1.bf16.msra.mxu0 %v3222
        %3528 = vmatprep.mubr.bf16.mxu0 %v2417
        %3529 = vmatmul.mubr.bf16.gmra.mrb[0].mxu0 %v757
        %v3530 = vpop.f32.mrb[0].mxu0
        %v3531 = vadd.f32 %v3370, %v3530
        %v3532 = vpop.f32.mrb[0].mxu0
        %v3533 = vpop.f32.mrb[0].mxu0
        %v3534 = vadd.f32 %v3373, %v3533
        %v3535 = vpop.f32.mrb[0].mxu0
        %3536 = vmatprep.mubr.bf16.mxu0 %v2418
        %3537 = vmatmul.mubr.bf16.gmra.mrb[0].mxu0 %v2676
        %v3538 = vpop.f32.mrb[0].mxu0
        %v3539 = vadd.f32 %v3378, %v3538
        %v3540 = vpop.f32.mrb[0].mxu0
        %v3541 = vpop.f32.mrb[0].mxu0
        %v3542 = vadd.f32 %v3381, %v3541
        %v3543 = vpop.f32.mrb[0].mxu0
        %3544 = vmatprep.mubr.bf16.mxu0 %v2419
        %3545 = vmatmul.mubr.bf16.gmra.mrb[0].mxu0 %v2679
        %v3546 = vpop.f32.mrb[0].mxu0
        %v3547 = vadd.f32 %v3386, %v3546
        %v3548 = vpop.f32.mrb[0].mxu0
        %v3549 = vpop.f32.mrb[0].mxu0
        %v3550 = vadd.f32 %v3389, %v3549
        %v3551 = vpop.f32.mrb[0].mxu0
        %3552 = vmatprep.mubr.bf16.mxu0 %v2420
        %3553 = vmatmul.mubr.bf16.gmra.mrb[0].mxu0 %v2682
        %v3554 = vpop.f32.mrb[0].mxu0
        %v3555 = vadd.f32 %v3394, %v3554
        %v3556 = vpop.f32.mrb[0].mxu0
        %v3557 = vpop.f32.mrb[0].mxu0
        %v3558 = vadd.f32 %v3397, %v3557
        %v3559 = vpop.f32.mrb[0].mxu0
        %3560 = vmatprep.mubr.bf16.mxu0 %v2421
        %3561 = vmatmul.mubr.bf16.gmra.mrb[0].mxu0 %v2685
        %v3562 = vpop.f32.mrb[0].mxu0
        %v3563 = vadd.f32 %v3402, %v3562
        %v3564 = vpop.f32.mrb[0].mxu0
        %v3565 = vpop.f32.mrb[0].mxu0
        %v3566 = vadd.f32 %v3405, %v3565
        %v3567 = vpop.f32.mrb[0].mxu0
        %3568 = vmatprep.mubr.bf16.mxu0 %v2422
        %3569 = vmatmul.mubr.bf16.gmra.mrb[0].mxu0 %v2688
        %v3570 = vpop.f32.mrb[0].mxu0
        %v3571 = vadd.f32 %v3410, %v3570
        %v3572 = vpop.f32.mrb[0].mxu0
        %v3573 = vpop.f32.mrb[0].mxu0
        %v3574 = vadd.f32 %v3413, %v3573
        %v3575 = vpop.f32.mrb[0].mxu0
        %3576 = vmatprep.mubr.bf16.mxu0 %v2423
        %3577 = vmatmul.mubr.bf16.gmra.mrb[0].mxu0 %v2691
        %v3578 = vpop.f32.mrb[0].mxu0
        %v3579 = vadd.f32 %v3418, %v3578
        %v3580 = vpop.f32.mrb[0].mxu0
        %v3581 = vpop.f32.mrb[0].mxu0
        %v3582 = vadd.f32 %v3421, %v3581
        %v3583 = vpop.f32.mrb[0].mxu0
        %3584 = vmatprep.mubr.bf16.mxu0 %v2424
        %3585 = vmatmul.mubr.bf16.gmra.mrb[0].mxu0 %v2694
        %v3586 = vpop.f32.mrb[0].mxu0
        %v3587 = vadd.f32 %v3426, %v3586
        %v3588 = vpop.f32.mrb[0].mxu0
        %v3589 = vpop.f32.mrb[0].mxu0
        %v3590 = vadd.f32 %v3429, %v3589
        %v3591 = vpop.f32.mrb[0].mxu0
        %3592 = vmatprep.mubr.bf16.mxu0 %v2425
        %3593 = vmatmul.mubr.bf16.gmra.mrb[0].mxu0 %v2697
        %v3594 = vpop.f32.mrb[0].mxu0
        %v3595 = vadd.f32 %v3434, %v3594
        %v3596 = vpop.f32.mrb[0].mxu0
        %v3597 = vpop.f32.mrb[0].mxu0
        %v3598 = vadd.f32 %v3437, %v3597
        %v3599 = vpop.f32.mrb[0].mxu0
        %3600 = vmatprep.mubr.bf16.mxu0 %v2426
        %3601 = vmatmul.mubr.bf16.gmra.mrb[0].mxu0 %v2700
        %v3602 = vpop.f32.mrb[0].mxu0
        %v3603 = vadd.f32 %v3442, %v3602
        %v3604 = vpop.f32.mrb[0].mxu0
        %v3605 = vpop.f32.mrb[0].mxu0
        %v3606 = vadd.f32 %v3445, %v3605
        %v3607 = vpop.f32.mrb[0].mxu0
        %3608 = vmatprep.mubr.bf16.mxu0 %v2427
        %3609 = vmatmul.mubr.bf16.gmra.mrb[0].mxu0 %v2703
        %v3610 = vpop.f32.mrb[0].mxu0
        %v3611 = vadd.f32 %v3450, %v3610
        %v3612 = vpop.f32.mrb[0].mxu0
        %v3613 = vpop.f32.mrb[0].mxu0
        %v3614 = vadd.f32 %v3453, %v3613
        %v3615 = vpop.f32.mrb[0].mxu0
        %3616 = vmatprep.mubr.bf16.mxu0 %v2428
        %3617 = vmatmul.mubr.bf16.gmra.mrb[0].mxu0 %v2706
        %v3618 = vpop.f32.mrb[0].mxu0
        %v3619 = vadd.f32 %v3458, %v3618
        %v3620 = vpop.f32.mrb[0].mxu0
        %v3621 = vpop.f32.mrb[0].mxu0
        %v3622 = vadd.f32 %v3461, %v3621
        %v3623 = vpop.f32.mrb[0].mxu0
        %3624 = vmatprep.mubr.bf16.mxu0 %v2429
        %3625 = vmatmul.mubr.bf16.gmra.mrb[0].mxu0 %v2709
        %v3626 = vpop.f32.mrb[0].mxu0
        %v3627 = vadd.f32 %v3466, %v3626
        %v3628 = vpop.f32.mrb[0].mxu0
        %v3629 = vpop.f32.mrb[0].mxu0
        %v3630 = vadd.f32 %v3469, %v3629
        %v3631 = vpop.f32.mrb[0].mxu0
        %3632 = vmatprep.mubr.bf16.mxu0 %v2430
        %3633 = vmatmul.mubr.bf16.gmra.mrb[0].mxu0 %v2712
        %v3634 = vpop.f32.mrb[0].mxu0
        %v3635 = vadd.f32 %v3474, %v3634
        %v3636 = vpop.f32.mrb[0].mxu0
        %v3637 = vpop.f32.mrb[0].mxu0
        %v3638 = vadd.f32 %v3477, %v3637
        %v3639 = vpop.f32.mrb[0].mxu0
        %3640 = vmatprep.mubr.bf16.mxu0 %v2431
        %3641 = vmatmul.mubr.bf16.gmra.mrb[0].mxu0 %v2715
        %v3642 = vpop.f32.mrb[0].mxu0
        %v3643 = vadd.f32 %v3482, %v3642
        %v3644 = vpop.f32.mrb[0].mxu0
        %v3645 = vpop.f32.mrb[0].mxu0
        %v3646 = vadd.f32 %v3485, %v3645
        %v3647 = vpop.f32.mrb[0].mxu0
        %3648 = vmatprep.mubr.bf16.mxu0 %v2432
        %3649 = vmatmul.mubr.bf16.gmra.mrb[0].mxu0 %v2718
        %v3650 = vpop.f32.mrb[0].mxu0
        %v3651 = vadd.f32 %v3490, %v3650
        %v3652 = vpop.f32.mrb[0].mxu0
        %v3653 = vpop.f32.mrb[0].mxu0
        %v3654 = vadd.f32 %v3493, %v3653
        %v3655 = vpop.f32.mrb[0].mxu0
        %3656 = vdwg.mxu0
        %3657 = vmatprep.subr.bf16.mxu0 0
        %3658 = vmatpush1.bf16.msra.mxu0 %v3223
        %3659 = vmatprep.subr.bf16.mxu0 0
        %3660 = vmatpush1.bf16.msra.mxu0 %v3224
        %3661 = vmatprep.subr.bf16.mxu0 0
        %3662 = vmatpush1.bf16.msra.mxu0 %v3225
        %3663 = vmatprep.subr.bf16.mxu0 0
        %3664 = vmatpush1.bf16.msra.mxu0 %v3226
        %3665 = vmatprep.subr.bf16.mxu0 0
        %3666 = vmatpush1.bf16.msra.mxu0 %v3227
        %3667 = vmatprep.subr.bf16.mxu0 0
        %3668 = vmatpush1.bf16.msra.mxu0 %v3228
        %3669 = vmatprep.subr.bf16.mxu0 0
        %3670 = vmatpush1.bf16.msra.mxu0 %v3229
        %3671 = vmatprep.subr.bf16.mxu0 0
        %3672 = vmatpush1.bf16.msra.mxu0 %v3230
        %3673 = vmatprep.subr.bf16.mxu0 0
        %3674 = vmatpush1.bf16.msra.mxu0 %v3231
        %3675 = vmatprep.subr.bf16.mxu0 0
        %3676 = vmatpush1.bf16.msra.mxu0 %v3232
        %3677 = vmatprep.subr.bf16.mxu0 0
        %3678 = vmatpush1.bf16.msra.mxu0 %v3233
        %3679 = vmatprep.subr.bf16.mxu0 0
        %3680 = vmatpush1.bf16.msra.mxu0 %v3234
        %3681 = vmatprep.subr.bf16.mxu0 0
        %3682 = vmatpush1.bf16.msra.mxu0 %v3235
        %3683 = vmatprep.subr.bf16.mxu0 0
        %3684 = vmatpush1.bf16.msra.mxu0 %v3236
        %3685 = vmatprep.subr.bf16.mxu0 0
        %3686 = vmatpush1.bf16.msra.mxu0 %v3237
        %3687 = vmatprep.subr.bf16.mxu0 0
        %3688 = vmatpush1.bf16.msra.mxu0 %v3238
        %3689 = vmatprep.mubr.bf16.mxu0 %v2676
        %3690 = vmatmul.mubr.bf16.gmra.mrb[0].mxu0 %v2460
        %v3691 = vpop.f32.mrb[0].mxu0
        %v3692 = vadd.f32 %v3531, %v3691
        %v3693 = vpop.f32.mrb[0].mxu0
        %v3694 = vpop.f32.mrb[0].mxu0
        %v3695 = vadd.f32 %v3534, %v3694
        %v3696 = vpop.f32.mrb[0].mxu0
        %3697 = vmatprep.mubr.bf16.mxu0 %v2679
        %3698 = vmatmul.mubr.bf16.gmra.mrb[0].mxu0 %v2472
        %v3699 = vpop.f32.mrb[0].mxu0
        %v3700 = vadd.f32 %v3539, %v3699
        %v3701 = vpop.f32.mrb[0].mxu0
        %v3702 = vpop.f32.mrb[0].mxu0
        %v3703 = vadd.f32 %v3542, %v3702
        %v3704 = vpop.f32.mrb[0].mxu0
        %3705 = vmatprep.mubr.bf16.mxu0 %v2682
        %3706 = vmatmul.mubr.bf16.gmra.mrb[0].mxu0 %v2484
        %v3707 = vpop.f32.mrb[0].mxu0
        %v3708 = vadd.f32 %v3547, %v3707
        %v3709 = vpop.f32.mrb[0].mxu0
        %v3710 = vpop.f32.mrb[0].mxu0
        %v3711 = vadd.f32 %v3550, %v3710
        %v3712 = vpop.f32.mrb[0].mxu0
        %3713 = vmatprep.mubr.bf16.mxu0 %v2685
        %3714 = vmatmul.mubr.bf16.gmra.mrb[0].mxu0 %v2496
        %v3715 = vpop.f32.mrb[0].mxu0
        %v3716 = vadd.f32 %v3555, %v3715
        %v3717 = vpop.f32.mrb[0].mxu0
        %v3718 = vpop.f32.mrb[0].mxu0
        %v3719 = vadd.f32 %v3558, %v3718
        %v3720 = vpop.f32.mrb[0].mxu0
        %3721 = vmatprep.mubr.bf16.mxu0 %v2688
        %3722 = vmatmul.mubr.bf16.gmra.mrb[0].mxu0 %v2508
        %v3723 = vpop.f32.mrb[0].mxu0
        %v3724 = vadd.f32 %v3563, %v3723
        %v3725 = vpop.f32.mrb[0].mxu0
        %v3726 = vpop.f32.mrb[0].mxu0
        %v3727 = vadd.f32 %v3566, %v3726
        %v3728 = vpop.f32.mrb[0].mxu0
        %3729 = vmatprep.mubr.bf16.mxu0 %v2691
        %3730 = vmatmul.mubr.bf16.gmra.mrb[0].mxu0 %v2520
        %v3731 = vpop.f32.mrb[0].mxu0
        %v3732 = vadd.f32 %v3571, %v3731
        %v3733 = vpop.f32.mrb[0].mxu0
        %v3734 = vpop.f32.mrb[0].mxu0
        %v3735 = vadd.f32 %v3574, %v3734
        %v3736 = vpop.f32.mrb[0].mxu0
        %3737 = vmatprep.mubr.bf16.mxu0 %v2694
        %3738 = vmatmul.mubr.bf16.gmra.mrb[0].mxu0 %v2532
        %v3739 = vpop.f32.mrb[0].mxu0
        %v3740 = vadd.f32 %v3579, %v3739
        %v3741 = vpop.f32.mrb[0].mxu0
        %v3742 = vpop.f32.mrb[0].mxu0
        %v3743 = vadd.f32 %v3582, %v3742
        %v3744 = vpop.f32.mrb[0].mxu0
        %3745 = vmatprep.mubr.bf16.mxu0 %v2697
        %3746 = vmatmul.mubr.bf16.gmra.mrb[0].mxu0 %v2544
        %v3747 = vpop.f32.mrb[0].mxu0
        %v3748 = vadd.f32 %v3587, %v3747
        %v3749 = vpop.f32.mrb[0].mxu0
        %v3750 = vpop.f32.mrb[0].mxu0
        %v3751 = vadd.f32 %v3590, %v3750
        %v3752 = vpop.f32.mrb[0].mxu0
        %3753 = vmatprep.mubr.bf16.mxu0 %v2700
        %3754 = vmatmul.mubr.bf16.gmra.mrb[0].mxu0 %v2556
        %v3755 = vpop.f32.mrb[0].mxu0
        %v3756 = vadd.f32 %v3595, %v3755
        %v3757 = vpop.f32.mrb[0].mxu0
        %v3758 = vpop.f32.mrb[0].mxu0
        %v3759 = vadd.f32 %v3598, %v3758
        %v3760 = vpop.f32.mrb[0].mxu0
        %3761 = vmatprep.mubr.bf16.mxu0 %v2703
        %3762 = vmatmul.mubr.bf16.gmra.mrb[0].mxu0 %v2568
        %v3763 = vpop.f32.mrb[0].mxu0
        %v3764 = vadd.f32 %v3603, %v3763
        %v3765 = vpop.f32.mrb[0].mxu0
        %v3766 = vpop.f32.mrb[0].mxu0
        %v3767 = vadd.f32 %v3606, %v3766
        %v3768 = vpop.f32.mrb[0].mxu0
        %3769 = vmatprep.mubr.bf16.mxu0 %v2706
        %3770 = vmatmul.mubr.bf16.gmra.mrb[0].mxu0 %v2580
        %v3771 = vpop.f32.mrb[0].mxu0
        %v3772 = vadd.f32 %v3611, %v3771
        %v3773 = vpop.f32.mrb[0].mxu0
        %v3774 = vpop.f32.mrb[0].mxu0
        %v3775 = vadd.f32 %v3614, %v3774
        %v3776 = vpop.f32.mrb[0].mxu0
        %3777 = vmatprep.mubr.bf16.mxu0 %v2709
        %3778 = vmatmul.mubr.bf16.gmra.mrb[0].mxu0 %v2592
        %v3779 = vpop.f32.mrb[0].mxu0
        %v3780 = vadd.f32 %v3619, %v3779
        %v3781 = vpop.f32.mrb[0].mxu0
        %v3782 = vpop.f32.mrb[0].mxu0
        %v3783 = vadd.f32 %v3622, %v3782
        %v3784 = vpop.f32.mrb[0].mxu0
        %3785 = vmatprep.mubr.bf16.mxu0 %v2712
        %3786 = vmatmul.mubr.bf16.gmra.mrb[0].mxu0 %v2604
        %v3787 = vpop.f32.mrb[0].mxu0
        %v3788 = vadd.f32 %v3627, %v3787
        %v3789 = vpop.f32.mrb[0].mxu0
        %v3790 = vpop.f32.mrb[0].mxu0
        %v3791 = vadd.f32 %v3630, %v3790
        %v3792 = vpop.f32.mrb[0].mxu0
        %3793 = vmatprep.mubr.bf16.mxu0 %v2715
        %3794 = vmatmul.mubr.bf16.gmra.mrb[0].mxu0 %v2616
        %v3795 = vpop.f32.mrb[0].mxu0
        %v3796 = vadd.f32 %v3635, %v3795
        %v3797 = vpop.f32.mrb[0].mxu0
        %v3798 = vpop.f32.mrb[0].mxu0
        %v3799 = vadd.f32 %v3638, %v3798
        %v3800 = vpop.f32.mrb[0].mxu0
        %3801 = vmatprep.mubr.bf16.mxu0 %v2718
        %3802 = vmatmul.mubr.bf16.gmra.mrb[0].mxu0 %v2628
        %v3803 = vpop.f32.mrb[0].mxu0
        %v3804 = vadd.f32 %v3643, %v3803
        %v3805 = vpop.f32.mrb[0].mxu0
        %v3806 = vpop.f32.mrb[0].mxu0
        %v3807 = vadd.f32 %v3646, %v3806
        %v3808 = vpop.f32.mrb[0].mxu0
        %3809 = vmatprep.mubr.bf16.mxu0 %v2751
        %3810 = vmatmul.mubr.bf16.gmra.mrb[0].mxu0 %v2745
        %v3811 = vpop.f32.mrb[0].mxu0
        %v3812 = vadd.f32 %v3651, %v3811
        %v3813 = vpop.f32.mrb[0].mxu0
        %v3814 = vpop.f32.mrb[0].mxu0
        %v3815 = vadd.f32 %v3654, %v3814
        %v3816 = vpop.f32.mrb[0].mxu0
        %3817 = vdwg.mxu0
        %3818 = vmatprep.subr.bf16.mxu0 0
        %3819 = vmatpush1.bf16.msra.mxu0 %v3239
        %3820 = vmatprep.subr.bf16.mxu0 0
        %3821 = vmatpush1.bf16.msra.mxu0 %v3240
        %3822 = vmatprep.subr.bf16.mxu0 0
        %3823 = vmatpush1.bf16.msra.mxu0 %v3241
        %3824 = vmatprep.subr.bf16.mxu0 0
        %3825 = vmatpush1.bf16.msra.mxu0 %v3242
        %3826 = vmatprep.subr.bf16.mxu0 0
        %3827 = vmatpush1.bf16.msra.mxu0 %v3243
        %3828 = vmatprep.subr.bf16.mxu0 0
        %3829 = vmatpush1.bf16.msra.mxu0 %v3244
        %3830 = vmatprep.subr.bf16.mxu0 0
        %3831 = vmatpush1.bf16.msra.mxu0 %v3245
        %3832 = vmatprep.subr.bf16.mxu0 0
        %3833 = vmatpush1.bf16.msra.mxu0 %v3246
        %3834 = vmatprep.subr.bf16.mxu0 0
        %3835 = vmatpush1.bf16.msra.mxu0 %v3247
        %3836 = vmatprep.subr.bf16.mxu0 0
        %3837 = vmatpush1.bf16.msra.mxu0 %v3248
        %3838 = vmatprep.subr.bf16.mxu0 0
        %3839 = vmatpush1.bf16.msra.mxu0 %v3249
        %3840 = vmatprep.subr.bf16.mxu0 0
        %3841 = vmatpush1.bf16.msra.mxu0 %v3250
        %3842 = vmatprep.subr.bf16.mxu0 0
        %3843 = vmatpush1.bf16.msra.mxu0 %v3251
        %3844 = vmatprep.subr.bf16.mxu0 0
        %3845 = vmatpush1.bf16.msra.mxu0 %v3252
        %3846 = vmatprep.subr.bf16.mxu0 0
        %3847 = vmatpush1.bf16.msra.mxu0 %v3253
        %3848 = vmatprep.subr.bf16.mxu0 0
        %3849 = vmatpush1.bf16.msra.mxu0 %v3254
        %3850 = vmatprep.mubr.bf16.mxu0 %v2472
        %3851 = vmatmul.mubr.bf16.gmra.mrb[0].mxu0 %v2418
        %v3852 = vpop.f32.mrb[0].mxu0
        %v3853 = vadd.f32 %v3692, %v3852
        %v3854 = vpop.f32.mrb[0].mxu0
        %v3855 = vpop.f32.mrb[0].mxu0
        %v3856 = vadd.f32 %v3695, %v3855
        %v3857 = vpop.f32.mrb[0].mxu0
        %3858 = vmatprep.mubr.bf16.mxu0 %v2484
        %3859 = vmatmul.mubr.bf16.gmra.mrb[0].mxu0 %v2419
        %v3860 = vpop.f32.mrb[0].mxu0
        %v3861 = vadd.f32 %v3700, %v3860
        %v3862 = vpop.f32.mrb[0].mxu0
        %v3863 = vpop.f32.mrb[0].mxu0
        %v3864 = vadd.f32 %v3703, %v3863
        %v3865 = vpop.f32.mrb[0].mxu0
        %3866 = vmatprep.mubr.bf16.mxu0 %v2496
        %3867 = vmatmul.mubr.bf16.gmra.mrb[0].mxu0 %v2420
        %v3868 = vpop.f32.mrb[0].mxu0
        %v3869 = vadd.f32 %v3708, %v3868
        %v3870 = vpop.f32.mrb[0].mxu0
        %v3871 = vpop.f32.mrb[0].mxu0
        %v3872 = vadd.f32 %v3711, %v3871
        %v3873 = vpop.f32.mrb[0].mxu0
        %3874 = vmatprep.mubr.bf16.mxu0 %v2508
        %3875 = vmatmul.mubr.bf16.gmra.mrb[0].mxu0 %v2421
        %v3876 = vpop.f32.mrb[0].mxu0
        %v3877 = vadd.f32 %v3716, %v3876
        %v3878 = vpop.f32.mrb[0].mxu0
        %v3879 = vpop.f32.mrb[0].mxu0
        %v3880 = vadd.f32 %v3719, %v3879
        %v3881 = vpop.f32.mrb[0].mxu0
        %3882 = vmatprep.mubr.bf16.mxu0 %v2520
        %3883 = vmatmul.mubr.bf16.gmra.mrb[0].mxu0 %v2422
        %v3884 = vpop.f32.mrb[0].mxu0
        %v3885 = vadd.f32 %v3724, %v3884
        %v3886 = vpop.f32.mrb[0].mxu0
        %v3887 = vpop.f32.mrb[0].mxu0
        %v3888 = vadd.f32 %v3727, %v3887
        %v3889 = vpop.f32.mrb[0].mxu0
        %3890 = vmatprep.mubr.bf16.mxu0 %v2532
        %3891 = vmatmul.mubr.bf16.gmra.mrb[0].mxu0 %v2423
        %v3892 = vpop.f32.mrb[0].mxu0
        %v3893 = vadd.f32 %v3732, %v3892
        %v3894 = vpop.f32.mrb[0].mxu0
        %v3895 = vpop.f32.mrb[0].mxu0
        %v3896 = vadd.f32 %v3735, %v3895
        %v3897 = vpop.f32.mrb[0].mxu0
        %3898 = vmatprep.mubr.bf16.mxu0 %v2544
        %3899 = vmatmul.mubr.bf16.gmra.mrb[0].mxu0 %v2424
        %v3900 = vpop.f32.mrb[0].mxu0
        %v3901 = vadd.f32 %v3740, %v3900
        %v3902 = vpop.f32.mrb[0].mxu0
        %v3903 = vpop.f32.mrb[0].mxu0
        %v3904 = vadd.f32 %v3743, %v3903
        %v3905 = vpop.f32.mrb[0].mxu0
        %3906 = vmatprep.mubr.bf16.mxu0 %v2556
        %3907 = vmatmul.mubr.bf16.gmra.mrb[0].mxu0 %v2425
        %v3908 = vpop.f32.mrb[0].mxu0
        %v3909 = vadd.f32 %v3748, %v3908
        %v3910 = vpop.f32.mrb[0].mxu0
        %v3911 = vpop.f32.mrb[0].mxu0
        %v3912 = vadd.f32 %v3751, %v3911
        %v3913 = vpop.f32.mrb[0].mxu0
        %3914 = vmatprep.mubr.bf16.mxu0 %v2568
        %3915 = vmatmul.mubr.bf16.gmra.mrb[0].mxu0 %v2426
        %v3916 = vpop.f32.mrb[0].mxu0
        %v3917 = vadd.f32 %v3756, %v3916
        %v3918 = vpop.f32.mrb[0].mxu0
        %v3919 = vpop.f32.mrb[0].mxu0
        %v3920 = vadd.f32 %v3759, %v3919
        %v3921 = vpop.f32.mrb[0].mxu0
        %3922 = vmatprep.mubr.bf16.mxu0 %v2580
        %3923 = vmatmul.mubr.bf16.gmra.mrb[0].mxu0 %v2427
        %v3924 = vpop.f32.mrb[0].mxu0
        %v3925 = vadd.f32 %v3764, %v3924
        %v3926 = vpop.f32.mrb[0].mxu0
        %v3927 = vpop.f32.mrb[0].mxu0
        %v3928 = vadd.f32 %v3767, %v3927
        %v3929 = vpop.f32.mrb[0].mxu0
        %3930 = vmatprep.mubr.bf16.mxu0 %v2592
        %3931 = vmatmul.mubr.bf16.gmra.mrb[0].mxu0 %v2428
        %v3932 = vpop.f32.mrb[0].mxu0
        %v3933 = vadd.f32 %v3772, %v3932
        %v3934 = vpop.f32.mrb[0].mxu0
        %v3935 = vpop.f32.mrb[0].mxu0
        %v3936 = vadd.f32 %v3775, %v3935
        %v3937 = vpop.f32.mrb[0].mxu0
        %3938 = vmatprep.mubr.bf16.mxu0 %v2604
        %3939 = vmatmul.mubr.bf16.gmra.mrb[0].mxu0 %v2429
        %v3940 = vpop.f32.mrb[0].mxu0
        %v3941 = vadd.f32 %v3780, %v3940
        %v3942 = vpop.f32.mrb[0].mxu0
        %v3943 = vpop.f32.mrb[0].mxu0
        %v3944 = vadd.f32 %v3783, %v3943
        %v3945 = vpop.f32.mrb[0].mxu0
        %3946 = vmatprep.mubr.bf16.mxu0 %v2616
        %3947 = vmatmul.mubr.bf16.gmra.mrb[0].mxu0 %v2430
        %v3948 = vpop.f32.mrb[0].mxu0
        %v3949 = vadd.f32 %v3788, %v3948
        %v3950 = vpop.f32.mrb[0].mxu0
        %v3951 = vpop.f32.mrb[0].mxu0
        %v3952 = vadd.f32 %v3791, %v3951
        %v3953 = vpop.f32.mrb[0].mxu0
        %3954 = vmatprep.mubr.bf16.mxu0 %v2628
        %3955 = vmatmul.mubr.bf16.gmra.mrb[0].mxu0 %v2431
        %v3956 = vpop.f32.mrb[0].mxu0
        %v3957 = vadd.f32 %v3796, %v3956
        %v3958 = vpop.f32.mrb[0].mxu0
        %v3959 = vpop.f32.mrb[0].mxu0
        %v3960 = vadd.f32 %v3799, %v3959
        %v3961 = vpop.f32.mrb[0].mxu0
        %3962 = vmatprep.mubr.bf16.mxu0 %v2745
        %3963 = vmatmul.mubr.bf16.gmra.mrb[0].mxu0 %v2432
        %v3964 = vpop.f32.mrb[0].mxu0
        %v3965 = vadd.f32 %v3804, %v3964
        %v3966 = vpop.f32.mrb[0].mxu0
        %v3967 = vpop.f32.mrb[0].mxu0
        %v3968 = vadd.f32 %v3807, %v3967
        %v3969 = vpop.f32.mrb[0].mxu0
        %3970 = vmatprep.mubr.bf16.mxu0 %v525
        %3971 = vmatmul.mubr.bf16.gmra.mrb[0].mxu0 %v479
        %v3972 = vpop.f32.mrb[0].mxu0
        %v3973 = vadd.f32 %v3812, %v3972
        %v3974 = vpop.f32.mrb[0].mxu0
        %v3975 = vpop.f32.mrb[0].mxu0
        %v3976 = vadd.f32 %v3815, %v3975
        %v3977 = vpop.f32.mrb[0].mxu0
        %3978 = vdwg.mxu0
        %3979 = vmatprep.subr.bf16.mxu0 0
        %3980 = vmatpush1.bf16.msra.mxu0 %v3255
        %3981 = vmatprep.subr.bf16.mxu0 0
        %3982 = vmatpush1.bf16.msra.mxu0 %v3256
        %3983 = vmatprep.subr.bf16.mxu0 0
        %3984 = vmatpush1.bf16.msra.mxu0 %v3257
        %3985 = vmatprep.subr.bf16.mxu0 0
        %3986 = vmatpush1.bf16.msra.mxu0 %v3258
        %3987 = vmatprep.subr.bf16.mxu0 0
        %3988 = vmatpush1.bf16.msra.mxu0 %v3259
        %3989 = vmatprep.subr.bf16.mxu0 0
        %3990 = vmatpush1.bf16.msra.mxu0 %v3260
        %3991 = vmatprep.subr.bf16.mxu0 0
        %3992 = vmatpush1.bf16.msra.mxu0 %v3261
        %3993 = vmatprep.subr.bf16.mxu0 0
        %3994 = vmatpush1.bf16.msra.mxu0 %v3262
        %3995 = vmatprep.subr.bf16.mxu0 0
        %3996 = vmatpush1.bf16.msra.mxu0 0
        %3997 = vmatprep.subr.bf16.mxu0 0
        %3998 = vmatpush1.bf16.msra.mxu0 0
        %3999 = vmatprep.subr.bf16.mxu0 0
        %4000 = vmatpush1.bf16.msra.mxu0 0
        %4001 = vmatprep.subr.bf16.mxu0 0
        %4002 = vmatpush1.bf16.msra.mxu0 0
        %4003 = vmatprep.subr.bf16.mxu0 0
        %4004 = vmatpush1.bf16.msra.mxu0 0
        %4005 = vmatprep.subr.bf16.mxu0 0
        %4006 = vmatpush1.bf16.msra.mxu0 0
        %4007 = vmatprep.subr.bf16.mxu0 0
        %4008 = vmatpush1.bf16.msra.mxu0 0
        %4009 = vmatprep.subr.bf16.mxu0 0
        %4010 = vmatpush1.bf16.msra.mxu0 0
        %4011 = vmatprep.mubr.bf16.mxu0 0
        %4012 = vmatmul.mubr.bf16.gmra.mrb[0].mxu0 %v2679
        %v4013 = vpop.f32.mrb[0].mxu0
        %v4014 = vadd.f32 %v3853, %v4013
        %v4015 = vpop.f32.mrb[0].mxu0
        %v4016 = vpop.f32.mrb[0].mxu0
        %v4017 = vadd.f32 %v3856, %v4016
        %v4018 = vpop.f32.mrb[0].mxu0
        %4019 = vmatprep.mubr.bf16.mxu0 0
        %4020 = vmatmul.mubr.bf16.gmra.mrb[0].mxu0 %v2682
        %v4021 = vpop.f32.mrb[0].mxu0
        %v4022 = vadd.f32 %v3861, %v4021
        %v4023 = vpop.f32.mrb[0].mxu0
        %v4024 = vpop.f32.mrb[0].mxu0
        %v4025 = vadd.f32 %v3864, %v4024
        %v4026 = vpop.f32.mrb[0].mxu0
        %4027 = vmatprep.mubr.bf16.mxu0 0
        %4028 = vmatmul.mubr.bf16.gmra.mrb[0].mxu0 %v2685
        %v4029 = vpop.f32.mrb[0].mxu0
        %v4030 = vadd.f32 %v3869, %v4029
        %v4031 = vpop.f32.mrb[0].mxu0
        %v4032 = vpop.f32.mrb[0].mxu0
        %v4033 = vadd.f32 %v3872, %v4032
        %v4034 = vpop.f32.mrb[0].mxu0
        %4035 = vmatprep.mubr.bf16.mxu0 0
        %4036 = vmatmul.mubr.bf16.gmra.mrb[0].mxu0 %v2688
        %v4037 = vpop.f32.mrb[0].mxu0
        %v4038 = vadd.f32 %v3877, %v4037
        %v4039 = vpop.f32.mrb[0].mxu0
        %v4040 = vpop.f32.mrb[0].mxu0
        %v4041 = vadd.f32 %v3880, %v4040
        %v4042 = vpop.f32.mrb[0].mxu0
        %4043 = vmatprep.mubr.bf16.mxu0 0
        %4044 = vmatmul.mubr.bf16.gmra.mrb[0].mxu0 %v2691
        %v4045 = vpop.f32.mrb[0].mxu0
        %v4046 = vadd.f32 %v3885, %v4045
        %v4047 = vpop.f32.mrb[0].mxu0
        %v4048 = vpop.f32.mrb[0].mxu0
        %v4049 = vadd.f32 %v3888, %v4048
        %v4050 = vpop.f32.mrb[0].mxu0
        %4051 = vmatprep.mubr.bf16.mxu0 0
        %4052 = vmatmul.mubr.bf16.gmra.mrb[0].mxu0 %v2694
        %v4053 = vpop.f32.mrb[0].mxu0
        %v4054 = vadd.f32 %v3893, %v4053
        %v4055 = vpop.f32.mrb[0].mxu0
        %v4056 = vpop.f32.mrb[0].mxu0
        %v4057 = vadd.f32 %v3896, %v4056
        %v4058 = vpop.f32.mrb[0].mxu0
        %4059 = vmatprep.mubr.bf16.mxu0 0
        %4060 = vmatmul.mubr.bf16.gmra.mrb[0].mxu0 %v2697
        %v4061 = vpop.f32.mrb[0].mxu0
        %v4062 = vadd.f32 %v3901, %v4061
        %v4063 = vpop.f32.mrb[0].mxu0
        %v4064 = vpop.f32.mrb[0].mxu0
        %v4065 = vadd.f32 %v3904, %v4064
        %v4066 = vpop.f32.mrb[0].mxu0
        %4067 = vmatprep.mubr.bf16.mxu0 0
        %4068 = vmatmul.mubr.bf16.gmra.mrb[0].mxu0 %v2700
        %v4069 = vpop.f32.mrb[0].mxu0
        %v4070 = vadd.f32 %v3909, %v4069
        %v4071 = vpop.f32.mrb[0].mxu0
        %v4072 = vpop.f32.mrb[0].mxu0
        %v4073 = vadd.f32 %v3912, %v4072
        %v4074 = vpop.f32.mrb[0].mxu0
        %4075 = vmatprep.mubr.bf16.mxu0 0
        %4076 = vmatmul.mubr.bf16.gmra.mrb[0].mxu0 %v2703
        %v4077 = vpop.f32.mrb[0].mxu0
        %v4078 = vadd.f32 %v3917, %v4077
        %v4079 = vpop.f32.mrb[0].mxu0
        %v4080 = vpop.f32.mrb[0].mxu0
        %v4081 = vadd.f32 %v3920, %v4080
        %v4082 = vpop.f32.mrb[0].mxu0
        %4083 = vmatprep.mubr.bf16.mxu0 0
        %4084 = vmatmul.mubr.bf16.gmra.mrb[0].mxu0 %v2706
        %v4085 = vpop.f32.mrb[0].mxu0
        %v4086 = vadd.f32 %v3925, %v4085
        %v4087 = vpop.f32.mrb[0].mxu0
        %v4088 = vpop.f32.mrb[0].mxu0
        %v4089 = vadd.f32 %v3928, %v4088
        %v4090 = vpop.f32.mrb[0].mxu0
        %4091 = vmatprep.mubr.bf16.mxu0 0
        %4092 = vmatmul.mubr.bf16.gmra.mrb[0].mxu0 %v2709
        %v4093 = vpop.f32.mrb[0].mxu0
        %v4094 = vadd.f32 %v3933, %v4093
        %v4095 = vpop.f32.mrb[0].mxu0
        %v4096 = vpop.f32.mrb[0].mxu0
        %v4097 = vadd.f32 %v3936, %v4096
        %v4098 = vpop.f32.mrb[0].mxu0
        %4099 = vmatprep.mubr.bf16.mxu0 0
        %4100 = vmatmul.mubr.bf16.gmra.mrb[0].mxu0 %v2712
        %v4101 = vpop.f32.mrb[0].mxu0
        %v4102 = vadd.f32 %v3941, %v4101
        %v4103 = vpop.f32.mrb[0].mxu0
        %v4104 = vpop.f32.mrb[0].mxu0
        %v4105 = vadd.f32 %v3944, %v4104
        %v4106 = vpop.f32.mrb[0].mxu0
        %4107 = vmatprep.mubr.bf16.mxu0 0
        %4108 = vmatmul.mubr.bf16.gmra.mrb[0].mxu0 %v2715
        %v4109 = vpop.f32.mrb[0].mxu0
        %v4110 = vadd.f32 %v3949, %v4109
        %v4111 = vpop.f32.mrb[0].mxu0
        %v4112 = vpop.f32.mrb[0].mxu0
        %v4113 = vadd.f32 %v3952, %v4112
        %v4114 = vpop.f32.mrb[0].mxu0
        %4115 = vmatprep.mubr.bf16.mxu0 0
        %4116 = vmatmul.mubr.bf16.gmra.mrb[0].mxu0 %v2718
        %v4117 = vpop.f32.mrb[0].mxu0
        %v4118 = vadd.f32 %v3957, %v4117
        %v4119 = vpop.f32.mrb[0].mxu0
        %v4120 = vpop.f32.mrb[0].mxu0
        %v4121 = vadd.f32 %v3960, %v4120
        %v4122 = vpop.f32.mrb[0].mxu0
        %4123 = vmatprep.mubr.bf16.mxu0 0
        %4124 = vmatmul.mubr.bf16.gmra.mrb[0].mxu0 %v2751
        %v4125 = vpop.f32.mrb[0].mxu0
        %v4126 = vadd.f32 %v3965, %v4125
        %v4127 = vpop.f32.mrb[0].mxu0
        %v4128 = vpop.f32.mrb[0].mxu0
        %v4129 = vadd.f32 %v3968, %v4128
        %v4130 = vpop.f32.mrb[0].mxu0
        %4131 = vmatprep.mubr.bf16.mxu0 0
        %4132 = vmatmul.mubr.bf16.gmra.mrb[0].mxu0 %v757
        %v4133 = vpop.f32.mrb[0].mxu0
        %v4134 = vadd.f32 %v3973, %v4133
        %v4135 = vpop.f32.mrb[0].mxu0
        %v4136 = vpop.f32.mrb[0].mxu0
        %v4137 = vadd.f32 %v3976, %v4136
        %v4138 = vpop.f32.mrb[0].mxu0
        %4139 = vdwg.mxu0
        %v4140 = vadd.f32 %v4014, %v273
        %v4141 = vadd.f32 %v4017, %v274
        %v4142 = vadd.f32 %v4022, %v275
        %v4143 = vadd.f32 %v4025, %v276
        %v4144 = vadd.f32 %v4030, %v277
        %v4145 = vadd.f32 %v4033, %v278
        %v4146 = vadd.f32 %v4038, %v279
        %v4147 = vadd.f32 %v4041, %v280
        %v4148 = vadd.f32 %v4046, %v281
        %v4149 = vadd.f32 %v4049, %v282
        %v4150 = vadd.f32 %v4054, %v283
        %v4151 = vadd.f32 %v4057, %v284
        %v4152 = vadd.f32 %v4062, %v285
        %v4153 = vadd.f32 %v4065, %v286
        %v4154 = vadd.f32 %v4070, %v287
        %v4155 = vadd.f32 %v4073, %v288
        %v4156 = vadd.f32 %v4078, %v289
        %v4157 = vadd.f32 %v4081, %v290
        %v4158 = vadd.f32 %v4086, %v291
        %v4159 = vadd.f32 %v4089, %v292
        %v4160 = vadd.f32 %v4094, %v293
        %v4161 = vadd.f32 %v4097, %v294
        %v4162 = vadd.f32 %v4102, %v295
        %v4163 = vadd.f32 %v4105, %v296
        %v4164 = vadd.f32 %v4110, %v297
        %v4165 = vadd.f32 %v4113, %v298
        %v4166 = vadd.f32 %v4118, %v299
        %v4167 = vadd.f32 %v4121, %v300
        %v4168 = vadd.f32 %v4126, %v301
        %v4169 = vadd.f32 %v4129, %v302
        %v4170 = vadd.f32 %v4134, %v303
        %v4171 = vadd.f32 %v4137, %v304
        %v4172 = vmax.f32 %v4140, 0.0
        %v4173 = vmax.f32 %v4141, 0.0
        %v4174 = vmax.f32 %v4142, 0.0
        %v4175 = vmax.f32 %v4143, 0.0
        %v4176 = vmax.f32 %v4144, 0.0
        %v4177 = vmax.f32 %v4145, 0.0
        %v4178 = vmax.f32 %v4146, 0.0
        %v4179 = vmax.f32 %v4147, 0.0
        %v4180 = vmax.f32 %v4148, 0.0
        %v4181 = vmax.f32 %v4149, 0.0
        %v4182 = vmax.f32 %v4150, 0.0
        %v4183 = vmax.f32 %v4151, 0.0
        %v4184 = vmax.f32 %v4152, 0.0
        %v4185 = vmax.f32 %v4153, 0.0
        %v4186 = vmax.f32 %v4154, 0.0
        %v4187 = vmax.f32 %v4155, 0.0
        %v4188 = vmax.f32 %v4156, 0.0
        %v4189 = vmax.f32 %v4157, 0.0
        %v4190 = vmax.f32 %v4158, 0.0
        %v4191 = vmax.f32 %v4159, 0.0
        %v4192 = vmax.f32 %v4160, 0.0
        %v4193 = vmax.f32 %v4161, 0.0
        %v4194 = vmax.f32 %v4162, 0.0
        %v4195 = vmax.f32 %v4163, 0.0
        %v4196 = vmax.f32 %v4164, 0.0
        %v4197 = vmax.f32 %v4165, 0.0
        %v4198 = vmax.f32 %v4166, 0.0
        %v4199 = vmax.f32 %v4167, 0.0
        %v4200 = vmax.f32 %v4168, 0.0
        %v4201 = vmax.f32 %v4169, 0.0
        %v4202 = vmax.f32 %v4170, 0.0
        %v4203 = vmax.f32 %v4171, 0.0
        %4204 = vst [vmem:[%s271] sm:$0xff] %v4172
        %4205 = vst [vmem:[%s271 + $0x8] sm:$0xff] %v4173
        %4206 = vst [vmem:[%s271 + $0x10] sm:$0xff] %v4174
        %4207 = vst [vmem:[%s271 + $0x18] sm:$0xff] %v4175
        %4208 = vst [vmem:[%s271 + $0x20] sm:$0xff] %v4176
        %4209 = vst [vmem:[%s271 + $0x28] sm:$0xff] %v4177
        %4210 = vst [vmem:[%s271 + $0x30] sm:$0xff] %v4178
        %4211 = vst [vmem:[%s271 + $0x38] sm:$0xff] %v4179
        %4212 = vst [vmem:[%s271 + $0x40] sm:$0xff] %v4180
        %4213 = vst [vmem:[%s271 + $0x48] sm:$0xff] %v4181
        %4214 = vst [vmem:[%s271 + $0x50] sm:$0xff] %v4182
        %4215 = vst [vmem:[%s271 + $0x58] sm:$0xff] %v4183
        %4216 = vst [vmem:[%s271 + $0x60] sm:$0xff] %v4184
        %4217 = vst [vmem:[%s271 + $0x68] sm:$0xff] %v4185
        %4218 = vst [vmem:[%s271 + $0x70] sm:$0xff] %v4186
        %4219 = vst [vmem:[%s271 + $0x78] sm:$0xff] %v4187
        %4220 = vst [vmem:[%s271 + $0x80] sm:$0xff] %v4188
        %4221 = vst [vmem:[%s271 + $0x88] sm:$0xff] %v4189
        %4222 = vst [vmem:[%s271 + $0x90] sm:$0xff] %v4190
        %4223 = vst [vmem:[%s271 + $0x98] sm:$0xff] %v4191
        %4224 = vst [vmem:[%s271 + $0xa0] sm:$0xff] %v4192
        %4225 = vst [vmem:[%s271 + $0xa8] sm:$0xff] %v4193
        %4226 = vst [vmem:[%s271 + $0xb0] sm:$0xff] %v4194
        %4227 = vst [vmem:[%s271 + $0xb8] sm:$0xff] %v4195
        %4228 = vst [vmem:[%s271 + $0xc0] sm:$0xff] %v4196
        %4229 = vst [vmem:[%s271 + $0xc8] sm:$0xff] %v4197
        %4230 = vst [vmem:[%s271 + $0xd0] sm:$0xff] %v4198
        %4231 = vst [vmem:[%s271 + $0xd8] sm:$0xff] %v4199
        %4232 = vst [vmem:[%s271 + $0xe0] sm:$0xff] %v4200
        %4233 = vst [vmem:[%s271 + $0xe8] sm:$0xff] %v4201
        %4234 = vst [vmem:[%s271 + $0xf0] sm:$0xff] %v4202
        %4235 = vst [vmem:[%s271 + $0xf8] sm:$0xff] %v4203
        %s4236 = sand.u32 %s141, 1
        %s4237 = scalar_lea.sflag [#allocation4], %s4236
        %s4238 = sand.u32 %s141, 1
        %s4239 = smul.addr %s4238, 256
        %s4240 = scalar_lea.vmem [#allocation8], %s4239
        // Predicated region
        $region53: #{tpu_custom_call.1} parent=39 // pred_check
          %p4241 = pneg %p151
        $region54: #{tpu_custom_call.1} parent=39 // pred_check_branch
          %4243 = sbr.rel (%p4241) target = $region56
        $region55: #{tpu_custom_call.1} parent=39 // pred_region
          %s4245 = ssub.s32 4096, 4096
          %4246 = vsyncadd %s4237, %s4245
          %s4247 = smul.addr %s23, 32
          %s4248 = smul.addr %s4247, 128
          %s4249 = scalar_lea.hbm %s5, %s4248
          %s4250 = sshll.u32 %s4240, 4
          %s4251 = int_to_ptr.vmem [resolvable:$true] %s4250
          %4256 = dma.vmem_to_hbm [thread:$0]  %s4251, 4096, %s4249, %s4237, 128, 128, 8
        $region56: #{tpu_custom_call.1} parent=39 // pred_fallthru
          _
      $region40: #{tpu_custom_call.1} parent=5 // pred_fallthru
        _
      %p4257 = scmp.le.s32.totalorder 2, %s18
      // Predicated region
      $region57: #{tpu_custom_call.1} parent=5 // pred_check
        %p4258 = pneg %p4257
      $region58: #{tpu_custom_call.1} parent=5 // pred_check_branch
        %4260 = sbr.rel (%p4258) target = $region60
      $region59: #{tpu_custom_call.1} parent=5 // pred_region
        %s4261 = ssub.s32 %s18, 2
        // Predicated region
        $region61: #{tpu_custom_call.1} parent=59 // pred_check
          %p4262 = pneg %p157
        $region62: #{tpu_custom_call.1} parent=59 // pred_check_branch
          %4264 = sbr.rel (%p4262) target = $region64
        $region63: #{tpu_custom_call.1} parent=59 // pred_region
          %s4265 = sand.u32 %s142, 1
          %s4266 = scalar_lea.sflag [#allocation4], %s4265
          %s4267 = sand.u32 %s142, 1
          %s4268 = smul.addr %s4267, 256
          %s4269 = scalar_lea.vmem [#allocation8], %s4268
          %4270 = dma.done %s4266, 4096
        $region64: #{tpu_custom_call.1} parent=59 // pred_fallthru
          _
      $region60: #{tpu_custom_call.1} parent=5 // pred_fallthru
        _
    $region6: #{tpu_custom_call.1} parent=1 // loop_footer
      %s22 = sadd.s32 1, %s18
    $region7: #{tpu_custom_call.1} parent=1 // loop_footer_branch
      %17 = sbr.rel target = $region3
    $region8: #{tpu_custom_call.1} parent=1 // loop_exit
      _
    %4271 = vsyncpa [#allocation3], 1
    %s4272 = scalar_lea.sflag [#allocation3], 1
    %4273 = vsyncpa %s4272, 1
    %4274 = vsyncpa [#allocation6], 1
    %4275 = vsyncpa [#allocation4], 1
    %s4276 = scalar_lea.sflag [#allocation4], 1
    %4277 = vsyncpa %s4276, 1

</llo_original>
